<compile_context>
chip_gen: v7x
topology: tpu7x:2x2x1
jax: 0.10.0
libtpu: 0.0.40
codegen_flags: <defaults>
</compile_context>

<pallas_src>
import functools

import jax
import jax.numpy as jnp
from jax.experimental import pallas as pl
from jax.experimental.pallas import tpu as pltpu


# ---------------------------------------------------------------------------
# Pallas kernel bodies
# ---------------------------------------------------------------------------
def _mm_bias_kernel(x_ref, w_ref, b_ref, o_ref, *, relu):
    """o = relu?(x @ w + b); MXU operands in the weight dtype, f32 accumulate."""
    acc = jnp.dot(x_ref[...].astype(w_ref.dtype), w_ref[...],
                  preferred_element_type=jnp.float32)
    acc = acc + b_ref[...].astype(jnp.float32)          # (1, N) broadcasts over rows
    if relu:
        acc = jnp.maximum(acc, 0.0)
    o_ref[...] = acc.astype(o_ref.dtype)


def _mlp_head_kernel(h_ref, w0_ref, b0_ref, w1_ref, b1_ref, w2_ref, b2_ref, o_ref):
    """Fused fc0 -> ReLU -> fc1 -> ReLU -> fc2; everything resident in VMEM."""
    cdt = w0_ref.dtype
    h0 = jnp.dot(h_ref[...].astype(cdt), w0_ref[...], preferred_element_type=jnp.float32)
    h0 = jnp.maximum(h0 + b0_ref[...].astype(jnp.float32), 0.0)
    h1 = jnp.dot(h0.astype(cdt), w1_ref[...], preferred_element_type=jnp.float32)
    h1 = jnp.maximum(h1 + b1_ref[...].astype(jnp.float32), 0.0)
    out = jnp.dot(h1.astype(cdt), w2_ref[...], preferred_element_type=jnp.float32)
    o_ref[...] = (out + b2_ref[...].astype(jnp.float32)).astype(o_ref.dtype)


# ---------------------------------------------------------------------------
# pallas_call wrappers
# ---------------------------------------------------------------------------
def matmul_bias_relu(x, w, b, *, relu, row_tiles=1):
    """relu?(x @ w + b).  Optionally split rows across a 'parallel' grid axis."""
    M, K = x.shape
    K2, N = w.shape
    assert K == K2, (K, K2)
    b = b.reshape(1, N)
    kern = functools.partial(_mm_bias_kernel, relu=relu)
    out_shape = jax.ShapeDtypeStruct((M, N), jnp.float32)
    if row_tiles > 1 and M % (row_tiles * 8) == 0:
        tm = M // row_tiles
        return pl.pallas_call(
            kern,
            out_shape=out_shape,
            grid=(row_tiles,),
            in_specs=[pl.BlockSpec((tm, K), lambda i: (i, 0)),
                      pl.BlockSpec((K, N), lambda i: (0, 0)),
                      pl.BlockSpec((1, N), lambda i: (0, 0))],
            out_specs=pl.BlockSpec((tm, N), lambda i: (i, 0)),
            compiler_params=pltpu.CompilerParams(dimension_semantics=("parallel",)),
        )(x, w, b)
    # Small problem: single full-array block, single invocation.
    return pl.pallas_call(kern, out_shape=out_shape)(x, w, b)


def mlp_head(h, w0, b0, w1, b1, w2, b2):
    B = h.shape[0]
    return pl.pallas_call(
        _mlp_head_kernel,
        out_shape=jax.ShapeDtypeStruct((B, w2.shape[1]), jnp.float32),
    )(h, w0, b0.reshape(1, -1), w1, b1.reshape(1, -1), w2, b2.reshape(1, -1))


# ---------------------------------------------------------------------------
# im2col (NHWC, channels minor) — runs inside jit, fused by XLA.
# TODO(synk): im2col could be pulled into the conv kernels via strided in-kernel
# loads; left to XLA since it is not the dominant cost after fusion.
# ---------------------------------------------------------------------------
def _im2col_nhwc(x, kh, kw, stride):
    """x: (B, H, W, C) -> (B*OH*OW, kh*kw*C) with column order (i, j, c)."""
    B, H, W, C = x.shape
    OH = (H - kh) // stride + 1
    OW = (W - kw) // stride + 1
    cols = [x[:, i:i + stride * OH:stride, j:j + stride * OW:stride, :]
            for i in range(kh) for j in range(kw)]
    p = jnp.stack(cols, axis=3)                        # (B, OH, OW, kh*kw, C)
    return p.reshape(B * OH * OW, kh * kw * C), OH, OW


# ---------------------------------------------------------------------------
# Parameters (PyTorch layout) + one-time kernel-friendly re-layout
# ---------------------------------------------------------------------------
def init_params(key):
    def uni(k, shape, fan_in):
        bound = 1.0 / jnp.sqrt(jnp.float32(fan_in))
        return jax.random.uniform(k, shape, jnp.float32, -bound, bound)

    ks = jax.random.split(key, 8)
    return {
        # SmallAtariCNN (bias init 0.1)
        "conv1_w": uni(ks[0], (16, 3, 8, 8), 3 * 8 * 8),
        "conv1_b": jnp.full((16,), 0.1, jnp.float32),
        "conv2_w": uni(ks[1], (32, 16, 4, 4), 16 * 4 * 4),
        "conv2_b": jnp.full((32,), 0.1, jnp.float32),
        "fc0_w": uni(ks[2], (256, 2592), 2592),
        "fc0_b": jnp.full((256,), 0.1, jnp.float32),
        # classifier head
        "fc1_w": uni(ks[3], (128, 256), 256),
        "fc1_b": uni(ks[4], (128,), 256),
        "fc2_w": uni(ks[5], (1, 128), 128),
        "fc2_b": uni(ks[6], (1,), 128),
    }


def prepare_params(params, compute_dtype=jnp.bfloat16):
    """One-time layout transform: pre-transposed (K, N) weights, NHWC column
    ordering, optional bf16 cast for MXU operands.  Biases stay f32."""
    cdt = compute_dtype

    def conv_mat(w):  # (Cout, Cin, kh, kw) -> (kh*kw*Cin, Cout), NHWC patch order
        cout, cin, kh, kw = w.shape
        return w.transpose(2, 3, 1, 0).reshape(kh * kw * cin, cout).astype(cdt)

    # fc0 input columns: PyTorch NCHW flatten (c*81 + oy*9 + ox)  ->
    #                    our NHWC flatten ((oy*9 + ox)*32 + c)
    w0 = params["fc0_w"].reshape(256, 32, 9, 9).transpose(2, 3, 1, 0).reshape(2592, 256)
    return {
        "conv1_w": conv_mat(params["conv1_w"]),
        "conv1_b": params["conv1_b"].astype(jnp.float32),
        "conv2_w": conv_mat(params["conv2_w"]),
        "conv2_b": params["conv2_b"].astype(jnp.float32),
        "fc0_w": w0.astype(cdt),
        "fc0_b": params["fc0_b"].astype(jnp.float32),
        "fc1_w": params["fc1_w"].T.astype(cdt),      # (256, 128)
        "fc1_b": params["fc1_b"].astype(jnp.float32),
        "fc2_w": params["fc2_w"].T.astype(cdt),      # (128, 1)
        "fc2_b": params["fc2_b"].astype(jnp.float32),
    }


# ---------------------------------------------------------------------------
# Forward pass (ImageCNN.forward), jitted
# ---------------------------------------------------------------------------
@jax.jit
def image_cnn_forward(prep, x):
    # TODO(synk): PyTorch's `assert x.max() <= 1.1` is a host-side runtime check;
    # inputs here are constructed in [0, 1] so it is not re-implemented in-kernel.
    x = x.astype(jnp.float32).transpose(0, 2, 3, 1)              # NCHW -> NHWC
    B = x.shape[0]

    # conv1: 8x8 stride 4, 3 -> 16  (84 -> 20)
    p1, oh1, ow1 = _im2col_nhwc(x, 8, 8, 4)                       # (B*400, 192)
    h1 = matmul_bias_relu(p1, prep["conv1_w"], prep["conv1_b"],
                          relu=True, row_tiles=2)                 # (B*400, 16)
    h1 = h1.reshape(B, oh1, ow1, 16)                              # NHWC, no transpose

    # conv2: 4x4 stride 2, 16 -> 32 (20 -> 9)
    p2, oh2, ow2 = _im2col_nhwc(h1, 4, 4, 2)                      # (B*81, 256)
    h2 = matmul_bias_relu(p2, prep["conv2_w"], prep["conv2_b"], relu=True)  # (B*81, 32)
    h2 = h2.reshape(B, oh2 * ow2 * 32)                            # NHWC flatten -> (B, 2592)

    # fc0 + ReLU + fc1 + ReLU + fc2, single fused kernel
    return mlp_head(h2, prep["fc0_w"], prep["fc0_b"],
                    prep["fc1_w"], prep["fc1_b"],
                    prep["fc2_w"], prep["fc2_b"])                 # (B, 1)


# Pure-JAX reference (PyTorch semantics, f32) for correctness sanity checks.
def reference_forward(params, x):
    x = x.astype(jnp.float32)
    dn = ("NCHW", "OIHW", "NCHW")
    h = jax.lax.conv_general_dilated(x, params["conv1_w"], (4, 4), "VALID",
                                     dimension_numbers=dn)
    h = jax.nn.relu(h + params["conv1_b"][None, :, None, None])
    h = jax.lax.conv_general_dilated(h, params["conv2_w"], (2, 2), "VALID",
                                     dimension_numbers=dn)
    h = jax.nn.relu(h + params["conv2_b"][None, :, None, None])
    h = h.reshape(h.shape[0], -1)
    h = jax.nn.relu(h @ params["fc0_w"].T + params["fc0_b"])
    h = jax.nn.relu(h @ params["fc1_w"].T + params["fc1_b"])
    return h @ params["fc2_w"].T + params["fc2_b"]


if __name__ == "__main__":
    key = jax.random.PRNGKey(0)
    k_params, k_x = jax.random.split(key)

    params = init_params(k_params)
    # batch=2, channels=3, spatial=84 (forced by Linear(2592, 256)); values in [0, 1].
    x = jax.random.uniform(k_x, (2, 3, 84, 84), jnp.float32, 0.0, 1.0)

    ref = jax.block_until_ready(reference_forward(params, x))

    # Exact-math (f32) path: matches PyTorch semantics, tight tolerance.
    prep_f32 = prepare_params(params, jnp.float32)
    out_f32 = jax.block_until_ready(image_cnn_forward(prep_f32, x))
    assert out_f32.shape == (2, 1), out_f32.shape
    assert jnp.allclose(out_f32, ref, rtol=1e-4, atol=1e-4), (out_f32, ref)

    # Fast path (v6e/v7x): bf16 MXU operands, f32 accumulation; looser tolerance.
    prep_bf16 = prepare_params(params, jnp.bfloat16)
    out_bf16 = jax.block_until_ready(image_cnn_forward(prep_bf16, x))
    assert out_bf16.shape == (2, 1), out_bf16.shape
    assert jnp.allclose(out_bf16, ref, rtol=5e-2, atol=5e-2), (out_bf16, ref)

    print("KERNEL_OK")
</pallas_src>

<mosaic_0001>
module attributes {stable_mosaic.version = 11 : i64} {
  func.func @_mm_bias_kernel(%arg0: i32, %arg1: memref<400x192xf32, #tpu.memory_space<vmem>>, %arg2: memref<192x16xf32, #tpu.memory_space<vmem>>, %arg3: memref<1x16xf32, #tpu.memory_space<vmem>>, %arg4: memref<400x16xf32, #tpu.memory_space<vmem>>) attributes {dimension_semantics = [#tpu.dimension_semantics<parallel>], iteration_bounds = array<i64: 2>, scalar_prefetch = 0 : i64, scratch_operands = 0 : i64, tpu.core_type = #tpu.core_type<tc>, window_params = [{transform_indices = @transform_0, window_bounds = array<i64: 400, 192>}, {pipeline_mode = #tpu.pipeline_mode<synchronous>, transform_indices = @transform_1, window_bounds = array<i64: 192, 16>}, {pipeline_mode = #tpu.pipeline_mode<synchronous>, transform_indices = @transform_2, window_bounds = array<i64: 1, 16>}, {transform_indices = @transform_3, window_bounds = array<i64: 400, 16>}]} {
    %c0 = arith.constant 0 : index
    %c0_0 = arith.constant 0 : index
    %0 = vector.load %arg1[%c0, %c0_0] : memref<400x192xf32, #tpu.memory_space<vmem>>, vector<400x192xf32>
    %c0_1 = arith.constant 0 : index
    %c0_2 = arith.constant 0 : index
    %1 = vector.load %arg2[%c0_1, %c0_2] : memref<192x16xf32, #tpu.memory_space<vmem>>, vector<192x16xf32>
    %cst = arith.constant dense<0.000000e+00> : vector<400x16xf32>
    %2 = tpu.matmul %0, %1, %cst {dimension_numbers = #tpu.dot_dimension_numbers<[1], [0], [0], [1], [0, 0, 1, 1], [], []>} : vector<400x192xf32>, vector<192x16xf32>, vector<400x16xf32> -> vector<400x16xf32>
    %c0_3 = arith.constant 0 : index
    %c0_4 = arith.constant 0 : index
    %3 = vector.load %arg3[%c0_3, %c0_4] : memref<1x16xf32, #tpu.memory_space<vmem>>, vector<1x16xf32>
    %4 = vector.broadcast %3 : vector<1x16xf32> to vector<400x16xf32>
    %5 = arith.addf %2, %4 : vector<400x16xf32>
    %cst_5 = arith.constant 0.000000e+00 : f32
    %6 = vector.broadcast %cst_5 : f32 to vector<400x16xf32>
    %7 = arith.maximumf %5, %6 : vector<400x16xf32>
    %c0_6 = arith.constant 0 : index
    %c0_7 = arith.constant 0 : index
    %8 = vector.load %arg4[%c0_6, %c0_7] : memref<400x16xf32, #tpu.memory_space<vmem>>, vector<400x16xf32>
    tpu.vector_store %arg4[%c0_6, %c0_7], %7 {strides = array<i32>} : memref<400x16xf32, #tpu.memory_space<vmem>>, vector<400x16xf32>,
    return
  }
  func.func @transform_0(%arg0: i32) -> (i32, i32) {
    %c0_i32 = arith.constant 0 : i32
    %c0_i32_0 = arith.constant 0 : i32
    return %arg0, %c0_i32 : i32, i32
  }
  func.func @transform_1(%arg0: i32) -> (i32, i32) {
    %c0_i32 = arith.constant 0 : i32
    %c0_i32_0 = arith.constant 0 : i32
    %c0_i32_1 = arith.constant 0 : i32
    return %c0_i32, %c0_i32_0 : i32, i32
  }
  func.func @transform_2(%arg0: i32) -> (i32, i32) {
    %c0_i32 = arith.constant 0 : i32
    %c0_i32_0 = arith.constant 0 : i32
    %c0_i32_1 = arith.constant 0 : i32
    return %c0_i32, %c0_i32_0 : i32, i32
  }
  func.func @transform_3(%arg0: i32) -> (i32, i32) {
    %c0_i32 = arith.constant 0 : i32
    %c0_i32_0 = arith.constant 0 : i32
    return %arg0, %c0_i32 : i32, i32
  }
}

module attributes {stable_mosaic.version = 11 : i64} {
  func.func @_mm_bias_kernel(%arg0: memref<162x256xf32, #tpu.memory_space<vmem>>, %arg1: memref<256x32xf32, #tpu.memory_space<vmem>>, %arg2: memref<1x32xf32, #tpu.memory_space<vmem>>, %arg3: memref<162x32xf32, #tpu.memory_space<vmem>>) attributes {dimension_semantics = [], scalar_prefetch = 0 : i64, scratch_operands = 0 : i64, tpu.core_type = #tpu.core_type<tc>} {
    %c0 = arith.constant 0 : index
    %c0_0 = arith.constant 0 : index
    %0 = vector.load %arg0[%c0, %c0_0] : memref<162x256xf32, #tpu.memory_space<vmem>>, vector<162x256xf32>
    %c0_1 = arith.constant 0 : index
    %c0_2 = arith.constant 0 : index
    %1 = vector.load %arg1[%c0_1, %c0_2] : memref<256x32xf32, #tpu.memory_space<vmem>>, vector<256x32xf32>
    %cst = arith.constant dense<0.000000e+00> : vector<162x32xf32>
    %2 = tpu.matmul %0, %1, %cst {dimension_numbers = #tpu.dot_dimension_numbers<[1], [0], [0], [1], [0, 0, 1, 1], [], []>} : vector<162x256xf32>, vector<256x32xf32>, vector<162x32xf32> -> vector<162x32xf32>
    %c0_3 = arith.constant 0 : index
    %c0_4 = arith.constant 0 : index
    %3 = vector.load %arg2[%c0_3, %c0_4] : memref<1x32xf32, #tpu.memory_space<vmem>>, vector<1x32xf32>
    %4 = vector.broadcast %3 : vector<1x32xf32> to vector<162x32xf32>
    %5 = arith.addf %2, %4 : vector<162x32xf32>
    %cst_5 = arith.constant 0.000000e+00 : f32
    %6 = vector.broadcast %cst_5 : f32 to vector<162x32xf32>
    %7 = arith.maximumf %5, %6 : vector<162x32xf32>
    %c0_6 = arith.constant 0 : index
    %c0_7 = arith.constant 0 : index
    %8 = vector.load %arg3[%c0_6, %c0_7] : memref<162x32xf32, #tpu.memory_space<vmem>>, vector<162x32xf32>
    tpu.vector_store %arg3[%c0_6, %c0_7], %7 {strides = array<i32>} : memref<162x32xf32, #tpu.memory_space<vmem>>, vector<162x32xf32>,
    return
  }
}

module attributes {stable_mosaic.version = 11 : i64} {
  func.func @_mlp_head_kernel(%arg0: memref<2x2592xf32, #tpu.memory_space<vmem>>, %arg1: memref<2592x256xf32, #tpu.memory_space<vmem>>, %arg2: memref<1x256xf32, #tpu.memory_space<vmem>>, %arg3: memref<256x128xf32, #tpu.memory_space<vmem>>, %arg4: memref<1x128xf32, #tpu.memory_space<vmem>>, %arg5: memref<128x1xf32, #tpu.memory_space<vmem>>, %arg6: memref<1x1xf32, #tpu.memory_space<vmem>>, %arg7: memref<2x1xf32, #tpu.memory_space<vmem>>) attributes {dimension_semantics = [], scalar_prefetch = 0 : i64, scratch_operands = 0 : i64, tpu.core_type = #tpu.core_type<tc>} {
    %c0 = arith.constant 0 : index
    %c0_0 = arith.constant 0 : index
    %0 = vector.load %arg0[%c0, %c0_0] : memref<2x2592xf32, #tpu.memory_space<vmem>>, vector<2x2592xf32>
    %c0_1 = arith.constant 0 : index
    %c0_2 = arith.constant 0 : index
    %1 = vector.load %arg1[%c0_1, %c0_2] : memref<2592x256xf32, #tpu.memory_space<vmem>>, vector<2592x256xf32>
    %cst = arith.constant dense<0.000000e+00> : vector<2x256xf32>
    %2 = tpu.matmul %0, %1, %cst {dimension_numbers = #tpu.dot_dimension_numbers<[1], [0], [0], [1], [0, 0, 1, 1], [], []>} : vector<2x2592xf32>, vector<2592x256xf32>, vector<2x256xf32> -> vector<2x256xf32>
    %c0_3 = arith.constant 0 : index
    %c0_4 = arith.constant 0 : index
    %3 = vector.load %arg2[%c0_3, %c0_4] : memref<1x256xf32, #tpu.memory_space<vmem>>, vector<1x256xf32>
    %4 = vector.broadcast %3 : vector<1x256xf32> to vector<2x256xf32>
    %5 = arith.addf %2, %4 : vector<2x256xf32>
    %cst_5 = arith.constant 0.000000e+00 : f32
    %6 = vector.broadcast %cst_5 : f32 to vector<2x256xf32>
    %7 = arith.maximumf %5, %6 : vector<2x256xf32>
    %c0_6 = arith.constant 0 : index
    %c0_7 = arith.constant 0 : index
    %8 = vector.load %arg3[%c0_6, %c0_7] : memref<256x128xf32, #tpu.memory_space<vmem>>, vector<256x128xf32>
    %cst_8 = arith.constant dense<0.000000e+00> : vector<2x128xf32>
    %9 = tpu.matmul %7, %8, %cst_8 {dimension_numbers = #tpu.dot_dimension_numbers<[1], [0], [0], [1], [0, 0, 1, 1], [], []>} : vector<2x256xf32>, vector<256x128xf32>, vector<2x128xf32> -> vector<2x128xf32>
    %c0_9 = arith.constant 0 : index
    %c0_10 = arith.constant 0 : index
    %10 = vector.load %arg4[%c0_9, %c0_10] : memref<1x128xf32, #tpu.memory_space<vmem>>, vector<1x128xf32>
    %11 = vector.broadcast %10 : vector<1x128xf32> to vector<2x128xf32>
    %12 = arith.addf %9, %11 : vector<2x128xf32>
    %cst_11 = arith.constant 0.000000e+00 : f32
    %13 = vector.broadcast %cst_11 : f32 to vector<2x128xf32>
    %14 = arith.maximumf %12, %13 : vector<2x128xf32>
    %c0_12 = arith.constant 0 : index
    %c0_13 = arith.constant 0 : index
    %15 = vector.load %arg5[%c0_12, %c0_13] : memref<128x1xf32, #tpu.memory_space<vmem>>, vector<128x1xf32>
    %cst_14 = arith.constant dense<0.000000e+00> : vector<2x1xf32>
    %16 = tpu.matmul %14, %15, %cst_14 {dimension_numbers = #tpu.dot_dimension_numbers<[1], [0], [0], [1], [0, 0, 1, 1], [], []>} : vector<2x128xf32>, vector<128x1xf32>, vector<2x1xf32> -> vector<2x1xf32>
    %c0_15 = arith.constant 0 : index
    %c0_16 = arith.constant 0 : index
    %17 = vector.load %arg6[%c0_15, %c0_16] : memref<1x1xf32, #tpu.memory_space<vmem>>, vector<1x1xf32>
    %18 = vector.broadcast %17 : vector<1x1xf32> to vector<2x1xf32>
    %19 = arith.addf %16, %18 : vector<2x1xf32>
    %c0_17 = arith.constant 0 : index
    %c0_18 = arith.constant 0 : index
    %20 = vector.load %arg7[%c0_17, %c0_18] : memref<2x1xf32, #tpu.memory_space<vmem>>, vector<2x1xf32>
    tpu.vector_store %arg7[%c0_17, %c0_18], %19 {strides = array<i32>} : memref<2x1xf32, #tpu.memory_space<vmem>>, vector<2x1xf32>,
    return
  }
}

</mosaic_0001>

<llo_original>
// kernel: image_cnn_forward.3
$region0: #{image_cnn_forward.3}
  #allocation0 [shape = 'u32[]', space=smem, size = 0x4, offset = 0x4, fixed_abs, tag = 'smem constant byte address 0x4 - core index']
  #allocation1 [shape = 'u32[144,128]{1,0:T(1,128)}', space=vmem, size = 0x12000, scoped, tag = 'internal scratch']
  %s0 = inlined_call_operand.vmem [shape: f32[800,192], index: 0, kind: input, shape index: {}]
  %s1 = inlined_call_operand.vmem [shape: f32[192,16], index: 1, kind: input, shape index: {}]
  %s2 = inlined_call_operand.vmem [shape: f32[1,16], index: 2, kind: input, shape index: {}]
  %s3 = inlined_call_operand.vmem [shape: f32[800,16], index: 3, kind: output, shape index: {}]
  %s4 = sld [smem:[#allocation0]]
  $region45: #{image_cnn_forward.3} parent=0
    _
  %s6 = ssub.s32 1, %s4
  %s7 = scalar_select 0, %s6, %s4
  loop: start=0, step=1, limit=4
  $region2: #{image_cnn_forward.3} parent=0 // loop_pre_header
    _
  $region3: #{image_cnn_forward.3} parent=0 // loop_header
    %s9 = sphi 0, %s13
    %p10 = scmp.ge.s32.totalorder %s9, 4
    %s19 = sphi 0, %s21
    %s22 = sphi 0, %s19
    %s23 = sphi 0, %s22
    %s39 = sphi 0, %s23
    %s43 = sphi 0, %s43
    %s45 = sphi 0, %s43
    %s46 = sphi 0, %s45
    %s60 = sphi 0, %s46
    %s64 = sphi 0, %s64
    %s66 = sphi 0, %s64
    %s67 = sphi 0, %s66
    %s81 = sphi 0, %s67
    %s87 = sphi 0, %s89
    %s90 = sphi 0, %s87
    %s91 = sphi 0, %s90
    %s107 = sphi 0, %s91
  $region4: #{image_cnn_forward.3} parent=0 // loop_header_branch
    %12 = sbr.rel (%p10) target = $region8
  $region5: #{image_cnn_forward.3} parent=0 // loop_body
    %s14 = ssub.s32 %s9, 1
    %s15 = ssub.s32 %s9, 2
    %s16 = sadd.s32 %s9, 1
    %s17 = ssub.s32 %s9, %s16
    %p18 = scmp.eq.s32.totalorder %s17, 0
    %s20 = sadd.s32 %s19, 1
    %s21 = scalar_select %p18, %s19, %s20
    %p24 = pneg %p18
    %p25 = scmp.eq.s32.totalorder %s9, 1
    %p26 = por %p24, %p25
    %p27 = scmp.ne.s32.totalorder %s19, %s22
    %p28 = scmp.eq.s32.totalorder %s9, 0
    %p29 = por %p27, %p28
    %p30 = scmp.ne.s32.totalorder %s19, %s22
    %p31 = scmp.eq.s32.totalorder %s14, 1
    %p32 = por %p30, %p31
    %p33 = scmp.ne.s32.totalorder %s22, %s23
    %p34 = scmp.eq.s32.totalorder %s14, 0
    %p35 = por %p33, %p34
    %p36 = scmp.ne.s32.totalorder %s22, %s23
    %p37 = scmp.eq.s32.totalorder %s15, 1
    %p38 = por %p36, %p37
    %p40 = scmp.ne.s32.totalorder %s23, %s39
    %p41 = scmp.eq.s32.totalorder %s15, 0
    %p42 = por %p40, %p41
    %s44 = sadd.s32 %s43, 1
    %p47 = scmp.eq.s32.totalorder %s9, 1
    %p48 = scmp.ne.s32.totalorder %s43, %s45
    %p49 = scmp.eq.s32.totalorder %s9, 0
    %p50 = por %p48, %p49
    %p51 = scmp.ne.s32.totalorder %s43, %s45
    %p52 = scmp.eq.s32.totalorder %s14, 1
    %p53 = por %p51, %p52
    %p54 = scmp.ne.s32.totalorder %s45, %s46
    %p55 = scmp.eq.s32.totalorder %s14, 0
    %p56 = por %p54, %p55
    %p57 = scmp.ne.s32.totalorder %s45, %s46
    %p58 = scmp.eq.s32.totalorder %s15, 1
    %p59 = por %p57, %p58
    %p61 = scmp.ne.s32.totalorder %s46, %s60
    %p62 = scmp.eq.s32.totalorder %s15, 0
    %p63 = por %p61, %p62
    %s65 = sadd.s32 %s64, 1
    %p68 = scmp.eq.s32.totalorder %s9, 1
    %p69 = scmp.ne.s32.totalorder %s64, %s66
    %p70 = scmp.eq.s32.totalorder %s9, 0
    %p71 = por %p69, %p70
    %p72 = scmp.ne.s32.totalorder %s64, %s66
    %p73 = scmp.eq.s32.totalorder %s14, 1
    %p74 = por %p72, %p73
    %p75 = scmp.ne.s32.totalorder %s66, %s67
    %p76 = scmp.eq.s32.totalorder %s14, 0
    %p77 = por %p75, %p76
    %p78 = scmp.ne.s32.totalorder %s66, %s67
    %p79 = scmp.eq.s32.totalorder %s15, 1
    %p80 = por %p78, %p79
    %p82 = scmp.ne.s32.totalorder %s67, %s81
    %p83 = scmp.eq.s32.totalorder %s15, 0
    %p84 = por %p82, %p83
    %s85 = ssub.s32 %s9, %s16
    %p86 = scmp.eq.s32.totalorder %s85, 0
    %s88 = sadd.s32 %s87, 1
    %s89 = scalar_select %p86, %s87, %s88
    %p92 = pneg %p86
    %p93 = scmp.eq.s32.totalorder %s9, 1
    %p94 = por %p92, %p93
    %p95 = scmp.ne.s32.totalorder %s87, %s90
    %p96 = scmp.eq.s32.totalorder %s9, 0
    %p97 = por %p95, %p96
    %p98 = scmp.ne.s32.totalorder %s87, %s90
    %p99 = scmp.eq.s32.totalorder %s14, 1
    %p100 = por %p98, %p99
    %p101 = scmp.ne.s32.totalorder %s90, %s91
    %p102 = scmp.eq.s32.totalorder %s14, 0
    %p103 = por %p101, %p102
    %p104 = scmp.ne.s32.totalorder %s90, %s91
    %p105 = scmp.eq.s32.totalorder %s15, 1
    %p106 = por %p104, %p105
    %p108 = scmp.ne.s32.totalorder %s91, %s107
    %p109 = scmp.eq.s32.totalorder %s15, 0
    %p110 = por %p108, %p109
    %p111 = scmp.le.s32.totalorder 1, %s9
    %p112 = scmp.lt.s32.totalorder %s9, 3
    %p113 = pnand %p111, %p112
    %p114 = pneg %p113
    // Predicated region
    $region9: #{image_cnn_forward.3} parent=5 // pred_check
      _
    $region10: #{image_cnn_forward.3} parent=5 // pred_check_branch
      %116 = sbr.rel (%p113) target = $region12
    $region11: #{image_cnn_forward.3} parent=5 // pred_region
      %s117 = ssub.s32 %s9, 1
      // Predicated region
      $region13: #{image_cnn_forward.3} parent=11 // pred_check
        %p118 = pneg %p56
      $region14: #{image_cnn_forward.3} parent=11 // pred_check_branch
        %120 = sbr.rel (%p118) target = $region16
      $region15: #{image_cnn_forward.3} parent=11 // pred_region
        _
      $region16: #{image_cnn_forward.3} parent=11 // pred_fallthru
        _
      // Predicated region
      $region17: #{image_cnn_forward.3} parent=11 // pred_check
        %p121 = pneg %p77
      $region18: #{image_cnn_forward.3} parent=11 // pred_check_branch
        %123 = sbr.rel (%p121) target = $region20
      $region19: #{image_cnn_forward.3} parent=11 // pred_region
        _
      $region20: #{image_cnn_forward.3} parent=11 // pred_fallthru
        _
    $region12: #{image_cnn_forward.3} parent=5 // pred_fallthru
      _
    %p124 = scmp.lt.s32.totalorder %s9, 2
    // Predicated region
    $region21: #{image_cnn_forward.3} parent=5 // pred_check
      %p125 = pneg %p124
    $region22: #{image_cnn_forward.3} parent=5 // pred_check_branch
      %127 = sbr.rel (%p125) target = $region24
    $region23: #{image_cnn_forward.3} parent=5 // pred_region
      // Predicated region
      $region25: #{image_cnn_forward.3} parent=23 // pred_check
        %p128 = pneg %p29
      $region26: #{image_cnn_forward.3} parent=23 // pred_check_branch
        %130 = sbr.rel (%p128) target = $region28
      $region27: #{image_cnn_forward.3} parent=23 // pred_region
        %s131 = smul.u32 50, %s9
        %p132 = scmp.lt.s32.totalorder %s131, 99
        %s133 = scalar_select %p132, %s131, 99
        %s134 = smul.addr %s133, 2
        %s135 = smul.addr %s134, 8
        %s136 = scalar_lea.vmem %s0, %s135
        %s137 = smul.u32 50, %s9
      $region28: #{image_cnn_forward.3} parent=23 // pred_fallthru
        _
    $region24: #{image_cnn_forward.3} parent=5 // pred_fallthru
      _
    %p138 = scmp.le.s32.totalorder 1, %s9
    %p139 = scmp.lt.s32.totalorder %s9, 3
    %p140 = pnand %p138, %p139
    %p141 = pneg %p140
    // Predicated region
    $region29: #{image_cnn_forward.3} parent=5 // pred_check
      _
    $region30: #{image_cnn_forward.3} parent=5 // pred_check_branch
      %143 = sbr.rel (%p140) target = $region32
    $region31: #{image_cnn_forward.3} parent=5 // pred_region
      %s144 = ssub.s32 %s9, 1
      %s145 = smul.u32 50, %s14
      %p146 = scmp.lt.s32.totalorder %s145, 99
      %s147 = scalar_select %p146, %s145, 99
      %s148 = smul.addr %s147, 2
      %s149 = smul.addr %s148, 8
      %s150 = scalar_lea.vmem %s0, %s149
      %p151 = pneg %p35
      %p152 = pneg %p32
      %p153 = pneg %p56
      %p154 = pneg %p53
      %p155 = pneg %p77
      %p156 = pneg %p74
      %p157 = pneg %p103
      %p158 = pneg %p100
      %s159 = smul.u32 50, %s14
      %p160 = scmp.lt.s32.totalorder %s159, 99
      %s161 = scalar_select %p160, %s159, 99
      %s162 = smul.addr %s161, 8
      %s163 = scalar_lea.vmem %s3, %s162
      %s164 = smul.u32 50, %s14
      %p165 = scmp.lt.s32.totalorder %s164, 99
      %s166 = scalar_select %p165, %s164, 99
      %s167 = smul.addr %s166, 2
      %s168 = smul.addr %s167, 8
      %s169 = scalar_lea.vmem %s0, %s168
      %s170 = smul.u32 50, %s14
      %s171 = smul.u32 50, %s14
      %p172 = scmp.lt.s32.totalorder %s171, 99
      %s173 = scalar_select %p172, %s171, 99
      %s174 = smul.addr %s173, 8
      %s175 = scalar_lea.vmem %s3, %s174
      %s176 = smul.u32 50, %s14
      %v177 = vld [vmem:[%s169] sm:$0xff]
      %v178 = vld [vmem:[%s169 + $0x8] sm:$0xff]
      %v179 = vld [vmem:[%s169 + $0x10] sm:$0xff]
      %v180 = vld [vmem:[%s169 + $0x18] sm:$0xff]
      %v181 = vld [vmem:[%s169 + $0x20] sm:$0xff]
      %v182 = vld [vmem:[%s169 + $0x28] sm:$0xff]
      %v183 = vld [vmem:[%s169 + $0x30] sm:$0xff]
      %v184 = vld [vmem:[%s169 + $0x38] sm:$0xff]
      %v185 = vld [vmem:[%s169 + $0x40] sm:$0xff]
      %v186 = vld [vmem:[%s169 + $0x48] sm:$0xff]
      %v187 = vld [vmem:[%s169 + $0x50] sm:$0xff]
      %v188 = vld [vmem:[%s169 + $0x58] sm:$0xff]
      %v189 = vld [vmem:[%s169 + $0x60] sm:$0xff]
      %v190 = vld [vmem:[%s169 + $0x68] sm:$0xff]
      %v191 = vld [vmem:[%s169 + $0x70] sm:$0xff]
      %v192 = vld [vmem:[%s169 + $0x78] sm:$0xff]
      %v193 = vld [vmem:[%s169 + $0x80] sm:$0xff]
      %v194 = vld [vmem:[%s169 + $0x88] sm:$0xff]
      %v195 = vld [vmem:[%s169 + $0x90] sm:$0xff]
      %v196 = vld [vmem:[%s169 + $0x98] sm:$0xff]
      %v197 = vld [vmem:[%s169 + $0xa0] sm:$0xff]
      %v198 = vld [vmem:[%s169 + $0xa8] sm:$0xff]
      %v199 = vld [vmem:[%s169 + $0xb0] sm:$0xff]
      %v200 = vld [vmem:[%s169 + $0xb8] sm:$0xff]
      %v201 = vld [vmem:[%s169 + $0xc0] sm:$0xff]
      %v202 = vld [vmem:[%s169 + $0xc8] sm:$0xff]
      %v203 = vld [vmem:[%s169 + $0xd0] sm:$0xff]
      %v204 = vld [vmem:[%s169 + $0xd8] sm:$0xff]
      %v205 = vld [vmem:[%s169 + $0xe0] sm:$0xff]
      %v206 = vld [vmem:[%s169 + $0xe8] sm:$0xff]
      %v207 = vld [vmem:[%s169 + $0xf0] sm:$0xff]
      %v208 = vld [vmem:[%s169 + $0xf8] sm:$0xff]
      %v209 = vld [vmem:[%s169 + $0x100] sm:$0xff]
      %v210 = vld [vmem:[%s169 + $0x108] sm:$0xff]
      %v211 = vld [vmem:[%s169 + $0x110] sm:$0xff]
      %v212 = vld [vmem:[%s169 + $0x118] sm:$0xff]
      %v213 = vld [vmem:[%s169 + $0x120] sm:$0xff]
      %v214 = vld [vmem:[%s169 + $0x128] sm:$0xff]
      %v215 = vld [vmem:[%s169 + $0x130] sm:$0xff]
      %v216 = vld [vmem:[%s169 + $0x138] sm:$0xff]
      %v217 = vld [vmem:[%s169 + $0x140] sm:$0xff]
      %v218 = vld [vmem:[%s169 + $0x148] sm:$0xff]
      %v219 = vld [vmem:[%s169 + $0x150] sm:$0xff]
      %v220 = vld [vmem:[%s169 + $0x158] sm:$0xff]
      %v221 = vld [vmem:[%s169 + $0x160] sm:$0xff]
      %v222 = vld [vmem:[%s169 + $0x168] sm:$0xff]
      %v223 = vld [vmem:[%s169 + $0x170] sm:$0xff]
      %v224 = vld [vmem:[%s169 + $0x178] sm:$0xff]
      %v225 = vld [vmem:[%s169 + $0x180] sm:$0xff]
      %v226 = vld [vmem:[%s169 + $0x188] sm:$0xff]
      %v227 = vld [vmem:[%s169 + $0x190] sm:$0xff]
      %v228 = vld [vmem:[%s169 + $0x198] sm:$0xff]
      %v229 = vld [vmem:[%s169 + $0x1a0] sm:$0xff]
      %v230 = vld [vmem:[%s169 + $0x1a8] sm:$0xff]
      %v231 = vld [vmem:[%s169 + $0x1b0] sm:$0xff]
      %v232 = vld [vmem:[%s169 + $0x1b8] sm:$0xff]
      %v233 = vld [vmem:[%s169 + $0x1c0] sm:$0xff]
      %v234 = vld [vmem:[%s169 + $0x1c8] sm:$0xff]
      %v235 = vld [vmem:[%s169 + $0x1d0] sm:$0xff]
      %v236 = vld [vmem:[%s169 + $0x1d8] sm:$0xff]
      %v237 = vld [vmem:[%s169 + $0x1e0] sm:$0xff]
      %v238 = vld [vmem:[%s169 + $0x1e8] sm:$0xff]
      %v239 = vld [vmem:[%s169 + $0x1f0] sm:$0xff]
      %v240 = vld [vmem:[%s169 + $0x1f8] sm:$0xff]
      %v241 = vld [vmem:[%s169 + $0x200] sm:$0xff]
      %v242 = vld [vmem:[%s169 + $0x208] sm:$0xff]
      %v243 = vld [vmem:[%s169 + $0x210] sm:$0xff]
      %v244 = vld [vmem:[%s169 + $0x218] sm:$0xff]
      %v245 = vld [vmem:[%s169 + $0x220] sm:$0xff]
      %v246 = vld [vmem:[%s169 + $0x228] sm:$0xff]
      %v247 = vld [vmem:[%s169 + $0x230] sm:$0xff]
      %v248 = vld [vmem:[%s169 + $0x238] sm:$0xff]
      %v249 = vld [vmem:[%s169 + $0x240] sm:$0xff]
      %v250 = vld [vmem:[%s169 + $0x248] sm:$0xff]
      %v251 = vld [vmem:[%s169 + $0x250] sm:$0xff]
      %v252 = vld [vmem:[%s169 + $0x258] sm:$0xff]
      %v253 = vld [vmem:[%s169 + $0x260] sm:$0xff]
      %v254 = vld [vmem:[%s169 + $0x268] sm:$0xff]
      %v255 = vld [vmem:[%s169 + $0x270] sm:$0xff]
      %v256 = vld [vmem:[%s169 + $0x278] sm:$0xff]
      %v257 = vld [vmem:[%s169 + $0x280] sm:$0xff]
      %v258 = vld [vmem:[%s169 + $0x288] sm:$0xff]
      %v259 = vld [vmem:[%s169 + $0x290] sm:$0xff]
      %v260 = vld [vmem:[%s169 + $0x298] sm:$0xff]
      %v261 = vld [vmem:[%s169 + $0x2a0] sm:$0xff]
      %v262 = vld [vmem:[%s169 + $0x2a8] sm:$0xff]
      %v263 = vld [vmem:[%s169 + $0x2b0] sm:$0xff]
      %v264 = vld [vmem:[%s169 + $0x2b8] sm:$0xff]
      %v265 = vld [vmem:[%s169 + $0x2c0] sm:$0xff]
      %v266 = vld [vmem:[%s169 + $0x2c8] sm:$0xff]
      %v267 = vld [vmem:[%s169 + $0x2d0] sm:$0xff]
      %v268 = vld [vmem:[%s169 + $0x2d8] sm:$0xff]
      %v269 = vld [vmem:[%s169 + $0x2e0] sm:$0xff]
      %v270 = vld [vmem:[%s169 + $0x2e8] sm:$0xff]
      %v271 = vld [vmem:[%s169 + $0x2f0] sm:$0xff]
      %v272 = vld [vmem:[%s169 + $0x2f8] sm:$0xff]
      %v273 = vld [vmem:[%s169 + $0x300] sm:$0xff]
      %v274 = vld [vmem:[%s169 + $0x308] sm:$0xff]
      %v275 = vld [vmem:[%s169 + $0x310] sm:$0xff]
      %v276 = vld [vmem:[%s169 + $0x318] sm:$0xff]
      %v277 = vld [vmem:[%s1] sm:$0xff]
      %v278 = vld [vmem:[%s1 + $0x8] sm:$0xff]
      %v279 = vld [vmem:[%s1 + $0x10] sm:$0xff]
      %v280 = vld [vmem:[%s1 + $0x18] sm:$0xff]
      %v281 = vld [vmem:[%s1 + $0x20] sm:$0xff]
      %v282 = vld [vmem:[%s1 + $0x28] sm:$0xff]
      %v283 = vld [vmem:[%s1 + $0x30] sm:$0xff]
      %v284 = vld [vmem:[%s1 + $0x38] sm:$0xff]
      %v285 = vld [vmem:[%s1 + $0x40] sm:$0xff]
      %v286 = vld [vmem:[%s1 + $0x48] sm:$0xff]
      %v287 = vld [vmem:[%s1 + $0x50] sm:$0xff]
      %v288 = vld [vmem:[%s1 + $0x58] sm:$0xff]
      %v289 = vld [vmem:[%s1 + $0x60] sm:$0xff]
      %v290 = vld [vmem:[%s1 + $0x68] sm:$0xff]
      %v291 = vld [vmem:[%s1 + $0x70] sm:$0xff]
      %v292 = vld [vmem:[%s1 + $0x78] sm:$0xff]
      %v293 = vld [vmem:[%s1 + $0x80] sm:$0xff]
      %v294 = vld [vmem:[%s1 + $0x88] sm:$0xff]
      %v295 = vld [vmem:[%s1 + $0x90] sm:$0xff]
      %v296 = vld [vmem:[%s1 + $0x98] sm:$0xff]
      %v297 = vld [vmem:[%s1 + $0xa0] sm:$0xff]
      %v298 = vld [vmem:[%s1 + $0xa8] sm:$0xff]
      %v299 = vld [vmem:[%s1 + $0xb0] sm:$0xff]
      %v300 = vld [vmem:[%s1 + $0xb8] sm:$0xff]
      %v301 = vld [vmem:[%s2] sm:$0x1]
      %v303 = vlaneseq
      %v304 = vshrl.u32 %v303, 7
      %v305 = vsub.s32 0, %v304
      %v306 = vrot.slane %v301, %v305
      %vm308 = vcmask 523264
      %v310 = vsel %vm308, %v178, 0
      %v313 = vsel %vm308, %v180, 0
      %v316 = vsel %vm308, %v182, 0
      %v319 = vsel %vm308, %v184, 0
      %v322 = vsel %vm308, %v186, 0
      %v325 = vsel %vm308, %v188, 0
      %v328 = vsel %vm308, %v190, 0
      %v331 = vsel %vm308, %v192, 0
      %v334 = vsel %vm308, %v194, 0
      %v337 = vsel %vm308, %v196, 0
      %v340 = vsel %vm308, %v198, 0
      %v343 = vsel %vm308, %v200, 0
      %v346 = vsel %vm308, %v202, 0
      %v349 = vsel %vm308, %v204, 0
      %v352 = vsel %vm308, %v206, 0
      %v355 = vsel %vm308, %v208, 0
      %v358 = vsel %vm308, %v210, 0
      %v361 = vsel %vm308, %v212, 0
      %v364 = vsel %vm308, %v214, 0
      %v367 = vsel %vm308, %v216, 0
      %v370 = vsel %vm308, %v218, 0
      %v373 = vsel %vm308, %v220, 0
      %v376 = vsel %vm308, %v222, 0
      %v379 = vsel %vm308, %v224, 0
      %v382 = vsel %vm308, %v226, 0
      %v385 = vsel %vm308, %v228, 0
      %v388 = vsel %vm308, %v230, 0
      %v391 = vsel %vm308, %v232, 0
      %v394 = vsel %vm308, %v234, 0
      %v397 = vsel %vm308, %v236, 0
      %v400 = vsel %vm308, %v238, 0
      %v403 = vsel %vm308, %v240, 0
      %v406 = vsel %vm308, %v242, 0
      %v409 = vsel %vm308, %v244, 0
      %v412 = vsel %vm308, %v246, 0
      %v415 = vsel %vm308, %v248, 0
      %v418 = vsel %vm308, %v250, 0
      %v421 = vsel %vm308, %v252, 0
      %v424 = vsel %vm308, %v254, 0
      %v427 = vsel %vm308, %v256, 0
      %v430 = vsel %vm308, %v258, 0
      %v433 = vsel %vm308, %v260, 0
      %v436 = vsel %vm308, %v262, 0
      %v439 = vsel %vm308, %v264, 0
      %v442 = vsel %vm308, %v266, 0
      %v445 = vsel %vm308, %v268, 0
      %v448 = vsel %vm308, %v270, 0
      %v451 = vsel %vm308, %v272, 0
      %v454 = vsel %vm308, %v274, 0
      %v457 = vsel %vm308, %v276, 0
      %459 = vmatprep.subr.mxu0 0.0
      %460 = vmatpush1.msra.mxu0 %v277
      %461 = vmatprep.subr.mxu0 0.0
      %462 = vmatpush1.msra.mxu0 %v278
      %463 = vmatprep.subr.mxu0 0.0
      %464 = vmatpush1.msra.mxu0 %v279
      %465 = vmatprep.subr.mxu0 0.0
      %466 = vmatpush1.msra.mxu0 %v280
      %467 = vmatprep.subr.mxu0 0.0
      %468 = vmatpush1.msra.mxu0 %v281
      %469 = vmatprep.subr.mxu0 0.0
      %470 = vmatpush1.msra.mxu0 %v282
      %471 = vmatprep.subr.mxu0 0.0
      %472 = vmatpush1.msra.mxu0 %v283
      %473 = vmatprep.subr.mxu0 0.0
      %474 = vmatpush1.msra.mxu0 %v284
      %475 = vmatprep.subr.mxu0 0.0
      %476 = vmatpush1.msra.mxu0 %v285
      %477 = vmatprep.subr.mxu0 0.0
      %478 = vmatpush1.msra.mxu0 %v286
      %479 = vmatprep.subr.mxu0 0.0
      %480 = vmatpush1.msra.mxu0 %v287
      %481 = vmatprep.subr.mxu0 0.0
      %482 = vmatpush1.msra.mxu0 %v288
      %483 = vmatprep.subr.mxu0 0.0
      %484 = vmatpush1.msra.mxu0 %v289
      %485 = vmatprep.subr.mxu0 0.0
      %486 = vmatpush1.msra.mxu0 %v290
      %487 = vmatprep.subr.mxu0 0.0
      %488 = vmatpush1.msra.mxu0 %v291
      %489 = vmatprep.subr.mxu0 0.0
      %490 = vmatpush1.msra.mxu0 %v292
      %491 = vmatprep.subr.mxu0 0.0
      %492 = vmatpush1.msra.mxu0 %v293
      %493 = vmatprep.subr.mxu0 0.0
      %494 = vmatpush1.msra.mxu0 %v294
      %495 = vmatprep.subr.mxu0 0.0
      %496 = vmatpush1.msra.mxu0 %v295
      %497 = vmatprep.subr.mxu0 0.0
      %498 = vmatpush1.msra.mxu0 %v296
      %499 = vmatprep.subr.mxu0 0.0
      %500 = vmatpush1.msra.mxu0 %v297
      %501 = vmatprep.subr.mxu0 0.0
      %502 = vmatpush1.msra.mxu0 %v298
      %503 = vmatprep.subr.mxu0 0.0
      %504 = vmatpush1.msra.mxu0 %v299
      %505 = vmatprep.subr.mxu0 0.0
      %506 = vmatpush1.msra.mxu0 %v300
      %507 = vmatprep.subr.mxu0 0.0
      %508 = vmatpush1.msra.mxu0 0.0
      %509 = vmatprep.subr.mxu0 0.0
      %510 = vmatpush1.msra.mxu0 0.0
      %511 = vmatprep.subr.mxu0 0.0
      %512 = vmatpush1.msra.mxu0 0.0
      %513 = vmatprep.subr.mxu0 0.0
      %514 = vmatpush1.msra.mxu0 0.0
      %515 = vmatprep.subr.mxu0 0.0
      %516 = vmatpush1.msra.mxu0 0.0
      %517 = vmatprep.subr.mxu0 0.0
      %518 = vmatpush1.msra.mxu0 0.0
      %519 = vmatprep.subr.mxu0 0.0
      %520 = vmatpush1.msra.mxu0 0.0
      %521 = vmatprep.subr.mxu0 0.0
      %522 = vmatpush1.msra.mxu0 0.0
      %523 = vmatprep.mubr.f32.mxu0 %v310
      %524 = vmatmul.mubr.f32.gmra.mrb[0].mxu0 %v177
      %v525 = vpop.f32.mrb[0].mxu0
      %v526 = vadd.f32 %v306, %v525
      %v527 = vpop.f32.mrb[0].mxu0
      %528 = vmatprep.mubr.f32.mxu0 %v313
      %529 = vmatmul.mubr.f32.gmra.mrb[0].mxu0 %v179
      %v530 = vpop.f32.mrb[0].mxu0
      %v531 = vadd.f32 %v306, %v530
      %v532 = vpop.f32.mrb[0].mxu0
      %533 = vmatprep.mubr.f32.mxu0 %v316
      %534 = vmatmul.mubr.f32.gmra.mrb[0].mxu0 %v181
      %v535 = vpop.f32.mrb[0].mxu0
      %v536 = vadd.f32 %v306, %v535
      %v537 = vpop.f32.mrb[0].mxu0
      %538 = vmatprep.mubr.f32.mxu0 %v319
      %539 = vmatmul.mubr.f32.gmra.mrb[0].mxu0 %v183
      %v540 = vpop.f32.mrb[0].mxu0
      %v541 = vadd.f32 %v306, %v540
      %v542 = vpop.f32.mrb[0].mxu0
      %543 = vmatprep.mubr.f32.mxu0 %v322
      %544 = vmatmul.mubr.f32.gmra.mrb[0].mxu0 %v185
      %v545 = vpop.f32.mrb[0].mxu0
      %v546 = vadd.f32 %v306, %v545
      %v547 = vpop.f32.mrb[0].mxu0
      %548 = vmatprep.mubr.f32.mxu0 %v325
      %549 = vmatmul.mubr.f32.gmra.mrb[0].mxu0 %v187
      %v550 = vpop.f32.mrb[0].mxu0
      %v551 = vadd.f32 %v306, %v550
      %v552 = vpop.f32.mrb[0].mxu0
      %553 = vmatprep.mubr.f32.mxu0 %v328
      %554 = vmatmul.mubr.f32.gmra.mrb[0].mxu0 %v189
      %v555 = vpop.f32.mrb[0].mxu0
      %v556 = vadd.f32 %v306, %v555
      %v557 = vpop.f32.mrb[0].mxu0
      %558 = vmatprep.mubr.f32.mxu0 %v331
      %559 = vmatmul.mubr.f32.gmra.mrb[0].mxu0 %v191
      %v560 = vpop.f32.mrb[0].mxu0
      %v561 = vadd.f32 %v306, %v560
      %v562 = vpop.f32.mrb[0].mxu0
      %563 = vmatprep.mubr.f32.mxu0 %v334
      %564 = vmatmul.mubr.f32.gmra.mrb[0].mxu0 %v193
      %v565 = vpop.f32.mrb[0].mxu0
      %v566 = vadd.f32 %v306, %v565
      %v567 = vpop.f32.mrb[0].mxu0
      %568 = vmatprep.mubr.f32.mxu0 %v337
      %569 = vmatmul.mubr.f32.gmra.mrb[0].mxu0 %v195
      %v570 = vpop.f32.mrb[0].mxu0
      %v571 = vadd.f32 %v306, %v570
      %v572 = vpop.f32.mrb[0].mxu0
      %573 = vmatprep.mubr.f32.mxu0 %v340
      %574 = vmatmul.mubr.f32.gmra.mrb[0].mxu0 %v197
      %v575 = vpop.f32.mrb[0].mxu0
      %v576 = vadd.f32 %v306, %v575
      %v577 = vpop.f32.mrb[0].mxu0
      %578 = vmatprep.mubr.f32.mxu0 %v343
      %579 = vmatmul.mubr.f32.gmra.mrb[0].mxu0 %v199
      %v580 = vpop.f32.mrb[0].mxu0
      %v581 = vadd.f32 %v306, %v580
      %v582 = vpop.f32.mrb[0].mxu0
      %583 = vmatprep.mubr.f32.mxu0 %v346
      %584 = vmatmul.mubr.f32.gmra.mrb[0].mxu0 %v201
      %v585 = vpop.f32.mrb[0].mxu0
      %v586 = vadd.f32 %v306, %v585
      %v587 = vpop.f32.mrb[0].mxu0
      %588 = vmatprep.mubr.f32.mxu0 %v349
      %589 = vmatmul.mubr.f32.gmra.mrb[0].mxu0 %v203
      %v590 = vpop.f32.mrb[0].mxu0
      %v591 = vadd.f32 %v306, %v590
      %v592 = vpop.f32.mrb[0].mxu0
      %593 = vmatprep.mubr.f32.mxu0 %v352
      %594 = vmatmul.mubr.f32.gmra.mrb[0].mxu0 %v205
      %v595 = vpop.f32.mrb[0].mxu0
      %v596 = vadd.f32 %v306, %v595
      %v597 = vpop.f32.mrb[0].mxu0
      %598 = vmatprep.mubr.f32.mxu0 %v355
      %599 = vmatmul.mubr.f32.gmra.mrb[0].mxu0 %v207
      %v600 = vpop.f32.mrb[0].mxu0
      %v601 = vadd.f32 %v306, %v600
      %v602 = vpop.f32.mrb[0].mxu0
      %603 = vmatprep.mubr.f32.mxu0 %v358
      %604 = vmatmul.mubr.f32.gmra.mrb[0].mxu0 %v209
      %v605 = vpop.f32.mrb[0].mxu0
      %v606 = vadd.f32 %v306, %v605
      %v607 = vpop.f32.mrb[0].mxu0
      %608 = vmatprep.mubr.f32.mxu0 %v361
      %609 = vmatmul.mubr.f32.gmra.mrb[0].mxu0 %v211
      %v610 = vpop.f32.mrb[0].mxu0
      %v611 = vadd.f32 %v306, %v610
      %v612 = vpop.f32.mrb[0].mxu0
      %613 = vmatprep.mubr.f32.mxu0 %v364
      %614 = vmatmul.mubr.f32.gmra.mrb[0].mxu0 %v213
      %v615 = vpop.f32.mrb[0].mxu0
      %v616 = vadd.f32 %v306, %v615
      %v617 = vpop.f32.mrb[0].mxu0
      %618 = vmatprep.mubr.f32.mxu0 %v367
      %619 = vmatmul.mubr.f32.gmra.mrb[0].mxu0 %v215
      %v620 = vpop.f32.mrb[0].mxu0
      %v621 = vadd.f32 %v306, %v620
      %v622 = vpop.f32.mrb[0].mxu0
      %623 = vmatprep.mubr.f32.mxu0 %v370
      %624 = vmatmul.mubr.f32.gmra.mrb[0].mxu0 %v217
      %v625 = vpop.f32.mrb[0].mxu0
      %v626 = vadd.f32 %v306, %v625
      %v627 = vpop.f32.mrb[0].mxu0
      %628 = vmatprep.mubr.f32.mxu0 %v373
      %629 = vmatmul.mubr.f32.gmra.mrb[0].mxu0 %v219
      %v630 = vpop.f32.mrb[0].mxu0
      %v631 = vadd.f32 %v306, %v630
      %v632 = vpop.f32.mrb[0].mxu0
      %633 = vmatprep.mubr.f32.mxu0 %v376
      %634 = vmatmul.mubr.f32.gmra.mrb[0].mxu0 %v221
      %v635 = vpop.f32.mrb[0].mxu0
      %v636 = vadd.f32 %v306, %v635
      %v637 = vpop.f32.mrb[0].mxu0
      %638 = vmatprep.mubr.f32.mxu0 %v379
      %639 = vmatmul.mubr.f32.gmra.mrb[0].mxu0 %v223
      %v640 = vpop.f32.mrb[0].mxu0
      %v641 = vadd.f32 %v306, %v640
      %v642 = vpop.f32.mrb[0].mxu0
      %643 = vmatprep.mubr.f32.mxu0 %v382
      %644 = vmatmul.mubr.f32.gmra.mrb[0].mxu0 %v225
      %v645 = vpop.f32.mrb[0].mxu0
      %v646 = vadd.f32 %v306, %v645
      %v647 = vpop.f32.mrb[0].mxu0
      %648 = vmatprep.mubr.f32.mxu0 %v385
      %649 = vmatmul.mubr.f32.gmra.mrb[0].mxu0 %v227
      %v650 = vpop.f32.mrb[0].mxu0
      %v651 = vadd.f32 %v306, %v650
      %v652 = vpop.f32.mrb[0].mxu0
      %653 = vmatprep.mubr.f32.mxu0 %v388
      %654 = vmatmul.mubr.f32.gmra.mrb[0].mxu0 %v229
      %v655 = vpop.f32.mrb[0].mxu0
      %v656 = vadd.f32 %v306, %v655
      %v657 = vpop.f32.mrb[0].mxu0
      %658 = vmatprep.mubr.f32.mxu0 %v391
      %659 = vmatmul.mubr.f32.gmra.mrb[0].mxu0 %v231
      %v660 = vpop.f32.mrb[0].mxu0
      %v661 = vadd.f32 %v306, %v660
      %v662 = vpop.f32.mrb[0].mxu0
      %663 = vmatprep.mubr.f32.mxu0 %v394
      %664 = vmatmul.mubr.f32.gmra.mrb[0].mxu0 %v233
      %v665 = vpop.f32.mrb[0].mxu0
      %v666 = vadd.f32 %v306, %v665
      %v667 = vpop.f32.mrb[0].mxu0
      %668 = vmatprep.mubr.f32.mxu0 %v397
      %669 = vmatmul.mubr.f32.gmra.mrb[0].mxu0 %v235
      %v670 = vpop.f32.mrb[0].mxu0
      %v671 = vadd.f32 %v306, %v670
      %v672 = vpop.f32.mrb[0].mxu0
      %673 = vmatprep.mubr.f32.mxu0 %v400
      %674 = vmatmul.mubr.f32.gmra.mrb[0].mxu0 %v237
      %v675 = vpop.f32.mrb[0].mxu0
      %v676 = vadd.f32 %v306, %v675
      %v677 = vpop.f32.mrb[0].mxu0
      %678 = vmatprep.mubr.f32.mxu0 %v403
      %679 = vmatmul.mubr.f32.gmra.mrb[0].mxu0 %v239
      %v680 = vpop.f32.mrb[0].mxu0
      %v681 = vadd.f32 %v306, %v680
      %v682 = vpop.f32.mrb[0].mxu0
      %683 = vmatprep.mubr.f32.mxu0 %v406
      %684 = vmatmul.mubr.f32.gmra.mrb[0].mxu0 %v241
      %v685 = vpop.f32.mrb[0].mxu0
      %v686 = vadd.f32 %v306, %v685
      %v687 = vpop.f32.mrb[0].mxu0
      %688 = vmatprep.mubr.f32.mxu0 %v409
      %689 = vmatmul.mubr.f32.gmra.mrb[0].mxu0 %v243
      %v690 = vpop.f32.mrb[0].mxu0
      %v691 = vadd.f32 %v306, %v690
      %v692 = vpop.f32.mrb[0].mxu0
      %693 = vmatprep.mubr.f32.mxu0 %v412
      %694 = vmatmul.mubr.f32.gmra.mrb[0].mxu0 %v245
      %v695 = vpop.f32.mrb[0].mxu0
      %v696 = vadd.f32 %v306, %v695
      %v697 = vpop.f32.mrb[0].mxu0
      %698 = vmatprep.mubr.f32.mxu0 %v415
      %699 = vmatmul.mubr.f32.gmra.mrb[0].mxu0 %v247
      %v700 = vpop.f32.mrb[0].mxu0
      %v701 = vadd.f32 %v306, %v700
      %v702 = vpop.f32.mrb[0].mxu0
      %703 = vmatprep.mubr.f32.mxu0 %v418
      %704 = vmatmul.mubr.f32.gmra.mrb[0].mxu0 %v249
      %v705 = vpop.f32.mrb[0].mxu0
      %v706 = vadd.f32 %v306, %v705
      %v707 = vpop.f32.mrb[0].mxu0
      %708 = vmatprep.mubr.f32.mxu0 %v421
      %709 = vmatmul.mubr.f32.gmra.mrb[0].mxu0 %v251
      %v710 = vpop.f32.mrb[0].mxu0
      %v711 = vadd.f32 %v306, %v710
      %v712 = vpop.f32.mrb[0].mxu0
      %713 = vmatprep.mubr.f32.mxu0 %v424
      %714 = vmatmul.mubr.f32.gmra.mrb[0].mxu0 %v253
      %v715 = vpop.f32.mrb[0].mxu0
      %v716 = vadd.f32 %v306, %v715
      %v717 = vpop.f32.mrb[0].mxu0
      %718 = vmatprep.mubr.f32.mxu0 %v427
      %719 = vmatmul.mubr.f32.gmra.mrb[0].mxu0 %v255
      %v720 = vpop.f32.mrb[0].mxu0
      %v721 = vadd.f32 %v306, %v720
      %v722 = vpop.f32.mrb[0].mxu0
      %723 = vmatprep.mubr.f32.mxu0 %v430
      %724 = vmatmul.mubr.f32.gmra.mrb[0].mxu0 %v257
      %v725 = vpop.f32.mrb[0].mxu0
      %v726 = vadd.f32 %v306, %v725
      %v727 = vpop.f32.mrb[0].mxu0
      %728 = vmatprep.mubr.f32.mxu0 %v433
      %729 = vmatmul.mubr.f32.gmra.mrb[0].mxu0 %v259
      %v730 = vpop.f32.mrb[0].mxu0
      %v731 = vadd.f32 %v306, %v730
      %v732 = vpop.f32.mrb[0].mxu0
      %733 = vmatprep.mubr.f32.mxu0 %v436
      %734 = vmatmul.mubr.f32.gmra.mrb[0].mxu0 %v261
      %v735 = vpop.f32.mrb[0].mxu0
      %v736 = vadd.f32 %v306, %v735
      %v737 = vpop.f32.mrb[0].mxu0
      %738 = vmatprep.mubr.f32.mxu0 %v439
      %739 = vmatmul.mubr.f32.gmra.mrb[0].mxu0 %v263
      %v740 = vpop.f32.mrb[0].mxu0
      %v741 = vadd.f32 %v306, %v740
      %v742 = vpop.f32.mrb[0].mxu0
      %743 = vmatprep.mubr.f32.mxu0 %v442
      %744 = vmatmul.mubr.f32.gmra.mrb[0].mxu0 %v265
      %v745 = vpop.f32.mrb[0].mxu0
      %v746 = vadd.f32 %v306, %v745
      %v747 = vpop.f32.mrb[0].mxu0
      %748 = vmatprep.mubr.f32.mxu0 %v445
      %749 = vmatmul.mubr.f32.gmra.mrb[0].mxu0 %v267
      %v750 = vpop.f32.mrb[0].mxu0
      %v751 = vadd.f32 %v306, %v750
      %v752 = vpop.f32.mrb[0].mxu0
      %753 = vmatprep.mubr.f32.mxu0 %v448
      %754 = vmatmul.mubr.f32.gmra.mrb[0].mxu0 %v269
      %v755 = vpop.f32.mrb[0].mxu0
      %v756 = vadd.f32 %v306, %v755
      %v757 = vpop.f32.mrb[0].mxu0
      %758 = vmatprep.mubr.f32.mxu0 %v451
      %759 = vmatmul.mubr.f32.gmra.mrb[0].mxu0 %v271
      %v760 = vpop.f32.mrb[0].mxu0
      %v761 = vadd.f32 %v306, %v760
      %v762 = vpop.f32.mrb[0].mxu0
      %763 = vmatprep.mubr.f32.mxu0 %v454
      %764 = vmatmul.mubr.f32.gmra.mrb[0].mxu0 %v273
      %v765 = vpop.f32.mrb[0].mxu0
      %v766 = vadd.f32 %v306, %v765
      %v767 = vpop.f32.mrb[0].mxu0
      %768 = vmatprep.mubr.f32.mxu0 %v457
      %769 = vmatmul.mubr.f32.gmra.mrb[0].mxu0 %v275
      %v770 = vpop.f32.mrb[0].mxu0
      %v771 = vadd.f32 %v306, %v770
      %v772 = vpop.f32.mrb[0].mxu0
      %773 = vdwg.mxu0
      %v774 = vmax.f32 %v526, 0.0
      %v775 = vmax.f32 %v531, 0.0
      %v776 = vmax.f32 %v536, 0.0
      %v777 = vmax.f32 %v541, 0.0
      %v778 = vmax.f32 %v546, 0.0
      %v779 = vmax.f32 %v551, 0.0
      %v780 = vmax.f32 %v556, 0.0
      %v781 = vmax.f32 %v561, 0.0
      %v782 = vmax.f32 %v566, 0.0
      %v783 = vmax.f32 %v571, 0.0
      %v784 = vmax.f32 %v576, 0.0
      %v785 = vmax.f32 %v581, 0.0
      %v786 = vmax.f32 %v586, 0.0
      %v787 = vmax.f32 %v591, 0.0
      %v788 = vmax.f32 %v596, 0.0
      %v789 = vmax.f32 %v601, 0.0
      %v790 = vmax.f32 %v606, 0.0
      %v791 = vmax.f32 %v611, 0.0
      %v792 = vmax.f32 %v616, 0.0
      %v793 = vmax.f32 %v621, 0.0
      %v794 = vmax.f32 %v626, 0.0
      %v795 = vmax.f32 %v631, 0.0
      %v796 = vmax.f32 %v636, 0.0
      %v797 = vmax.f32 %v641, 0.0
      %v798 = vmax.f32 %v646, 0.0
      %v799 = vmax.f32 %v651, 0.0
      %v800 = vmax.f32 %v656, 0.0
      %v801 = vmax.f32 %v661, 0.0
      %v802 = vmax.f32 %v666, 0.0
      %v803 = vmax.f32 %v671, 0.0
      %v804 = vmax.f32 %v676, 0.0
      %v805 = vmax.f32 %v681, 0.0
      %v806 = vmax.f32 %v686, 0.0
      %v807 = vmax.f32 %v691, 0.0
      %v808 = vmax.f32 %v696, 0.0
      %v809 = vmax.f32 %v701, 0.0
      %v810 = vmax.f32 %v706, 0.0
      %v811 = vmax.f32 %v711, 0.0
      %v812 = vmax.f32 %v716, 0.0
      %v813 = vmax.f32 %v721, 0.0
      %v814 = vmax.f32 %v726, 0.0
      %v815 = vmax.f32 %v731, 0.0
      %v816 = vmax.f32 %v736, 0.0
      %v817 = vmax.f32 %v741, 0.0
      %v818 = vmax.f32 %v746, 0.0
      %v819 = vmax.f32 %v751, 0.0
      %v820 = vmax.f32 %v756, 0.0
      %v821 = vmax.f32 %v761, 0.0
      %v822 = vmax.f32 %v766, 0.0
      %v823 = vmax.f32 %v771, 0.0
      %vm824 = vcmask 130048
      %825 = vst.msk [vmem:[%s175] sm:$0xff] %vm824, %v774
      %826 = vst.msk [vmem:[%s175 + $0x8] sm:$0xff] %vm824, %v775
      %827 = vst.msk [vmem:[%s175 + $0x10] sm:$0xff] %vm824, %v776
      %828 = vst.msk [vmem:[%s175 + $0x18] sm:$0xff] %vm824, %v777
      %829 = vst.msk [vmem:[%s175 + $0x20] sm:$0xff] %vm824, %v778
      %830 = vst.msk [vmem:[%s175 + $0x28] sm:$0xff] %vm824, %v779
      %831 = vst.msk [vmem:[%s175 + $0x30] sm:$0xff] %vm824, %v780
      %832 = vst.msk [vmem:[%s175 + $0x38] sm:$0xff] %vm824, %v781
      %833 = vst.msk [vmem:[%s175 + $0x40] sm:$0xff] %vm824, %v782
      %834 = vst.msk [vmem:[%s175 + $0x48] sm:$0xff] %vm824, %v783
      %835 = vst.msk [vmem:[%s175 + $0x50] sm:$0xff] %vm824, %v784
      %836 = vst.msk [vmem:[%s175 + $0x58] sm:$0xff] %vm824, %v785
      %837 = vst.msk [vmem:[%s175 + $0x60] sm:$0xff] %vm824, %v786
      %838 = vst.msk [vmem:[%s175 + $0x68] sm:$0xff] %vm824, %v787
      %839 = vst.msk [vmem:[%s175 + $0x70] sm:$0xff] %vm824, %v788
      %840 = vst.msk [vmem:[%s175 + $0x78] sm:$0xff] %vm824, %v789
      %841 = vst.msk [vmem:[%s175 + $0x80] sm:$0xff] %vm824, %v790
      %842 = vst.msk [vmem:[%s175 + $0x88] sm:$0xff] %vm824, %v791
      %843 = vst.msk [vmem:[%s175 + $0x90] sm:$0xff] %vm824, %v792
      %844 = vst.msk [vmem:[%s175 + $0x98] sm:$0xff] %vm824, %v793
      %845 = vst.msk [vmem:[%s175 + $0xa0] sm:$0xff] %vm824, %v794
      %846 = vst.msk [vmem:[%s175 + $0xa8] sm:$0xff] %vm824, %v795
      %847 = vst.msk [vmem:[%s175 + $0xb0] sm:$0xff] %vm824, %v796
      %848 = vst.msk [vmem:[%s175 + $0xb8] sm:$0xff] %vm824, %v797
      %849 = vst.msk [vmem:[%s175 + $0xc0] sm:$0xff] %vm824, %v798
      %850 = vst.msk [vmem:[%s175 + $0xc8] sm:$0xff] %vm824, %v799
      %851 = vst.msk [vmem:[%s175 + $0xd0] sm:$0xff] %vm824, %v800
      %852 = vst.msk [vmem:[%s175 + $0xd8] sm:$0xff] %vm824, %v801
      %853 = vst.msk [vmem:[%s175 + $0xe0] sm:$0xff] %vm824, %v802
      %854 = vst.msk [vmem:[%s175 + $0xe8] sm:$0xff] %vm824, %v803
      %855 = vst.msk [vmem:[%s175 + $0xf0] sm:$0xff] %vm824, %v804
      %856 = vst.msk [vmem:[%s175 + $0xf8] sm:$0xff] %vm824, %v805
      %857 = vst.msk [vmem:[%s175 + $0x100] sm:$0xff] %vm824, %v806
      %858 = vst.msk [vmem:[%s175 + $0x108] sm:$0xff] %vm824, %v807
      %859 = vst.msk [vmem:[%s175 + $0x110] sm:$0xff] %vm824, %v808
      %860 = vst.msk [vmem:[%s175 + $0x118] sm:$0xff] %vm824, %v809
      %861 = vst.msk [vmem:[%s175 + $0x120] sm:$0xff] %vm824, %v810
      %862 = vst.msk [vmem:[%s175 + $0x128] sm:$0xff] %vm824, %v811
      %863 = vst.msk [vmem:[%s175 + $0x130] sm:$0xff] %vm824, %v812
      %864 = vst.msk [vmem:[%s175 + $0x138] sm:$0xff] %vm824, %v813
      %865 = vst.msk [vmem:[%s175 + $0x140] sm:$0xff] %vm824, %v814
      %866 = vst.msk [vmem:[%s175 + $0x148] sm:$0xff] %vm824, %v815
      %867 = vst.msk [vmem:[%s175 + $0x150] sm:$0xff] %vm824, %v816
      %868 = vst.msk [vmem:[%s175 + $0x158] sm:$0xff] %vm824, %v817
      %869 = vst.msk [vmem:[%s175 + $0x160] sm:$0xff] %vm824, %v818
      %870 = vst.msk [vmem:[%s175 + $0x168] sm:$0xff] %vm824, %v819
      %871 = vst.msk [vmem:[%s175 + $0x170] sm:$0xff] %vm824, %v820
      %872 = vst.msk [vmem:[%s175 + $0x178] sm:$0xff] %vm824, %v821
      %873 = vst.msk [vmem:[%s175 + $0x180] sm:$0xff] %vm824, %v822
      %874 = vst.msk [vmem:[%s175 + $0x188] sm:$0xff] %vm824, %v823
      %s875 = smul.u32 50, %s14
      %p876 = scmp.lt.s32.totalorder %s875, 99
      %s877 = scalar_select %p876, %s875, 99
      %s878 = smul.addr %s877, 8
      %s879 = scalar_lea.vmem %s3, %s878
      // Predicated region
      $region33: #{image_cnn_forward.3} parent=31 // pred_check
        %p880 = pneg %p100
      $region34: #{image_cnn_forward.3} parent=31 // pred_check_branch
        %882 = sbr.rel (%p880) target = $region36
      $region35: #{image_cnn_forward.3} parent=31 // pred_region
        %s883 = smul.u32 50, %s14
      $region36: #{image_cnn_forward.3} parent=31 // pred_fallthru
        _
    $region32: #{image_cnn_forward.3} parent=5 // pred_fallthru
      _
    %p884 = scmp.le.s32.totalorder 2, %s9
    // Predicated region
    $region37: #{image_cnn_forward.3} parent=5 // pred_check
      %p885 = pneg %p884
    $region38: #{image_cnn_forward.3} parent=5 // pred_check_branch
      %887 = sbr.rel (%p885) target = $region40
    $region39: #{image_cnn_forward.3} parent=5 // pred_region
      %s888 = ssub.s32 %s9, 2
      // Predicated region
      $region41: #{image_cnn_forward.3} parent=39 // pred_check
        %p889 = pneg %p106
      $region42: #{image_cnn_forward.3} parent=39 // pred_check_branch
        %891 = sbr.rel (%p889) target = $region44
      $region43: #{image_cnn_forward.3} parent=39 // pred_region
        %s892 = smul.u32 50, %s15
        %p893 = scmp.lt.s32.totalorder %s892, 99
        %s894 = scalar_select %p893, %s892, 99
        %s895 = smul.addr %s894, 8
        %s896 = scalar_lea.vmem %s3, %s895
      $region44: #{image_cnn_forward.3} parent=39 // pred_fallthru
        _
    $region40: #{image_cnn_forward.3} parent=5 // pred_fallthru
      _
  $region6: #{image_cnn_forward.3} parent=0 // loop_footer
    %s13 = sadd.s32 1, %s9
  $region7: #{image_cnn_forward.3} parent=0 // loop_footer_branch
    %8 = sbr.rel target = $region3
  $region8: #{image_cnn_forward.3} parent=0 // loop_exit
    _

// kernel: image_cnn_forward.4
$region0: #{image_cnn_forward.4}
  #allocation0 [shape = 'u32[]', space=smem, size = 0x4, offset = 0x4, fixed_abs, tag = 'smem constant byte address 0x4 - core index']
  #allocation1 [shape = 'u32[144,128]{1,0:T(1,128)}', space=vmem, size = 0x12000, scoped, tag = 'internal scratch']
  %s0 = inlined_call_operand.vmem [shape: f32[162,256], index: 0, kind: input, shape index: {}]
  %s1 = inlined_call_operand.vmem [shape: f32[256,32], index: 1, kind: input, shape index: {}]
  %s2 = inlined_call_operand.vmem [shape: f32[1,32], index: 2, kind: input, shape index: {}]
  %s3 = inlined_call_operand.vmem [shape: f32[162,32], index: 3, kind: output, shape index: {}]
  %s4 = sld [smem:[#allocation0]]
  $region22: #{image_cnn_forward.4} parent=0
    _
  %s6 = ssub.s32 1, %s4
  %s7 = scalar_select 0, %s6, %s4
  // Predicated region
  $region2: #{image_cnn_forward.4} parent=0 // pred_check
    _
  $region3: #{image_cnn_forward.4} parent=0 // pred_check_branch
    %9 = sbr.rel (0) target = $region5
  $region4: #{image_cnn_forward.4} parent=0 // pred_region
    _
  $region5: #{image_cnn_forward.4} parent=0 // pred_fallthru
    _
  // Predicated region
  $region6: #{image_cnn_forward.4} parent=0 // pred_check
    _
  $region7: #{image_cnn_forward.4} parent=0 // pred_check_branch
    %11 = sbr.rel (0) target = $region9
  $region8: #{image_cnn_forward.4} parent=0 // pred_region
    _
  $region9: #{image_cnn_forward.4} parent=0 // pred_fallthru
    _
  // Predicated region
  $region10: #{image_cnn_forward.4} parent=0 // pred_check
    _
  $region11: #{image_cnn_forward.4} parent=0 // pred_check_branch
    %13 = sbr.rel (0) target = $region13
  $region12: #{image_cnn_forward.4} parent=0 // pred_region
    _
  $region13: #{image_cnn_forward.4} parent=0 // pred_fallthru
    _
  %v14 = vld [vmem:[%s0] sm:$0xff]
  %v15 = vld [vmem:[%s0 + $0x8] sm:$0xff]
  %v16 = vld [vmem:[%s0 + $0x10] sm:$0xff]
  %v17 = vld [vmem:[%s0 + $0x18] sm:$0xff]
  %v18 = vld [vmem:[%s0 + $0x20] sm:$0xff]
  %v19 = vld [vmem:[%s0 + $0x28] sm:$0xff]
  %v20 = vld [vmem:[%s0 + $0x30] sm:$0xff]
  %v21 = vld [vmem:[%s0 + $0x38] sm:$0xff]
  %v22 = vld [vmem:[%s0 + $0x40] sm:$0xff]
  %v23 = vld [vmem:[%s0 + $0x48] sm:$0xff]
  %v24 = vld [vmem:[%s0 + $0x50] sm:$0xff]
  %v25 = vld [vmem:[%s0 + $0x58] sm:$0xff]
  %v26 = vld [vmem:[%s0 + $0x60] sm:$0xff]
  %v27 = vld [vmem:[%s0 + $0x68] sm:$0xff]
  %v28 = vld [vmem:[%s0 + $0x70] sm:$0xff]
  %v29 = vld [vmem:[%s0 + $0x78] sm:$0xff]
  %v30 = vld [vmem:[%s0 + $0x80] sm:$0xff]
  %v31 = vld [vmem:[%s0 + $0x88] sm:$0xff]
  %v32 = vld [vmem:[%s0 + $0x90] sm:$0xff]
  %v33 = vld [vmem:[%s0 + $0x98] sm:$0xff]
  %v34 = vld [vmem:[%s0 + $0xa0] sm:$0xff]
  %v35 = vld [vmem:[%s0 + $0xa8] sm:$0xff]
  %v36 = vld [vmem:[%s0 + $0xb0] sm:$0xff]
  %v37 = vld [vmem:[%s0 + $0xb8] sm:$0xff]
  %v38 = vld [vmem:[%s0 + $0xc0] sm:$0xff]
  %v39 = vld [vmem:[%s0 + $0xc8] sm:$0xff]
  %v40 = vld [vmem:[%s0 + $0xd0] sm:$0xff]
  %v41 = vld [vmem:[%s0 + $0xd8] sm:$0xff]
  %v42 = vld [vmem:[%s0 + $0xe0] sm:$0xff]
  %v43 = vld [vmem:[%s0 + $0xe8] sm:$0xff]
  %v44 = vld [vmem:[%s0 + $0xf0] sm:$0xff]
  %v45 = vld [vmem:[%s0 + $0xf8] sm:$0xff]
  %v46 = vld [vmem:[%s0 + $0x100] sm:$0xff]
  %v47 = vld [vmem:[%s0 + $0x108] sm:$0xff]
  %v48 = vld [vmem:[%s0 + $0x110] sm:$0xff]
  %v49 = vld [vmem:[%s0 + $0x118] sm:$0xff]
  %v50 = vld [vmem:[%s0 + $0x120] sm:$0xff]
  %v51 = vld [vmem:[%s0 + $0x128] sm:$0xff]
  %v52 = vld [vmem:[%s0 + $0x130] sm:$0xff]
  %v53 = vld [vmem:[%s0 + $0x138] sm:$0xff]
  %v54 = vld [vmem:[%s0 + $0x140] sm:$0x3]
  %v55 = vld [vmem:[%s0 + $0x148] sm:$0x3]
  %v56 = vld [vmem:[%s1] sm:$0xff]
  %v57 = vld [vmem:[%s1 + $0x8] sm:$0xff]
  %v58 = vld [vmem:[%s1 + $0x10] sm:$0xff]
  %v59 = vld [vmem:[%s1 + $0x18] sm:$0xff]
  %v60 = vld [vmem:[%s1 + $0x20] sm:$0xff]
  %v61 = vld [vmem:[%s1 + $0x28] sm:$0xff]
  %v62 = vld [vmem:[%s1 + $0x30] sm:$0xff]
  %v63 = vld [vmem:[%s1 + $0x38] sm:$0xff]
  %v64 = vld [vmem:[%s1 + $0x40] sm:$0xff]
  %v65 = vld [vmem:[%s1 + $0x48] sm:$0xff]
  %v66 = vld [vmem:[%s1 + $0x50] sm:$0xff]
  %v67 = vld [vmem:[%s1 + $0x58] sm:$0xff]
  %v68 = vld [vmem:[%s1 + $0x60] sm:$0xff]
  %v69 = vld [vmem:[%s1 + $0x68] sm:$0xff]
  %v70 = vld [vmem:[%s1 + $0x70] sm:$0xff]
  %v71 = vld [vmem:[%s1 + $0x78] sm:$0xff]
  %v72 = vld [vmem:[%s1 + $0x80] sm:$0xff]
  %v73 = vld [vmem:[%s1 + $0x88] sm:$0xff]
  %v74 = vld [vmem:[%s1 + $0x90] sm:$0xff]
  %v75 = vld [vmem:[%s1 + $0x98] sm:$0xff]
  %v76 = vld [vmem:[%s1 + $0xa0] sm:$0xff]
  %v77 = vld [vmem:[%s1 + $0xa8] sm:$0xff]
  %v78 = vld [vmem:[%s1 + $0xb0] sm:$0xff]
  %v79 = vld [vmem:[%s1 + $0xb8] sm:$0xff]
  %v80 = vld [vmem:[%s1 + $0xc0] sm:$0xff]
  %v81 = vld [vmem:[%s1 + $0xc8] sm:$0xff]
  %v82 = vld [vmem:[%s1 + $0xd0] sm:$0xff]
  %v83 = vld [vmem:[%s1 + $0xd8] sm:$0xff]
  %v84 = vld [vmem:[%s1 + $0xe0] sm:$0xff]
  %v85 = vld [vmem:[%s1 + $0xe8] sm:$0xff]
  %v86 = vld [vmem:[%s1 + $0xf0] sm:$0xff]
  %v87 = vld [vmem:[%s1 + $0xf8] sm:$0xff]
  %v88 = vld [vmem:[%s2] sm:$0x1]
  %v90 = vlaneseq
  %v91 = vshrl.u32 %v90, 7
  %v92 = vsub.s32 0, %v91
  %v93 = vrot.slane %v88, %v92
  %95 = vmatprep.subr.mxu0 0.0
  %96 = vmatpush1.msra.mxu0 %v56
  %97 = vmatprep.subr.mxu0 0.0
  %98 = vmatpush1.msra.mxu0 %v57
  %99 = vmatprep.subr.mxu0 0.0
  %100 = vmatpush1.msra.mxu0 %v58
  %101 = vmatprep.subr.mxu0 0.0
  %102 = vmatpush1.msra.mxu0 %v59
  %103 = vmatprep.subr.mxu0 0.0
  %104 = vmatpush1.msra.mxu0 %v60
  %105 = vmatprep.subr.mxu0 0.0
  %106 = vmatpush1.msra.mxu0 %v61
  %107 = vmatprep.subr.mxu0 0.0
  %108 = vmatpush1.msra.mxu0 %v62
  %109 = vmatprep.subr.mxu0 0.0
  %110 = vmatpush1.msra.mxu0 %v63
  %111 = vmatprep.subr.mxu0 0.0
  %112 = vmatpush1.msra.mxu0 %v64
  %113 = vmatprep.subr.mxu0 0.0
  %114 = vmatpush1.msra.mxu0 %v65
  %115 = vmatprep.subr.mxu0 0.0
  %116 = vmatpush1.msra.mxu0 %v66
  %117 = vmatprep.subr.mxu0 0.0
  %118 = vmatpush1.msra.mxu0 %v67
  %119 = vmatprep.subr.mxu0 0.0
  %120 = vmatpush1.msra.mxu0 %v68
  %121 = vmatprep.subr.mxu0 0.0
  %122 = vmatpush1.msra.mxu0 %v69
  %123 = vmatprep.subr.mxu0 0.0
  %124 = vmatpush1.msra.mxu0 %v70
  %125 = vmatprep.subr.mxu0 0.0
  %126 = vmatpush1.msra.mxu0 %v71
  %127 = vmatprep.subr.mxu0 0.0
  %128 = vmatpush1.msra.mxu0 %v72
  %129 = vmatprep.subr.mxu0 0.0
  %130 = vmatpush1.msra.mxu0 %v73
  %131 = vmatprep.subr.mxu0 0.0
  %132 = vmatpush1.msra.mxu0 %v74
  %133 = vmatprep.subr.mxu0 0.0
  %134 = vmatpush1.msra.mxu0 %v75
  %135 = vmatprep.subr.mxu0 0.0
  %136 = vmatpush1.msra.mxu0 %v76
  %137 = vmatprep.subr.mxu0 0.0
  %138 = vmatpush1.msra.mxu0 %v77
  %139 = vmatprep.subr.mxu0 0.0
  %140 = vmatpush1.msra.mxu0 %v78
  %141 = vmatprep.subr.mxu0 0.0
  %142 = vmatpush1.msra.mxu0 %v79
  %143 = vmatprep.subr.mxu0 0.0
  %144 = vmatpush1.msra.mxu0 %v80
  %145 = vmatprep.subr.mxu0 0.0
  %146 = vmatpush1.msra.mxu0 %v81
  %147 = vmatprep.subr.mxu0 0.0
  %148 = vmatpush1.msra.mxu0 %v82
  %149 = vmatprep.subr.mxu0 0.0
  %150 = vmatpush1.msra.mxu0 %v83
  %151 = vmatprep.subr.mxu0 0.0
  %152 = vmatpush1.msra.mxu0 %v84
  %153 = vmatprep.subr.mxu0 0.0
  %154 = vmatpush1.msra.mxu0 %v85
  %155 = vmatprep.subr.mxu0 0.0
  %156 = vmatpush1.msra.mxu0 %v86
  %157 = vmatprep.subr.mxu0 0.0
  %158 = vmatpush1.msra.mxu0 %v87
  %159 = vmatprep.mubr.f32.mxu0 %v15
  %160 = vmatmul.mubr.f32.gmra.mrb[0].mxu0 %v14
  %v161 = vpop.f32.mrb[0].mxu0
  %v162 = vadd.f32 %v93, %v161
  %v163 = vpop.f32.mrb[0].mxu0
  %164 = vmatprep.mubr.f32.mxu0 %v17
  %165 = vmatmul.mubr.f32.gmra.mrb[0].mxu0 %v16
  %v166 = vpop.f32.mrb[0].mxu0
  %v167 = vadd.f32 %v93, %v166
  %v168 = vpop.f32.mrb[0].mxu0
  %169 = vmatprep.mubr.f32.mxu0 %v19
  %170 = vmatmul.mubr.f32.gmra.mrb[0].mxu0 %v18
  %v171 = vpop.f32.mrb[0].mxu0
  %v172 = vadd.f32 %v93, %v171
  %v173 = vpop.f32.mrb[0].mxu0
  %174 = vmatprep.mubr.f32.mxu0 %v21
  %175 = vmatmul.mubr.f32.gmra.mrb[0].mxu0 %v20
  %v176 = vpop.f32.mrb[0].mxu0
  %v177 = vadd.f32 %v93, %v176
  %v178 = vpop.f32.mrb[0].mxu0
  %179 = vmatprep.mubr.f32.mxu0 %v23
  %180 = vmatmul.mubr.f32.gmra.mrb[0].mxu0 %v22
  %v181 = vpop.f32.mrb[0].mxu0
  %v182 = vadd.f32 %v93, %v181
  %v183 = vpop.f32.mrb[0].mxu0
  %184 = vmatprep.mubr.f32.mxu0 %v25
  %185 = vmatmul.mubr.f32.gmra.mrb[0].mxu0 %v24
  %v186 = vpop.f32.mrb[0].mxu0
  %v187 = vadd.f32 %v93, %v186
  %v188 = vpop.f32.mrb[0].mxu0
  %189 = vmatprep.mubr.f32.mxu0 %v27
  %190 = vmatmul.mubr.f32.gmra.mrb[0].mxu0 %v26
  %v191 = vpop.f32.mrb[0].mxu0
  %v192 = vadd.f32 %v93, %v191
  %v193 = vpop.f32.mrb[0].mxu0
  %194 = vmatprep.mubr.f32.mxu0 %v29
  %195 = vmatmul.mubr.f32.gmra.mrb[0].mxu0 %v28
  %v196 = vpop.f32.mrb[0].mxu0
  %v197 = vadd.f32 %v93, %v196
  %v198 = vpop.f32.mrb[0].mxu0
  %199 = vmatprep.mubr.f32.mxu0 %v31
  %200 = vmatmul.mubr.f32.gmra.mrb[0].mxu0 %v30
  %v201 = vpop.f32.mrb[0].mxu0
  %v202 = vadd.f32 %v93, %v201
  %v203 = vpop.f32.mrb[0].mxu0
  %204 = vmatprep.mubr.f32.mxu0 %v33
  %205 = vmatmul.mubr.f32.gmra.mrb[0].mxu0 %v32
  %v206 = vpop.f32.mrb[0].mxu0
  %v207 = vadd.f32 %v93, %v206
  %v208 = vpop.f32.mrb[0].mxu0
  %209 = vmatprep.mubr.f32.mxu0 %v35
  %210 = vmatmul.mubr.f32.gmra.mrb[0].mxu0 %v34
  %v211 = vpop.f32.mrb[0].mxu0
  %v212 = vadd.f32 %v93, %v211
  %v213 = vpop.f32.mrb[0].mxu0
  %214 = vmatprep.mubr.f32.mxu0 %v37
  %215 = vmatmul.mubr.f32.gmra.mrb[0].mxu0 %v36
  %v216 = vpop.f32.mrb[0].mxu0
  %v217 = vadd.f32 %v93, %v216
  %v218 = vpop.f32.mrb[0].mxu0
  %219 = vmatprep.mubr.f32.mxu0 %v39
  %220 = vmatmul.mubr.f32.gmra.mrb[0].mxu0 %v38
  %v221 = vpop.f32.mrb[0].mxu0
  %v222 = vadd.f32 %v93, %v221
  %v223 = vpop.f32.mrb[0].mxu0
  %224 = vmatprep.mubr.f32.mxu0 %v41
  %225 = vmatmul.mubr.f32.gmra.mrb[0].mxu0 %v40
  %v226 = vpop.f32.mrb[0].mxu0
  %v227 = vadd.f32 %v93, %v226
  %v228 = vpop.f32.mrb[0].mxu0
  %229 = vmatprep.mubr.f32.mxu0 %v43
  %230 = vmatmul.mubr.f32.gmra.mrb[0].mxu0 %v42
  %v231 = vpop.f32.mrb[0].mxu0
  %v232 = vadd.f32 %v93, %v231
  %v233 = vpop.f32.mrb[0].mxu0
  %234 = vmatprep.mubr.f32.mxu0 %v45
  %235 = vmatmul.mubr.f32.gmra.mrb[0].mxu0 %v44
  %v236 = vpop.f32.mrb[0].mxu0
  %v237 = vadd.f32 %v93, %v236
  %v238 = vpop.f32.mrb[0].mxu0
  %239 = vmatprep.mubr.f32.mxu0 %v47
  %240 = vmatmul.mubr.f32.gmra.mrb[0].mxu0 %v46
  %v241 = vpop.f32.mrb[0].mxu0
  %v242 = vadd.f32 %v93, %v241
  %v243 = vpop.f32.mrb[0].mxu0
  %244 = vmatprep.mubr.f32.mxu0 %v49
  %245 = vmatmul.mubr.f32.gmra.mrb[0].mxu0 %v48
  %v246 = vpop.f32.mrb[0].mxu0
  %v247 = vadd.f32 %v93, %v246
  %v248 = vpop.f32.mrb[0].mxu0
  %249 = vmatprep.mubr.f32.mxu0 %v51
  %250 = vmatmul.mubr.f32.gmra.mrb[0].mxu0 %v50
  %v251 = vpop.f32.mrb[0].mxu0
  %v252 = vadd.f32 %v93, %v251
  %v253 = vpop.f32.mrb[0].mxu0
  %254 = vmatprep.mubr.f32.mxu0 %v53
  %255 = vmatmul.mubr.f32.gmra.mrb[0].mxu0 %v52
  %v256 = vpop.f32.mrb[0].mxu0
  %v257 = vadd.f32 %v93, %v256
  %v258 = vpop.f32.mrb[0].mxu0
  %259 = vmatprep.mubr.f32.mxu0 %v55
  %260 = vmatmul.mubr.f32.gmra.mrb[0].mxu0 %v54
  %v261 = vpop.f32.mrb[0].mxu0
  %v262 = vadd.f32 %v93, %v261
  %v263 = vpop.f32.mrb[0].mxu0
  %264 = vdwg.mxu0
  %v265 = vmax.f32 %v162, 0.0
  %v266 = vmax.f32 %v167, 0.0
  %v267 = vmax.f32 %v172, 0.0
  %v268 = vmax.f32 %v177, 0.0
  %v269 = vmax.f32 %v182, 0.0
  %v270 = vmax.f32 %v187, 0.0
  %v271 = vmax.f32 %v192, 0.0
  %v272 = vmax.f32 %v197, 0.0
  %v273 = vmax.f32 %v202, 0.0
  %v274 = vmax.f32 %v207, 0.0
  %v275 = vmax.f32 %v212, 0.0
  %v276 = vmax.f32 %v217, 0.0
  %v277 = vmax.f32 %v222, 0.0
  %v278 = vmax.f32 %v227, 0.0
  %v279 = vmax.f32 %v232, 0.0
  %v280 = vmax.f32 %v237, 0.0
  %v281 = vmax.f32 %v242, 0.0
  %v282 = vmax.f32 %v247, 0.0
  %v283 = vmax.f32 %v252, 0.0
  %v284 = vmax.f32 %v257, 0.0
  %v285 = vmax.f32 %v262, 0.0
  %vm286 = vcmask 261120
  %287 = vst.msk [vmem:[%s3] sm:$0xff] %vm286, %v265
  %288 = vst.msk [vmem:[%s3 + $0x8] sm:$0xff] %vm286, %v266
  %289 = vst.msk [vmem:[%s3 + $0x10] sm:$0xff] %vm286, %v267
  %290 = vst.msk [vmem:[%s3 + $0x18] sm:$0xff] %vm286, %v268
  %291 = vst.msk [vmem:[%s3 + $0x20] sm:$0xff] %vm286, %v269
  %292 = vst.msk [vmem:[%s3 + $0x28] sm:$0xff] %vm286, %v270
  %293 = vst.msk [vmem:[%s3 + $0x30] sm:$0xff] %vm286, %v271
  %294 = vst.msk [vmem:[%s3 + $0x38] sm:$0xff] %vm286, %v272
  %295 = vst.msk [vmem:[%s3 + $0x40] sm:$0xff] %vm286, %v273
  %296 = vst.msk [vmem:[%s3 + $0x48] sm:$0xff] %vm286, %v274
  %297 = vst.msk [vmem:[%s3 + $0x50] sm:$0xff] %vm286, %v275
  %298 = vst.msk [vmem:[%s3 + $0x58] sm:$0xff] %vm286, %v276
  %299 = vst.msk [vmem:[%s3 + $0x60] sm:$0xff] %vm286, %v277
  %300 = vst.msk [vmem:[%s3 + $0x68] sm:$0xff] %vm286, %v278
  %301 = vst.msk [vmem:[%s3 + $0x70] sm:$0xff] %vm286, %v279
  %302 = vst.msk [vmem:[%s3 + $0x78] sm:$0xff] %vm286, %v280
  %303 = vst.msk [vmem:[%s3 + $0x80] sm:$0xff] %vm286, %v281
  %304 = vst.msk [vmem:[%s3 + $0x88] sm:$0xff] %vm286, %v282
  %305 = vst.msk [vmem:[%s3 + $0x90] sm:$0xff] %vm286, %v283
  %306 = vst.msk [vmem:[%s3 + $0x98] sm:$0xff] %vm286, %v284
  %vm307 = vcmask 254976
  %308 = vst.msk [vmem:[%s3 + $0xa0] sm:$0x3] %vm307, %v285
  // Predicated region
  $region14: #{image_cnn_forward.4} parent=0 // pred_check
    _
  $region15: #{image_cnn_forward.4} parent=0 // pred_check_branch
    %310 = sbr.rel (0) target = $region17
  $region16: #{image_cnn_forward.4} parent=0 // pred_region
    _
  $region17: #{image_cnn_forward.4} parent=0 // pred_fallthru
    _
  // Predicated region
  $region18: #{image_cnn_forward.4} parent=0 // pred_check
    _
  $region19: #{image_cnn_forward.4} parent=0 // pred_check_branch
    %312 = sbr.rel (0) target = $region21
  $region20: #{image_cnn_forward.4} parent=0 // pred_region
    _
  $region21: #{image_cnn_forward.4} parent=0 // pred_fallthru
    _

// kernel: image_cnn_forward.5
$region0: #{image_cnn_forward.5}
  #allocation0 [shape = 'u32[]', space=smem, size = 0x4, offset = 0x4, fixed_abs, tag = 'smem constant byte address 0x4 - core index']
  #allocation1 [shape = 'u32[144,128]{1,0:T(1,128)}', space=vmem, size = 0x12000, scoped, tag = 'internal scratch']
  #allocation2 [shape = 'f32[1,1]{1,0:T(1,128)S(1)}', space=vmem, size = 0x200, scoped, tag = 'scoped memory for image_cnn_forward.5']
  %s0 = inlined_call_operand.vmem [shape: f32[2,2592], index: 0, kind: input, shape index: {}]
  %s1 = inlined_call_operand.vmem [shape: f32[2592,256], index: 1, kind: input, shape index: {}]
  %s2 = inlined_call_operand.vmem [shape: f32[1,256], index: 2, kind: input, shape index: {}]
  %s3 = inlined_call_operand.vmem [shape: f32[256,128], index: 3, kind: input, shape index: {}]
  %s4 = inlined_call_operand.vmem [shape: f32[1,128], index: 4, kind: input, shape index: {}]
  %s5 = inlined_call_operand.vmem [shape: f32[128,1], index: 5, kind: input, shape index: {}]
  %s6 = inlined_call_operand.<no memory space> [shape: f32[1,1], index: 6, kind: input, shape index: {}]
  %s7 = inlined_call_operand.vmem [shape: f32[2,1], index: 7, kind: output, shape index: {}]
  %s8 = sld [smem:[#allocation0]]
  $region38: #{image_cnn_forward.5} parent=0
    _
  %s10 = ssub.s32 1, %s8
  %s11 = scalar_select 0, %s10, %s8
  %v12 = vstv %s6
  %13 = vst [vmem:[#allocation2] sm:$0x1] %v12
  // Predicated region
  $region2: #{image_cnn_forward.5} parent=0 // pred_check
    _
  $region3: #{image_cnn_forward.5} parent=0 // pred_check_branch
    %15 = sbr.rel (0) target = $region5
  $region4: #{image_cnn_forward.5} parent=0 // pred_region
    _
  $region5: #{image_cnn_forward.5} parent=0 // pred_fallthru
    _
  // Predicated region
  $region6: #{image_cnn_forward.5} parent=0 // pred_check
    _
  $region7: #{image_cnn_forward.5} parent=0 // pred_check_branch
    %17 = sbr.rel (0) target = $region9
  $region8: #{image_cnn_forward.5} parent=0 // pred_region
    _
  $region9: #{image_cnn_forward.5} parent=0 // pred_fallthru
    _
  // Predicated region
  $region10: #{image_cnn_forward.5} parent=0 // pred_check
    _
  $region11: #{image_cnn_forward.5} parent=0 // pred_check_branch
    %19 = sbr.rel (0) target = $region13
  $region12: #{image_cnn_forward.5} parent=0 // pred_region
    _
  $region13: #{image_cnn_forward.5} parent=0 // pred_fallthru
    _
  // Predicated region
  $region14: #{image_cnn_forward.5} parent=0 // pred_check
    _
  $region15: #{image_cnn_forward.5} parent=0 // pred_check_branch
    %21 = sbr.rel (0) target = $region17
  $region16: #{image_cnn_forward.5} parent=0 // pred_region
    _
  $region17: #{image_cnn_forward.5} parent=0 // pred_fallthru
    _
  // Predicated region
  $region18: #{image_cnn_forward.5} parent=0 // pred_check
    _
  $region19: #{image_cnn_forward.5} parent=0 // pred_check_branch
    %23 = sbr.rel (0) target = $region21
  $region20: #{image_cnn_forward.5} parent=0 // pred_region
    _
  $region21: #{image_cnn_forward.5} parent=0 // pred_fallthru
    _
  // Predicated region
  $region22: #{image_cnn_forward.5} parent=0 // pred_check
    _
  $region23: #{image_cnn_forward.5} parent=0 // pred_check_branch
    %25 = sbr.rel (0) target = $region25
  $region24: #{image_cnn_forward.5} parent=0 // pred_region
    _
  $region25: #{image_cnn_forward.5} parent=0 // pred_fallthru
    _
  // Predicated region
  $region26: #{image_cnn_forward.5} parent=0 // pred_check
    _
  $region27: #{image_cnn_forward.5} parent=0 // pred_check_branch
    %27 = sbr.rel (0) target = $region29
  $region28: #{image_cnn_forward.5} parent=0 // pred_region
    _
  $region29: #{image_cnn_forward.5} parent=0 // pred_fallthru
    _
  %v28 = vld [vmem:[%s0] sm:$0xff]
  %v29 = vld [vmem:[%s0 + $0x8] sm:$0xff]
  %v30 = vld [vmem:[%s0 + $0x10] sm:$0xff]
  %v31 = vld [vmem:[%s0 + $0x18] sm:$0xff]
  %v32 = vld [vmem:[%s0 + $0x20] sm:$0xff]
  %v33 = vld [vmem:[%s0 + $0x28] sm:$0x3]
  %v34 = vld [vmem:[%s1] sm:$0xff]
  %v35 = vld [vmem:[%s1 + $0x8] sm:$0xff]
  %v36 = vld [vmem:[%s1 + $0x10] sm:$0xff]
  %v37 = vld [vmem:[%s1 + $0x18] sm:$0xff]
  %v38 = vld [vmem:[%s1 + $0x20] sm:$0xff]
  %v39 = vld [vmem:[%s1 + $0x28] sm:$0xff]
  %v40 = vld [vmem:[%s1 + $0x30] sm:$0xff]
  %v41 = vld [vmem:[%s1 + $0x38] sm:$0xff]
  %v42 = vld [vmem:[%s1 + $0x40] sm:$0xff]
  %v43 = vld [vmem:[%s1 + $0x48] sm:$0xff]
  %v44 = vld [vmem:[%s1 + $0x50] sm:$0xff]
  %v45 = vld [vmem:[%s1 + $0x58] sm:$0xff]
  %v46 = vld [vmem:[%s1 + $0x60] sm:$0xff]
  %v47 = vld [vmem:[%s1 + $0x68] sm:$0xff]
  %v48 = vld [vmem:[%s1 + $0x70] sm:$0xff]
  %v49 = vld [vmem:[%s1 + $0x78] sm:$0xff]
  %v50 = vld [vmem:[%s1 + $0x80] sm:$0xff]
  %v51 = vld [vmem:[%s1 + $0x88] sm:$0xff]
  %v52 = vld [vmem:[%s1 + $0x90] sm:$0xff]
  %v53 = vld [vmem:[%s1 + $0x98] sm:$0xff]
  %v54 = vld [vmem:[%s1 + $0xa0] sm:$0xff]
  %v55 = vld [vmem:[%s1 + $0xa8] sm:$0xff]
  %v56 = vld [vmem:[%s1 + $0xb0] sm:$0xff]
  %v57 = vld [vmem:[%s1 + $0xb8] sm:$0xff]
  %v58 = vld [vmem:[%s1 + $0xc0] sm:$0xff]
  %v59 = vld [vmem:[%s1 + $0xc8] sm:$0xff]
  %v60 = vld [vmem:[%s1 + $0xd0] sm:$0xff]
  %v61 = vld [vmem:[%s1 + $0xd8] sm:$0xff]
  %v62 = vld [vmem:[%s1 + $0xe0] sm:$0xff]
  %v63 = vld [vmem:[%s1 + $0xe8] sm:$0xff]
  %v64 = vld [vmem:[%s1 + $0xf0] sm:$0xff]
  %v65 = vld [vmem:[%s1 + $0xf8] sm:$0xff]
  %v66 = vld [vmem:[%s1 + $0x100] sm:$0xff]
  %v67 = vld [vmem:[%s1 + $0x108] sm:$0xff]
  %v68 = vld [vmem:[%s1 + $0x110] sm:$0xff]
  %v69 = vld [vmem:[%s1 + $0x118] sm:$0xff]
  %v70 = vld [vmem:[%s1 + $0x120] sm:$0xff]
  %v71 = vld [vmem:[%s1 + $0x128] sm:$0xff]
  %v72 = vld [vmem:[%s1 + $0x130] sm:$0xff]
  %v73 = vld [vmem:[%s1 + $0x138] sm:$0xff]
  %v74 = vld [vmem:[%s1 + $0x140] sm:$0xff]
  %v75 = vld [vmem:[%s1 + $0x148] sm:$0xff]
  %v76 = vld [vmem:[%s1 + $0x150] sm:$0xff]
  %v77 = vld [vmem:[%s1 + $0x158] sm:$0xff]
  %v78 = vld [vmem:[%s1 + $0x160] sm:$0xff]
  %v79 = vld [vmem:[%s1 + $0x168] sm:$0xff]
  %v80 = vld [vmem:[%s1 + $0x170] sm:$0xff]
  %v81 = vld [vmem:[%s1 + $0x178] sm:$0xff]
  %v82 = vld [vmem:[%s1 + $0x180] sm:$0xff]
  %v83 = vld [vmem:[%s1 + $0x188] sm:$0xff]
  %v84 = vld [vmem:[%s1 + $0x190] sm:$0xff]
  %v85 = vld [vmem:[%s1 + $0x198] sm:$0xff]
  %v86 = vld [vmem:[%s1 + $0x1a0] sm:$0xff]
  %v87 = vld [vmem:[%s1 + $0x1a8] sm:$0xff]
  %v88 = vld [vmem:[%s1 + $0x1b0] sm:$0xff]
  %v89 = vld [vmem:[%s1 + $0x1b8] sm:$0xff]
  %v90 = vld [vmem:[%s1 + $0x1c0] sm:$0xff]
  %v91 = vld [vmem:[%s1 + $0x1c8] sm:$0xff]
  %v92 = vld [vmem:[%s1 + $0x1d0] sm:$0xff]
  %v93 = vld [vmem:[%s1 + $0x1d8] sm:$0xff]
  %v94 = vld [vmem:[%s1 + $0x1e0] sm:$0xff]
  %v95 = vld [vmem:[%s1 + $0x1e8] sm:$0xff]
  %v96 = vld [vmem:[%s1 + $0x1f0] sm:$0xff]
  %v97 = vld [vmem:[%s1 + $0x1f8] sm:$0xff]
  %v98 = vld [vmem:[%s1 + $0x200] sm:$0xff]
  %v99 = vld [vmem:[%s1 + $0x208] sm:$0xff]
  %v100 = vld [vmem:[%s1 + $0x210] sm:$0xff]
  %v101 = vld [vmem:[%s1 + $0x218] sm:$0xff]
  %v102 = vld [vmem:[%s1 + $0x220] sm:$0xff]
  %v103 = vld [vmem:[%s1 + $0x228] sm:$0xff]
  %v104 = vld [vmem:[%s1 + $0x230] sm:$0xff]
  %v105 = vld [vmem:[%s1 + $0x238] sm:$0xff]
  %v106 = vld [vmem:[%s1 + $0x240] sm:$0xff]
  %v107 = vld [vmem:[%s1 + $0x248] sm:$0xff]
  %v108 = vld [vmem:[%s1 + $0x250] sm:$0xff]
  %v109 = vld [vmem:[%s1 + $0x258] sm:$0xff]
  %v110 = vld [vmem:[%s1 + $0x260] sm:$0xff]
  %v111 = vld [vmem:[%s1 + $0x268] sm:$0xff]
  %v112 = vld [vmem:[%s1 + $0x270] sm:$0xff]
  %v113 = vld [vmem:[%s1 + $0x278] sm:$0xff]
  %v114 = vld [vmem:[%s1 + $0x280] sm:$0xff]
  %v115 = vld [vmem:[%s1 + $0x288] sm:$0xff]
  %v116 = vld [vmem:[%s1 + $0x290] sm:$0xff]
  %v117 = vld [vmem:[%s1 + $0x298] sm:$0xff]
  %v118 = vld [vmem:[%s1 + $0x2a0] sm:$0xff]
  %v119 = vld [vmem:[%s1 + $0x2a8] sm:$0xff]
  %v120 = vld [vmem:[%s1 + $0x2b0] sm:$0xff]
  %v121 = vld [vmem:[%s1 + $0x2b8] sm:$0xff]
  %v122 = vld [vmem:[%s1 + $0x2c0] sm:$0xff]
  %v123 = vld [vmem:[%s1 + $0x2c8] sm:$0xff]
  %v124 = vld [vmem:[%s1 + $0x2d0] sm:$0xff]
  %v125 = vld [vmem:[%s1 + $0x2d8] sm:$0xff]
  %v126 = vld [vmem:[%s1 + $0x2e0] sm:$0xff]
  %v127 = vld [vmem:[%s1 + $0x2e8] sm:$0xff]
  %v128 = vld [vmem:[%s1 + $0x2f0] sm:$0xff]
  %v129 = vld [vmem:[%s1 + $0x2f8] sm:$0xff]
  %v130 = vld [vmem:[%s1 + $0x300] sm:$0xff]
  %v131 = vld [vmem:[%s1 + $0x308] sm:$0xff]
  %v132 = vld [vmem:[%s1 + $0x310] sm:$0xff]
  %v133 = vld [vmem:[%s1 + $0x318] sm:$0xff]
  %v134 = vld [vmem:[%s1 + $0x320] sm:$0xff]
  %v135 = vld [vmem:[%s1 + $0x328] sm:$0xff]
  %v136 = vld [vmem:[%s1 + $0x330] sm:$0xff]
  %v137 = vld [vmem:[%s1 + $0x338] sm:$0xff]
  %v138 = vld [vmem:[%s1 + $0x340] sm:$0xff]
  %v139 = vld [vmem:[%s1 + $0x348] sm:$0xff]
  %v140 = vld [vmem:[%s1 + $0x350] sm:$0xff]
  %v141 = vld [vmem:[%s1 + $0x358] sm:$0xff]
  %v142 = vld [vmem:[%s1 + $0x360] sm:$0xff]
  %v143 = vld [vmem:[%s1 + $0x368] sm:$0xff]
  %v144 = vld [vmem:[%s1 + $0x370] sm:$0xff]
  %v145 = vld [vmem:[%s1 + $0x378] sm:$0xff]
  %v146 = vld [vmem:[%s1 + $0x380] sm:$0xff]
  %v147 = vld [vmem:[%s1 + $0x388] sm:$0xff]
  %v148 = vld [vmem:[%s1 + $0x390] sm:$0xff]
  %v149 = vld [vmem:[%s1 + $0x398] sm:$0xff]
  %v150 = vld [vmem:[%s1 + $0x3a0] sm:$0xff]
  %v151 = vld [vmem:[%s1 + $0x3a8] sm:$0xff]
  %v152 = vld [vmem:[%s1 + $0x3b0] sm:$0xff]
  %v153 = vld [vmem:[%s1 + $0x3b8] sm:$0xff]
  %v154 = vld [vmem:[%s1 + $0x3c0] sm:$0xff]
  %v155 = vld [vmem:[%s1 + $0x3c8] sm:$0xff]
  %v156 = vld [vmem:[%s1 + $0x3d0] sm:$0xff]
  %v157 = vld [vmem:[%s1 + $0x3d8] sm:$0xff]
  %v158 = vld [vmem:[%s1 + $0x3e0] sm:$0xff]
  %v159 = vld [vmem:[%s1 + $0x3e8] sm:$0xff]
  %v160 = vld [vmem:[%s1 + $0x3f0] sm:$0xff]
  %v161 = vld [vmem:[%s1 + $0x3f8] sm:$0xff]
  %v162 = vld [vmem:[%s1 + $0x400] sm:$0xff]
  %v163 = vld [vmem:[%s1 + $0x408] sm:$0xff]
  %v164 = vld [vmem:[%s1 + $0x410] sm:$0xff]
  %v165 = vld [vmem:[%s1 + $0x418] sm:$0xff]
  %v166 = vld [vmem:[%s1 + $0x420] sm:$0xff]
  %v167 = vld [vmem:[%s1 + $0x428] sm:$0xff]
  %v168 = vld [vmem:[%s1 + $0x430] sm:$0xff]
  %v169 = vld [vmem:[%s1 + $0x438] sm:$0xff]
  %v170 = vld [vmem:[%s1 + $0x440] sm:$0xff]
  %v171 = vld [vmem:[%s1 + $0x448] sm:$0xff]
  %v172 = vld [vmem:[%s1 + $0x450] sm:$0xff]
  %v173 = vld [vmem:[%s1 + $0x458] sm:$0xff]
  %v174 = vld [vmem:[%s1 + $0x460] sm:$0xff]
  %v175 = vld [vmem:[%s1 + $0x468] sm:$0xff]
  %v176 = vld [vmem:[%s1 + $0x470] sm:$0xff]
  %v177 = vld [vmem:[%s1 + $0x478] sm:$0xff]
  %v178 = vld [vmem:[%s1 + $0x480] sm:$0xff]
  %v179 = vld [vmem:[%s1 + $0x488] sm:$0xff]
  %v180 = vld [vmem:[%s1 + $0x490] sm:$0xff]
  %v181 = vld [vmem:[%s1 + $0x498] sm:$0xff]
  %v182 = vld [vmem:[%s1 + $0x4a0] sm:$0xff]
  %v183 = vld [vmem:[%s1 + $0x4a8] sm:$0xff]
  %v184 = vld [vmem:[%s1 + $0x4b0] sm:$0xff]
  %v185 = vld [vmem:[%s1 + $0x4b8] sm:$0xff]
  %v186 = vld [vmem:[%s1 + $0x4c0] sm:$0xff]
  %v187 = vld [vmem:[%s1 + $0x4c8] sm:$0xff]
  %v188 = vld [vmem:[%s1 + $0x4d0] sm:$0xff]
  %v189 = vld [vmem:[%s1 + $0x4d8] sm:$0xff]
  %v190 = vld [vmem:[%s1 + $0x4e0] sm:$0xff]
  %v191 = vld [vmem:[%s1 + $0x4e8] sm:$0xff]
  %v192 = vld [vmem:[%s1 + $0x4f0] sm:$0xff]
  %v193 = vld [vmem:[%s1 + $0x4f8] sm:$0xff]
  %v194 = vld [vmem:[%s1 + $0x500] sm:$0xff]
  %v195 = vld [vmem:[%s1 + $0x508] sm:$0xff]
  %v196 = vld [vmem:[%s1 + $0x510] sm:$0xff]
  %v197 = vld [vmem:[%s1 + $0x518] sm:$0xff]
  %v198 = vld [vmem:[%s1 + $0x520] sm:$0xff]
  %v199 = vld [vmem:[%s1 + $0x528] sm:$0xff]
  %v200 = vld [vmem:[%s1 + $0x530] sm:$0xff]
  %v201 = vld [vmem:[%s1 + $0x538] sm:$0xff]
  %v202 = vld [vmem:[%s1 + $0x540] sm:$0xff]
  %v203 = vld [vmem:[%s1 + $0x548] sm:$0xff]
  %v204 = vld [vmem:[%s1 + $0x550] sm:$0xff]
  %v205 = vld [vmem:[%s1 + $0x558] sm:$0xff]
  %v206 = vld [vmem:[%s1 + $0x560] sm:$0xff]
  %v207 = vld [vmem:[%s1 + $0x568] sm:$0xff]
  %v208 = vld [vmem:[%s1 + $0x570] sm:$0xff]
  %v209 = vld [vmem:[%s1 + $0x578] sm:$0xff]
  %v210 = vld [vmem:[%s1 + $0x580] sm:$0xff]
  %v211 = vld [vmem:[%s1 + $0x588] sm:$0xff]
  %v212 = vld [vmem:[%s1 + $0x590] sm:$0xff]
  %v213 = vld [vmem:[%s1 + $0x598] sm:$0xff]
  %v214 = vld [vmem:[%s1 + $0x5a0] sm:$0xff]
  %v215 = vld [vmem:[%s1 + $0x5a8] sm:$0xff]
  %v216 = vld [vmem:[%s1 + $0x5b0] sm:$0xff]
  %v217 = vld [vmem:[%s1 + $0x5b8] sm:$0xff]
  %v218 = vld [vmem:[%s1 + $0x5c0] sm:$0xff]
  %v219 = vld [vmem:[%s1 + $0x5c8] sm:$0xff]
  %v220 = vld [vmem:[%s1 + $0x5d0] sm:$0xff]
  %v221 = vld [vmem:[%s1 + $0x5d8] sm:$0xff]
  %v222 = vld [vmem:[%s1 + $0x5e0] sm:$0xff]
  %v223 = vld [vmem:[%s1 + $0x5e8] sm:$0xff]
  %v224 = vld [vmem:[%s1 + $0x5f0] sm:$0xff]
  %v225 = vld [vmem:[%s1 + $0x5f8] sm:$0xff]
  %v226 = vld [vmem:[%s1 + $0x600] sm:$0xff]
  %v227 = vld [vmem:[%s1 + $0x608] sm:$0xff]
  %v228 = vld [vmem:[%s1 + $0x610] sm:$0xff]
  %v229 = vld [vmem:[%s1 + $0x618] sm:$0xff]
  %v230 = vld [vmem:[%s1 + $0x620] sm:$0xff]
  %v231 = vld [vmem:[%s1 + $0x628] sm:$0xff]
  %v232 = vld [vmem:[%s1 + $0x630] sm:$0xff]
  %v233 = vld [vmem:[%s1 + $0x638] sm:$0xff]
  %v234 = vld [vmem:[%s1 + $0x640] sm:$0xff]
  %v235 = vld [vmem:[%s1 + $0x648] sm:$0xff]
  %v236 = vld [vmem:[%s1 + $0x650] sm:$0xff]
  %v237 = vld [vmem:[%s1 + $0x658] sm:$0xff]
  %v238 = vld [vmem:[%s1 + $0x660] sm:$0xff]
  %v239 = vld [vmem:[%s1 + $0x668] sm:$0xff]
  %v240 = vld [vmem:[%s1 + $0x670] sm:$0xff]
  %v241 = vld [vmem:[%s1 + $0x678] sm:$0xff]
  %v242 = vld [vmem:[%s1 + $0x680] sm:$0xff]
  %v243 = vld [vmem:[%s1 + $0x688] sm:$0xff]
  %v244 = vld [vmem:[%s1 + $0x690] sm:$0xff]
  %v245 = vld [vmem:[%s1 + $0x698] sm:$0xff]
  %v246 = vld [vmem:[%s1 + $0x6a0] sm:$0xff]
  %v247 = vld [vmem:[%s1 + $0x6a8] sm:$0xff]
  %v248 = vld [vmem:[%s1 + $0x6b0] sm:$0xff]
  %v249 = vld [vmem:[%s1 + $0x6b8] sm:$0xff]
  %v250 = vld [vmem:[%s1 + $0x6c0] sm:$0xff]
  %v251 = vld [vmem:[%s1 + $0x6c8] sm:$0xff]
  %v252 = vld [vmem:[%s1 + $0x6d0] sm:$0xff]
  %v253 = vld [vmem:[%s1 + $0x6d8] sm:$0xff]
  %v254 = vld [vmem:[%s1 + $0x6e0] sm:$0xff]
  %v255 = vld [vmem:[%s1 + $0x6e8] sm:$0xff]
  %v256 = vld [vmem:[%s1 + $0x6f0] sm:$0xff]
  %v257 = vld [vmem:[%s1 + $0x6f8] sm:$0xff]
  %v258 = vld [vmem:[%s1 + $0x700] sm:$0xff]
  %v259 = vld [vmem:[%s1 + $0x708] sm:$0xff]
  %v260 = vld [vmem:[%s1 + $0x710] sm:$0xff]
  %v261 = vld [vmem:[%s1 + $0x718] sm:$0xff]
  %v262 = vld [vmem:[%s1 + $0x720] sm:$0xff]
  %v263 = vld [vmem:[%s1 + $0x728] sm:$0xff]
  %v264 = vld [vmem:[%s1 + $0x730] sm:$0xff]
  %v265 = vld [vmem:[%s1 + $0x738] sm:$0xff]
  %v266 = vld [vmem:[%s1 + $0x740] sm:$0xff]
  %v267 = vld [vmem:[%s1 + $0x748] sm:$0xff]
  %v268 = vld [vmem:[%s1 + $0x750] sm:$0xff]
  %v269 = vld [vmem:[%s1 + $0x758] sm:$0xff]
  %v270 = vld [vmem:[%s1 + $0x760] sm:$0xff]
  %v271 = vld [vmem:[%s1 + $0x768] sm:$0xff]
  %v272 = vld [vmem:[%s1 + $0x770] sm:$0xff]
  %v273 = vld [vmem:[%s1 + $0x778] sm:$0xff]
  %v274 = vld [vmem:[%s1 + $0x780] sm:$0xff]
  %v275 = vld [vmem:[%s1 + $0x788] sm:$0xff]
  %v276 = vld [vmem:[%s1 + $0x790] sm:$0xff]
  %v277 = vld [vmem:[%s1 + $0x798] sm:$0xff]
  %v278 = vld [vmem:[%s1 + $0x7a0] sm:$0xff]
  %v279 = vld [vmem:[%s1 + $0x7a8] sm:$0xff]
  %v280 = vld [vmem:[%s1 + $0x7b0] sm:$0xff]
  %v281 = vld [vmem:[%s1 + $0x7b8] sm:$0xff]
  %v282 = vld [vmem:[%s1 + $0x7c0] sm:$0xff]
  %v283 = vld [vmem:[%s1 + $0x7c8] sm:$0xff]
  %v284 = vld [vmem:[%s1 + $0x7d0] sm:$0xff]
  %v285 = vld [vmem:[%s1 + $0x7d8] sm:$0xff]
  %v286 = vld [vmem:[%s1 + $0x7e0] sm:$0xff]
  %v287 = vld [vmem:[%s1 + $0x7e8] sm:$0xff]
  %v288 = vld [vmem:[%s1 + $0x7f0] sm:$0xff]
  %v289 = vld [vmem:[%s1 + $0x7f8] sm:$0xff]
  %v290 = vld [vmem:[%s1 + $0x800] sm:$0xff]
  %v291 = vld [vmem:[%s1 + $0x808] sm:$0xff]
  %v292 = vld [vmem:[%s1 + $0x810] sm:$0xff]
  %v293 = vld [vmem:[%s1 + $0x818] sm:$0xff]
  %v294 = vld [vmem:[%s1 + $0x820] sm:$0xff]
  %v295 = vld [vmem:[%s1 + $0x828] sm:$0xff]
  %v296 = vld [vmem:[%s1 + $0x830] sm:$0xff]
  %v297 = vld [vmem:[%s1 + $0x838] sm:$0xff]
  %v298 = vld [vmem:[%s1 + $0x840] sm:$0xff]
  %v299 = vld [vmem:[%s1 + $0x848] sm:$0xff]
  %v300 = vld [vmem:[%s1 + $0x850] sm:$0xff]
  %v301 = vld [vmem:[%s1 + $0x858] sm:$0xff]
  %v302 = vld [vmem:[%s1 + $0x860] sm:$0xff]
  %v303 = vld [vmem:[%s1 + $0x868] sm:$0xff]
  %v304 = vld [vmem:[%s1 + $0x870] sm:$0xff]
  %v305 = vld [vmem:[%s1 + $0x878] sm:$0xff]
  %v306 = vld [vmem:[%s1 + $0x880] sm:$0xff]
  %v307 = vld [vmem:[%s1 + $0x888] sm:$0xff]
  %v308 = vld [vmem:[%s1 + $0x890] sm:$0xff]
  %v309 = vld [vmem:[%s1 + $0x898] sm:$0xff]
  %v310 = vld [vmem:[%s1 + $0x8a0] sm:$0xff]
  %v311 = vld [vmem:[%s1 + $0x8a8] sm:$0xff]
  %v312 = vld [vmem:[%s1 + $0x8b0] sm:$0xff]
  %v313 = vld [vmem:[%s1 + $0x8b8] sm:$0xff]
  %v314 = vld [vmem:[%s1 + $0x8c0] sm:$0xff]
  %v315 = vld [vmem:[%s1 + $0x8c8] sm:$0xff]
  %v316 = vld [vmem:[%s1 + $0x8d0] sm:$0xff]
  %v317 = vld [vmem:[%s1 + $0x8d8] sm:$0xff]
  %v318 = vld [vmem:[%s1 + $0x8e0] sm:$0xff]
  %v319 = vld [vmem:[%s1 + $0x8e8] sm:$0xff]
  %v320 = vld [vmem:[%s1 + $0x8f0] sm:$0xff]
  %v321 = vld [vmem:[%s1 + $0x8f8] sm:$0xff]
  %v322 = vld [vmem:[%s1 + $0x900] sm:$0xff]
  %v323 = vld [vmem:[%s1 + $0x908] sm:$0xff]
  %v324 = vld [vmem:[%s1 + $0x910] sm:$0xff]
  %v325 = vld [vmem:[%s1 + $0x918] sm:$0xff]
  %v326 = vld [vmem:[%s1 + $0x920] sm:$0xff]
  %v327 = vld [vmem:[%s1 + $0x928] sm:$0xff]
  %v328 = vld [vmem:[%s1 + $0x930] sm:$0xff]
  %v329 = vld [vmem:[%s1 + $0x938] sm:$0xff]
  %v330 = vld [vmem:[%s1 + $0x940] sm:$0xff]
  %v331 = vld [vmem:[%s1 + $0x948] sm:$0xff]
  %v332 = vld [vmem:[%s1 + $0x950] sm:$0xff]
  %v333 = vld [vmem:[%s1 + $0x958] sm:$0xff]
  %v334 = vld [vmem:[%s1 + $0x960] sm:$0xff]
  %v335 = vld [vmem:[%s1 + $0x968] sm:$0xff]
  %v336 = vld [vmem:[%s1 + $0x970] sm:$0xff]
  %v337 = vld [vmem:[%s1 + $0x978] sm:$0xff]
  %v338 = vld [vmem:[%s1 + $0x980] sm:$0xff]
  %v339 = vld [vmem:[%s1 + $0x988] sm:$0xff]
  %v340 = vld [vmem:[%s1 + $0x990] sm:$0xff]
  %v341 = vld [vmem:[%s1 + $0x998] sm:$0xff]
  %v342 = vld [vmem:[%s1 + $0x9a0] sm:$0xff]
  %v343 = vld [vmem:[%s1 + $0x9a8] sm:$0xff]
  %v344 = vld [vmem:[%s1 + $0x9b0] sm:$0xff]
  %v345 = vld [vmem:[%s1 + $0x9b8] sm:$0xff]
  %v346 = vld [vmem:[%s1 + $0x9c0] sm:$0xff]
  %v347 = vld [vmem:[%s1 + $0x9c8] sm:$0xff]
  %v348 = vld [vmem:[%s1 + $0x9d0] sm:$0xff]
  %v349 = vld [vmem:[%s1 + $0x9d8] sm:$0xff]
  %v350 = vld [vmem:[%s1 + $0x9e0] sm:$0xff]
  %v351 = vld [vmem:[%s1 + $0x9e8] sm:$0xff]
  %v352 = vld [vmem:[%s1 + $0x9f0] sm:$0xff]
  %v353 = vld [vmem:[%s1 + $0x9f8] sm:$0xff]
  %v354 = vld [vmem:[%s1 + $0xa00] sm:$0xff]
  %v355 = vld [vmem:[%s1 + $0xa08] sm:$0xff]
  %v356 = vld [vmem:[%s1 + $0xa10] sm:$0xff]
  %v357 = vld [vmem:[%s1 + $0xa18] sm:$0xff]
  %v358 = vld [vmem:[%s1 + $0xa20] sm:$0xff]
  %v359 = vld [vmem:[%s1 + $0xa28] sm:$0xff]
  %v360 = vld [vmem:[%s1 + $0xa30] sm:$0xff]
  %v361 = vld [vmem:[%s1 + $0xa38] sm:$0xff]
  %v362 = vld [vmem:[%s1 + $0xa40] sm:$0xff]
  %v363 = vld [vmem:[%s1 + $0xa48] sm:$0xff]
  %v364 = vld [vmem:[%s1 + $0xa50] sm:$0xff]
  %v365 = vld [vmem:[%s1 + $0xa58] sm:$0xff]
  %v366 = vld [vmem:[%s1 + $0xa60] sm:$0xff]
  %v367 = vld [vmem:[%s1 + $0xa68] sm:$0xff]
  %v368 = vld [vmem:[%s1 + $0xa70] sm:$0xff]
  %v369 = vld [vmem:[%s1 + $0xa78] sm:$0xff]
  %v370 = vld [vmem:[%s1 + $0xa80] sm:$0xff]
  %v371 = vld [vmem:[%s1 + $0xa88] sm:$0xff]
  %v372 = vld [vmem:[%s1 + $0xa90] sm:$0xff]
  %v373 = vld [vmem:[%s1 + $0xa98] sm:$0xff]
  %v374 = vld [vmem:[%s1 + $0xaa0] sm:$0xff]
  %v375 = vld [vmem:[%s1 + $0xaa8] sm:$0xff]
  %v376 = vld [vmem:[%s1 + $0xab0] sm:$0xff]
  %v377 = vld [vmem:[%s1 + $0xab8] sm:$0xff]
  %v378 = vld [vmem:[%s1 + $0xac0] sm:$0xff]
  %v379 = vld [vmem:[%s1 + $0xac8] sm:$0xff]
  %v380 = vld [vmem:[%s1 + $0xad0] sm:$0xff]
  %v381 = vld [vmem:[%s1 + $0xad8] sm:$0xff]
  %v382 = vld [vmem:[%s1 + $0xae0] sm:$0xff]
  %v383 = vld [vmem:[%s1 + $0xae8] sm:$0xff]
  %v384 = vld [vmem:[%s1 + $0xaf0] sm:$0xff]
  %v385 = vld [vmem:[%s1 + $0xaf8] sm:$0xff]
  %v386 = vld [vmem:[%s1 + $0xb00] sm:$0xff]
  %v387 = vld [vmem:[%s1 + $0xb08] sm:$0xff]
  %v388 = vld [vmem:[%s1 + $0xb10] sm:$0xff]
  %v389 = vld [vmem:[%s1 + $0xb18] sm:$0xff]
  %v390 = vld [vmem:[%s1 + $0xb20] sm:$0xff]
  %v391 = vld [vmem:[%s1 + $0xb28] sm:$0xff]
  %v392 = vld [vmem:[%s1 + $0xb30] sm:$0xff]
  %v393 = vld [vmem:[%s1 + $0xb38] sm:$0xff]
  %v394 = vld [vmem:[%s1 + $0xb40] sm:$0xff]
  %v395 = vld [vmem:[%s1 + $0xb48] sm:$0xff]
  %v396 = vld [vmem:[%s1 + $0xb50] sm:$0xff]
  %v397 = vld [vmem:[%s1 + $0xb58] sm:$0xff]
  %v398 = vld [vmem:[%s1 + $0xb60] sm:$0xff]
  %v399 = vld [vmem:[%s1 + $0xb68] sm:$0xff]
  %v400 = vld [vmem:[%s1 + $0xb70] sm:$0xff]
  %v401 = vld [vmem:[%s1 + $0xb78] sm:$0xff]
  %v402 = vld [vmem:[%s1 + $0xb80] sm:$0xff]
  %v403 = vld [vmem:[%s1 + $0xb88] sm:$0xff]
  %v404 = vld [vmem:[%s1 + $0xb90] sm:$0xff]
  %v405 = vld [vmem:[%s1 + $0xb98] sm:$0xff]
  %v406 = vld [vmem:[%s1 + $0xba0] sm:$0xff]
  %v407 = vld [vmem:[%s1 + $0xba8] sm:$0xff]
  %v408 = vld [vmem:[%s1 + $0xbb0] sm:$0xff]
  %v409 = vld [vmem:[%s1 + $0xbb8] sm:$0xff]
  %v410 = vld [vmem:[%s1 + $0xbc0] sm:$0xff]
  %v411 = vld [vmem:[%s1 + $0xbc8] sm:$0xff]
  %v412 = vld [vmem:[%s1 + $0xbd0] sm:$0xff]
  %v413 = vld [vmem:[%s1 + $0xbd8] sm:$0xff]
  %v414 = vld [vmem:[%s1 + $0xbe0] sm:$0xff]
  %v415 = vld [vmem:[%s1 + $0xbe8] sm:$0xff]
  %v416 = vld [vmem:[%s1 + $0xbf0] sm:$0xff]
  %v417 = vld [vmem:[%s1 + $0xbf8] sm:$0xff]
  %v418 = vld [vmem:[%s1 + $0xc00] sm:$0xff]
  %v419 = vld [vmem:[%s1 + $0xc08] sm:$0xff]
  %v420 = vld [vmem:[%s1 + $0xc10] sm:$0xff]
  %v421 = vld [vmem:[%s1 + $0xc18] sm:$0xff]
  %v422 = vld [vmem:[%s1 + $0xc20] sm:$0xff]
  %v423 = vld [vmem:[%s1 + $0xc28] sm:$0xff]
  %v424 = vld [vmem:[%s1 + $0xc30] sm:$0xff]
  %v425 = vld [vmem:[%s1 + $0xc38] sm:$0xff]
  %v426 = vld [vmem:[%s1 + $0xc40] sm:$0xff]
  %v427 = vld [vmem:[%s1 + $0xc48] sm:$0xff]
  %v428 = vld [vmem:[%s1 + $0xc50] sm:$0xff]
  %v429 = vld [vmem:[%s1 + $0xc58] sm:$0xff]
  %v430 = vld [vmem:[%s1 + $0xc60] sm:$0xff]
  %v431 = vld [vmem:[%s1 + $0xc68] sm:$0xff]
  %v432 = vld [vmem:[%s1 + $0xc70] sm:$0xff]
  %v433 = vld [vmem:[%s1 + $0xc78] sm:$0xff]
  %v434 = vld [vmem:[%s1 + $0xc80] sm:$0xff]
  %v435 = vld [vmem:[%s1 + $0xc88] sm:$0xff]
  %v436 = vld [vmem:[%s1 + $0xc90] sm:$0xff]
  %v437 = vld [vmem:[%s1 + $0xc98] sm:$0xff]
  %v438 = vld [vmem:[%s1 + $0xca0] sm:$0xff]
  %v439 = vld [vmem:[%s1 + $0xca8] sm:$0xff]
  %v440 = vld [vmem:[%s1 + $0xcb0] sm:$0xff]
  %v441 = vld [vmem:[%s1 + $0xcb8] sm:$0xff]
  %v442 = vld [vmem:[%s1 + $0xcc0] sm:$0xff]
  %v443 = vld [vmem:[%s1 + $0xcc8] sm:$0xff]
  %v444 = vld [vmem:[%s1 + $0xcd0] sm:$0xff]
  %v445 = vld [vmem:[%s1 + $0xcd8] sm:$0xff]
  %v446 = vld [vmem:[%s1 + $0xce0] sm:$0xff]
  %v447 = vld [vmem:[%s1 + $0xce8] sm:$0xff]
  %v448 = vld [vmem:[%s1 + $0xcf0] sm:$0xff]
  %v449 = vld [vmem:[%s1 + $0xcf8] sm:$0xff]
  %v450 = vld [vmem:[%s1 + $0xd00] sm:$0xff]
  %v451 = vld [vmem:[%s1 + $0xd08] sm:$0xff]
  %v452 = vld [vmem:[%s1 + $0xd10] sm:$0xff]
  %v453 = vld [vmem:[%s1 + $0xd18] sm:$0xff]
  %v454 = vld [vmem:[%s1 + $0xd20] sm:$0xff]
  %v455 = vld [vmem:[%s1 + $0xd28] sm:$0xff]
  %v456 = vld [vmem:[%s1 + $0xd30] sm:$0xff]
  %v457 = vld [vmem:[%s1 + $0xd38] sm:$0xff]
  %v458 = vld [vmem:[%s1 + $0xd40] sm:$0xff]
  %v459 = vld [vmem:[%s1 + $0xd48] sm:$0xff]
  %v460 = vld [vmem:[%s1 + $0xd50] sm:$0xff]
  %v461 = vld [vmem:[%s1 + $0xd58] sm:$0xff]
  %v462 = vld [vmem:[%s1 + $0xd60] sm:$0xff]
  %v463 = vld [vmem:[%s1 + $0xd68] sm:$0xff]
  %v464 = vld [vmem:[%s1 + $0xd70] sm:$0xff]
  %v465 = vld [vmem:[%s1 + $0xd78] sm:$0xff]
  %v466 = vld [vmem:[%s1 + $0xd80] sm:$0xff]
  %v467 = vld [vmem:[%s1 + $0xd88] sm:$0xff]
  %v468 = vld [vmem:[%s1 + $0xd90] sm:$0xff]
  %v469 = vld [vmem:[%s1 + $0xd98] sm:$0xff]
  %v470 = vld [vmem:[%s1 + $0xda0] sm:$0xff]
  %v471 = vld [vmem:[%s1 + $0xda8] sm:$0xff]
  %v472 = vld [vmem:[%s1 + $0xdb0] sm:$0xff]
  %v473 = vld [vmem:[%s1 + $0xdb8] sm:$0xff]
  %v474 = vld [vmem:[%s1 + $0xdc0] sm:$0xff]
  %v475 = vld [vmem:[%s1 + $0xdc8] sm:$0xff]
  %v476 = vld [vmem:[%s1 + $0xdd0] sm:$0xff]
  %v477 = vld [vmem:[%s1 + $0xdd8] sm:$0xff]
  %v478 = vld [vmem:[%s1 + $0xde0] sm:$0xff]
  %v479 = vld [vmem:[%s1 + $0xde8] sm:$0xff]
  %v480 = vld [vmem:[%s1 + $0xdf0] sm:$0xff]
  %v481 = vld [vmem:[%s1 + $0xdf8] sm:$0xff]
  %v482 = vld [vmem:[%s1 + $0xe00] sm:$0xff]
  %v483 = vld [vmem:[%s1 + $0xe08] sm:$0xff]
  %v484 = vld [vmem:[%s1 + $0xe10] sm:$0xff]
  %v485 = vld [vmem:[%s1 + $0xe18] sm:$0xff]
  %v486 = vld [vmem:[%s1 + $0xe20] sm:$0xff]
  %v487 = vld [vmem:[%s1 + $0xe28] sm:$0xff]
  %v488 = vld [vmem:[%s1 + $0xe30] sm:$0xff]
  %v489 = vld [vmem:[%s1 + $0xe38] sm:$0xff]
  %v490 = vld [vmem:[%s1 + $0xe40] sm:$0xff]
  %v491 = vld [vmem:[%s1 + $0xe48] sm:$0xff]
  %v492 = vld [vmem:[%s1 + $0xe50] sm:$0xff]
  %v493 = vld [vmem:[%s1 + $0xe58] sm:$0xff]
  %v494 = vld [vmem:[%s1 + $0xe60] sm:$0xff]
  %v495 = vld [vmem:[%s1 + $0xe68] sm:$0xff]
  %v496 = vld [vmem:[%s1 + $0xe70] sm:$0xff]
  %v497 = vld [vmem:[%s1 + $0xe78] sm:$0xff]
  %v498 = vld [vmem:[%s1 + $0xe80] sm:$0xff]
  %v499 = vld [vmem:[%s1 + $0xe88] sm:$0xff]
  %v500 = vld [vmem:[%s1 + $0xe90] sm:$0xff]
  %v501 = vld [vmem:[%s1 + $0xe98] sm:$0xff]
  %v502 = vld [vmem:[%s1 + $0xea0] sm:$0xff]
  %v503 = vld [vmem:[%s1 + $0xea8] sm:$0xff]
  %v504 = vld [vmem:[%s1 + $0xeb0] sm:$0xff]
  %v505 = vld [vmem:[%s1 + $0xeb8] sm:$0xff]
  %v506 = vld [vmem:[%s1 + $0xec0] sm:$0xff]
  %v507 = vld [vmem:[%s1 + $0xec8] sm:$0xff]
  %v508 = vld [vmem:[%s1 + $0xed0] sm:$0xff]
  %v509 = vld [vmem:[%s1 + $0xed8] sm:$0xff]
  %v510 = vld [vmem:[%s1 + $0xee0] sm:$0xff]
  %v511 = vld [vmem:[%s1 + $0xee8] sm:$0xff]
  %v512 = vld [vmem:[%s1 + $0xef0] sm:$0xff]
  %v513 = vld [vmem:[%s1 + $0xef8] sm:$0xff]
  %v514 = vld [vmem:[%s1 + $0xf00] sm:$0xff]
  %v515 = vld [vmem:[%s1 + $0xf08] sm:$0xff]
  %v516 = vld [vmem:[%s1 + $0xf10] sm:$0xff]
  %v517 = vld [vmem:[%s1 + $0xf18] sm:$0xff]
  %v518 = vld [vmem:[%s1 + $0xf20] sm:$0xff]
  %v519 = vld [vmem:[%s1 + $0xf28] sm:$0xff]
  %v520 = vld [vmem:[%s1 + $0xf30] sm:$0xff]
  %v521 = vld [vmem:[%s1 + $0xf38] sm:$0xff]
  %v522 = vld [vmem:[%s1 + $0xf40] sm:$0xff]
  %v523 = vld [vmem:[%s1 + $0xf48] sm:$0xff]
  %v524 = vld [vmem:[%s1 + $0xf50] sm:$0xff]
  %v525 = vld [vmem:[%s1 + $0xf58] sm:$0xff]
  %v526 = vld [vmem:[%s1 + $0xf60] sm:$0xff]
  %v527 = vld [vmem:[%s1 + $0xf68] sm:$0xff]
  %v528 = vld [vmem:[%s1 + $0xf70] sm:$0xff]
  %v529 = vld [vmem:[%s1 + $0xf78] sm:$0xff]
  %v530 = vld [vmem:[%s1 + $0xf80] sm:$0xff]
  %v531 = vld [vmem:[%s1 + $0xf88] sm:$0xff]
  %v532 = vld [vmem:[%s1 + $0xf90] sm:$0xff]
  %v533 = vld [vmem:[%s1 + $0xf98] sm:$0xff]
  %v534 = vld [vmem:[%s1 + $0xfa0] sm:$0xff]
  %v535 = vld [vmem:[%s1 + $0xfa8] sm:$0xff]
  %v536 = vld [vmem:[%s1 + $0xfb0] sm:$0xff]
  %v537 = vld [vmem:[%s1 + $0xfb8] sm:$0xff]
  %v538 = vld [vmem:[%s1 + $0xfc0] sm:$0xff]
  %v539 = vld [vmem:[%s1 + $0xfc8] sm:$0xff]
  %v540 = vld [vmem:[%s1 + $0xfd0] sm:$0xff]
  %v541 = vld [vmem:[%s1 + $0xfd8] sm:$0xff]
  %v542 = vld [vmem:[%s1 + $0xfe0] sm:$0xff]
  %v543 = vld [vmem:[%s1 + $0xfe8] sm:$0xff]
  %v544 = vld [vmem:[%s1 + $0xff0] sm:$0xff]
  %v545 = vld [vmem:[%s1 + $0xff8] sm:$0xff]
  %v546 = vld [vmem:[%s1 + $0x1000] sm:$0xff]
  %v547 = vld [vmem:[%s1 + $0x1008] sm:$0xff]
  %v548 = vld [vmem:[%s1 + $0x1010] sm:$0xff]
  %v549 = vld [vmem:[%s1 + $0x1018] sm:$0xff]
  %v550 = vld [vmem:[%s1 + $0x1020] sm:$0xff]
  %v551 = vld [vmem:[%s1 + $0x1028] sm:$0xff]
  %v552 = vld [vmem:[%s1 + $0x1030] sm:$0xff]
  %v553 = vld [vmem:[%s1 + $0x1038] sm:$0xff]
  %v554 = vld [vmem:[%s1 + $0x1040] sm:$0xff]
  %v555 = vld [vmem:[%s1 + $0x1048] sm:$0xff]
  %v556 = vld [vmem:[%s1 + $0x1050] sm:$0xff]
  %v557 = vld [vmem:[%s1 + $0x1058] sm:$0xff]
  %v558 = vld [vmem:[%s1 + $0x1060] sm:$0xff]
  %v559 = vld [vmem:[%s1 + $0x1068] sm:$0xff]
  %v560 = vld [vmem:[%s1 + $0x1070] sm:$0xff]
  %v561 = vld [vmem:[%s1 + $0x1078] sm:$0xff]
  %v562 = vld [vmem:[%s1 + $0x1080] sm:$0xff]
  %v563 = vld [vmem:[%s1 + $0x1088] sm:$0xff]
  %v564 = vld [vmem:[%s1 + $0x1090] sm:$0xff]
  %v565 = vld [vmem:[%s1 + $0x1098] sm:$0xff]
  %v566 = vld [vmem:[%s1 + $0x10a0] sm:$0xff]
  %v567 = vld [vmem:[%s1 + $0x10a8] sm:$0xff]
  %v568 = vld [vmem:[%s1 + $0x10b0] sm:$0xff]
  %v569 = vld [vmem:[%s1 + $0x10b8] sm:$0xff]
  %v570 = vld [vmem:[%s1 + $0x10c0] sm:$0xff]
  %v571 = vld [vmem:[%s1 + $0x10c8] sm:$0xff]
  %v572 = vld [vmem:[%s1 + $0x10d0] sm:$0xff]
  %v573 = vld [vmem:[%s1 + $0x10d8] sm:$0xff]
  %v574 = vld [vmem:[%s1 + $0x10e0] sm:$0xff]
  %v575 = vld [vmem:[%s1 + $0x10e8] sm:$0xff]
  %v576 = vld [vmem:[%s1 + $0x10f0] sm:$0xff]
  %v577 = vld [vmem:[%s1 + $0x10f8] sm:$0xff]
  %v578 = vld [vmem:[%s1 + $0x1100] sm:$0xff]
  %v579 = vld [vmem:[%s1 + $0x1108] sm:$0xff]
  %v580 = vld [vmem:[%s1 + $0x1110] sm:$0xff]
  %v581 = vld [vmem:[%s1 + $0x1118] sm:$0xff]
  %v582 = vld [vmem:[%s1 + $0x1120] sm:$0xff]
  %v583 = vld [vmem:[%s1 + $0x1128] sm:$0xff]
  %v584 = vld [vmem:[%s1 + $0x1130] sm:$0xff]
  %v585 = vld [vmem:[%s1 + $0x1138] sm:$0xff]
  %v586 = vld [vmem:[%s1 + $0x1140] sm:$0xff]
  %v587 = vld [vmem:[%s1 + $0x1148] sm:$0xff]
  %v588 = vld [vmem:[%s1 + $0x1150] sm:$0xff]
  %v589 = vld [vmem:[%s1 + $0x1158] sm:$0xff]
  %v590 = vld [vmem:[%s1 + $0x1160] sm:$0xff]
  %v591 = vld [vmem:[%s1 + $0x1168] sm:$0xff]
  %v592 = vld [vmem:[%s1 + $0x1170] sm:$0xff]
  %v593 = vld [vmem:[%s1 + $0x1178] sm:$0xff]
  %v594 = vld [vmem:[%s1 + $0x1180] sm:$0xff]
  %v595 = vld [vmem:[%s1 + $0x1188] sm:$0xff]
  %v596 = vld [vmem:[%s1 + $0x1190] sm:$0xff]
  %v597 = vld [vmem:[%s1 + $0x1198] sm:$0xff]
  %v598 = vld [vmem:[%s1 + $0x11a0] sm:$0xff]
  %v599 = vld [vmem:[%s1 + $0x11a8] sm:$0xff]
  %v600 = vld [vmem:[%s1 + $0x11b0] sm:$0xff]
  %v601 = vld [vmem:[%s1 + $0x11b8] sm:$0xff]
  %v602 = vld [vmem:[%s1 + $0x11c0] sm:$0xff]
  %v603 = vld [vmem:[%s1 + $0x11c8] sm:$0xff]
  %v604 = vld [vmem:[%s1 + $0x11d0] sm:$0xff]
  %v605 = vld [vmem:[%s1 + $0x11d8] sm:$0xff]
  %v606 = vld [vmem:[%s1 + $0x11e0] sm:$0xff]
  %v607 = vld [vmem:[%s1 + $0x11e8] sm:$0xff]
  %v608 = vld [vmem:[%s1 + $0x11f0] sm:$0xff]
  %v609 = vld [vmem:[%s1 + $0x11f8] sm:$0xff]
  %v610 = vld [vmem:[%s1 + $0x1200] sm:$0xff]
  %v611 = vld [vmem:[%s1 + $0x1208] sm:$0xff]
  %v612 = vld [vmem:[%s1 + $0x1210] sm:$0xff]
  %v613 = vld [vmem:[%s1 + $0x1218] sm:$0xff]
  %v614 = vld [vmem:[%s1 + $0x1220] sm:$0xff]
  %v615 = vld [vmem:[%s1 + $0x1228] sm:$0xff]
  %v616 = vld [vmem:[%s1 + $0x1230] sm:$0xff]
  %v617 = vld [vmem:[%s1 + $0x1238] sm:$0xff]
  %v618 = vld [vmem:[%s1 + $0x1240] sm:$0xff]
  %v619 = vld [vmem:[%s1 + $0x1248] sm:$0xff]
  %v620 = vld [vmem:[%s1 + $0x1250] sm:$0xff]
  %v621 = vld [vmem:[%s1 + $0x1258] sm:$0xff]
  %v622 = vld [vmem:[%s1 + $0x1260] sm:$0xff]
  %v623 = vld [vmem:[%s1 + $0x1268] sm:$0xff]
  %v624 = vld [vmem:[%s1 + $0x1270] sm:$0xff]
  %v625 = vld [vmem:[%s1 + $0x1278] sm:$0xff]
  %v626 = vld [vmem:[%s1 + $0x1280] sm:$0xff]
  %v627 = vld [vmem:[%s1 + $0x1288] sm:$0xff]
  %v628 = vld [vmem:[%s1 + $0x1290] sm:$0xff]
  %v629 = vld [vmem:[%s1 + $0x1298] sm:$0xff]
  %v630 = vld [vmem:[%s1 + $0x12a0] sm:$0xff]
  %v631 = vld [vmem:[%s1 + $0x12a8] sm:$0xff]
  %v632 = vld [vmem:[%s1 + $0x12b0] sm:$0xff]
  %v633 = vld [vmem:[%s1 + $0x12b8] sm:$0xff]
  %v634 = vld [vmem:[%s1 + $0x12c0] sm:$0xff]
  %v635 = vld [vmem:[%s1 + $0x12c8] sm:$0xff]
  %v636 = vld [vmem:[%s1 + $0x12d0] sm:$0xff]
  %v637 = vld [vmem:[%s1 + $0x12d8] sm:$0xff]
  %v638 = vld [vmem:[%s1 + $0x12e0] sm:$0xff]
  %v639 = vld [vmem:[%s1 + $0x12e8] sm:$0xff]
  %v640 = vld [vmem:[%s1 + $0x12f0] sm:$0xff]
  %v641 = vld [vmem:[%s1 + $0x12f8] sm:$0xff]
  %v642 = vld [vmem:[%s1 + $0x1300] sm:$0xff]
  %v643 = vld [vmem:[%s1 + $0x1308] sm:$0xff]
  %v644 = vld [vmem:[%s1 + $0x1310] sm:$0xff]
  %v645 = vld [vmem:[%s1 + $0x1318] sm:$0xff]
  %v646 = vld [vmem:[%s1 + $0x1320] sm:$0xff]
  %v647 = vld [vmem:[%s1 + $0x1328] sm:$0xff]
  %v648 = vld [vmem:[%s1 + $0x1330] sm:$0xff]
  %v649 = vld [vmem:[%s1 + $0x1338] sm:$0xff]
  %v650 = vld [vmem:[%s1 + $0x1340] sm:$0xff]
  %v651 = vld [vmem:[%s1 + $0x1348] sm:$0xff]
  %v652 = vld [vmem:[%s1 + $0x1350] sm:$0xff]
  %v653 = vld [vmem:[%s1 + $0x1358] sm:$0xff]
  %v654 = vld [vmem:[%s1 + $0x1360] sm:$0xff]
  %v655 = vld [vmem:[%s1 + $0x1368] sm:$0xff]
  %v656 = vld [vmem:[%s1 + $0x1370] sm:$0xff]
  %v657 = vld [vmem:[%s1 + $0x1378] sm:$0xff]
  %v658 = vld [vmem:[%s1 + $0x1380] sm:$0xff]
  %v659 = vld [vmem:[%s1 + $0x1388] sm:$0xff]
  %v660 = vld [vmem:[%s1 + $0x1390] sm:$0xff]
  %v661 = vld [vmem:[%s1 + $0x1398] sm:$0xff]
  %v662 = vld [vmem:[%s1 + $0x13a0] sm:$0xff]
  %v663 = vld [vmem:[%s1 + $0x13a8] sm:$0xff]
  %v664 = vld [vmem:[%s1 + $0x13b0] sm:$0xff]
  %v665 = vld [vmem:[%s1 + $0x13b8] sm:$0xff]
  %v666 = vld [vmem:[%s1 + $0x13c0] sm:$0xff]
  %v667 = vld [vmem:[%s1 + $0x13c8] sm:$0xff]
  %v668 = vld [vmem:[%s1 + $0x13d0] sm:$0xff]
  %v669 = vld [vmem:[%s1 + $0x13d8] sm:$0xff]
  %v670 = vld [vmem:[%s1 + $0x13e0] sm:$0xff]
  %v671 = vld [vmem:[%s1 + $0x13e8] sm:$0xff]
  %v672 = vld [vmem:[%s1 + $0x13f0] sm:$0xff]
  %v673 = vld [vmem:[%s1 + $0x13f8] sm:$0xff]
  %v674 = vld [vmem:[%s1 + $0x1400] sm:$0xff]
  %v675 = vld [vmem:[%s1 + $0x1408] sm:$0xff]
  %v676 = vld [vmem:[%s1 + $0x1410] sm:$0xff]
  %v677 = vld [vmem:[%s1 + $0x1418] sm:$0xff]
  %v678 = vld [vmem:[%s1 + $0x1420] sm:$0xff]
  %v679 = vld [vmem:[%s1 + $0x1428] sm:$0xff]
  %v680 = vld [vmem:[%s1 + $0x1430] sm:$0xff]
  %v681 = vld [vmem:[%s1 + $0x1438] sm:$0xff]
  %v682 = vld [vmem:[%s2] sm:$0x3]
  %v684 = vlaneseq
  %v685 = vshrl.u32 %v684, 7
  %v686 = vsub.s32 0, %v685
  %v687 = vrot.slane %v682, %v686
  %v688 = vlaneseq
  %v689 = vshrl.u32 %v688, 7
  %v690 = vsub.s32 1, %v689
  %v691 = vrot.slane %v682, %v690
  %v700 = vcombine.high %v28, %v28
  %v702 = vunpack.c.l.s4 1983009808
  %v703 = vunpack.c.0.s8 %v702
  %v704 = vlaneseq
  %v705 = vshrl.u32 %v704, 7
  %v706 = vsub.s32 %v703, %v705
  %v707 = vrot.slane %v28, %v706
  %v709 = vunpack.c.l.s4 1983009808
  %v710 = vunpack.c.0.s8 %v709
  %v711 = vlaneseq
  %v712 = vshrl.u32 %v711, 7
  %v713 = vsub.s32 %v710, %v712
  %v714 = vrot.slane %v700, %v713
  %v715 = vcombine.high %v707, %v707
  %v716 = vcombine.high %v714, %v714
  %v717 = vcombine.high %v29, %v29
  %v719 = vunpack.c.l.s4 1983009808
  %v720 = vunpack.c.0.s8 %v719
  %v721 = vlaneseq
  %v722 = vshrl.u32 %v721, 7
  %v723 = vsub.s32 %v720, %v722
  %v724 = vrot.slane %v29, %v723
  %v726 = vunpack.c.l.s4 1983009808
  %v727 = vunpack.c.0.s8 %v726
  %v728 = vlaneseq
  %v729 = vshrl.u32 %v728, 7
  %v730 = vsub.s32 %v727, %v729
  %v731 = vrot.slane %v717, %v730
  %v732 = vcombine.high %v724, %v724
  %v733 = vcombine.high %v731, %v731
  %v734 = vcombine.high %v30, %v30
  %v736 = vunpack.c.l.s4 1983009808
  %v737 = vunpack.c.0.s8 %v736
  %v738 = vlaneseq
  %v739 = vshrl.u32 %v738, 7
  %v740 = vsub.s32 %v737, %v739
  %v741 = vrot.slane %v30, %v740
  %v743 = vunpack.c.l.s4 1983009808
  %v744 = vunpack.c.0.s8 %v743
  %v745 = vlaneseq
  %v746 = vshrl.u32 %v745, 7
  %v747 = vsub.s32 %v744, %v746
  %v748 = vrot.slane %v734, %v747
  %v749 = vcombine.high %v741, %v741
  %v750 = vcombine.high %v748, %v748
  %v751 = vcombine.high %v31, %v31
  %v753 = vunpack.c.l.s4 1983009808
  %v754 = vunpack.c.0.s8 %v753
  %v755 = vlaneseq
  %v756 = vshrl.u32 %v755, 7
  %v757 = vsub.s32 %v754, %v756
  %v758 = vrot.slane %v31, %v757
  %v760 = vunpack.c.l.s4 1983009808
  %v761 = vunpack.c.0.s8 %v760
  %v762 = vlaneseq
  %v763 = vshrl.u32 %v762, 7
  %v764 = vsub.s32 %v761, %v763
  %v765 = vrot.slane %v751, %v764
  %v766 = vcombine.high %v758, %v758
  %v767 = vcombine.high %v765, %v765
  %v768 = vcombine.high %v32, %v32
  %v770 = vunpack.c.l.s4 1983009808
  %v771 = vunpack.c.0.s8 %v770
  %v772 = vlaneseq
  %v773 = vshrl.u32 %v772, 7
  %v774 = vsub.s32 %v771, %v773
  %v775 = vrot.slane %v32, %v774
  %v777 = vunpack.c.l.s4 1983009808
  %v778 = vunpack.c.0.s8 %v777
  %v779 = vlaneseq
  %v780 = vshrl.u32 %v779, 7
  %v781 = vsub.s32 %v778, %v780
  %v782 = vrot.slane %v768, %v781
  %v783 = vcombine.high %v775, %v775
  %v784 = vcombine.high %v782, %v782
  %v786 = vunpack.c.l.s4 1983009808
  %v787 = vunpack.c.0.s8 %v786
  %v788 = vlaneseq
  %v789 = vshrl.u32 %v788, 7
  %v790 = vsub.s32 %v787, %v789
  %v791 = vrot.slane %v33, %v790
  %vm812 = vcmask 261120
  %v813 = vsel %vm812, %v791, 0
  %815 = vmatprep.subr.mxu0 %v35
  %816 = vmatpush1.msra.mxu0 %v34
  %817 = vmatprep.subr.mxu0 %v37
  %818 = vmatpush1.msra.mxu0 %v36
  %819 = vmatprep.subr.mxu0 %v39
  %820 = vmatpush1.msra.mxu0 %v38
  %821 = vmatprep.subr.mxu0 %v41
  %822 = vmatpush1.msra.mxu0 %v40
  %823 = vmatprep.subr.mxu0 %v43
  %824 = vmatpush1.msra.mxu0 %v42
  %825 = vmatprep.subr.mxu0 %v45
  %826 = vmatpush1.msra.mxu0 %v44
  %827 = vmatprep.subr.mxu0 %v47
  %828 = vmatpush1.msra.mxu0 %v46
  %829 = vmatprep.subr.mxu0 %v49
  %830 = vmatpush1.msra.mxu0 %v48
  %831 = vmatprep.subr.mxu0 %v51
  %832 = vmatpush1.msra.mxu0 %v50
  %833 = vmatprep.subr.mxu0 %v53
  %834 = vmatpush1.msra.mxu0 %v52
  %835 = vmatprep.subr.mxu0 %v55
  %836 = vmatpush1.msra.mxu0 %v54
  %837 = vmatprep.subr.mxu0 %v57
  %838 = vmatpush1.msra.mxu0 %v56
  %839 = vmatprep.subr.mxu0 %v59
  %840 = vmatpush1.msra.mxu0 %v58
  %841 = vmatprep.subr.mxu0 %v61
  %842 = vmatpush1.msra.mxu0 %v60
  %843 = vmatprep.subr.mxu0 %v63
  %844 = vmatpush1.msra.mxu0 %v62
  %845 = vmatprep.subr.mxu0 %v65
  %846 = vmatpush1.msra.mxu0 %v64
  %847 = vmatprep.subr.mxu0 %v67
  %848 = vmatpush1.msra.mxu0 %v66
  %849 = vmatprep.subr.mxu0 %v69
  %850 = vmatpush1.msra.mxu0 %v68
  %851 = vmatprep.subr.mxu0 %v71
  %852 = vmatpush1.msra.mxu0 %v70
  %853 = vmatprep.subr.mxu0 %v73
  %854 = vmatpush1.msra.mxu0 %v72
  %855 = vmatprep.subr.mxu0 %v75
  %856 = vmatpush1.msra.mxu0 %v74
  %857 = vmatprep.subr.mxu0 %v77
  %858 = vmatpush1.msra.mxu0 %v76
  %859 = vmatprep.subr.mxu0 %v79
  %860 = vmatpush1.msra.mxu0 %v78
  %861 = vmatprep.subr.mxu0 %v81
  %862 = vmatpush1.msra.mxu0 %v80
  %863 = vmatprep.subr.mxu0 %v83
  %864 = vmatpush1.msra.mxu0 %v82
  %865 = vmatprep.subr.mxu0 %v85
  %866 = vmatpush1.msra.mxu0 %v84
  %867 = vmatprep.subr.mxu0 %v87
  %868 = vmatpush1.msra.mxu0 %v86
  %869 = vmatprep.subr.mxu0 %v89
  %870 = vmatpush1.msra.mxu0 %v88
  %871 = vmatprep.subr.mxu0 %v91
  %872 = vmatpush1.msra.mxu0 %v90
  %873 = vmatprep.subr.mxu0 %v93
  %874 = vmatpush1.msra.mxu0 %v92
  %875 = vmatprep.subr.mxu0 %v95
  %876 = vmatpush1.msra.mxu0 %v94
  %877 = vmatprep.subr.mxu0 %v97
  %878 = vmatpush1.msra.mxu0 %v96
  %879 = vmatprep.mubr.f32.mxu0 %v715
  %880 = vmatmul.mubr.f32.gmra.mrb[0].mxu0 %v707
  %v881 = vpop.f32.mrb[0].mxu0
  %v882 = vadd.f32 %v687, %v881
  %v883 = vpop.f32.mrb[0].mxu0
  %v884 = vadd.f32 %v691, %v883
  %885 = vdwg.mxu0
  %886 = vmatprep.subr.mxu0 %v99
  %887 = vmatpush1.msra.mxu0 %v98
  %888 = vmatprep.subr.mxu0 %v101
  %889 = vmatpush1.msra.mxu0 %v100
  %890 = vmatprep.subr.mxu0 %v103
  %891 = vmatpush1.msra.mxu0 %v102
  %892 = vmatprep.subr.mxu0 %v105
  %893 = vmatpush1.msra.mxu0 %v104
  %894 = vmatprep.subr.mxu0 %v107
  %895 = vmatpush1.msra.mxu0 %v106
  %896 = vmatprep.subr.mxu0 %v109
  %897 = vmatpush1.msra.mxu0 %v108
  %898 = vmatprep.subr.mxu0 %v111
  %899 = vmatpush1.msra.mxu0 %v110
  %900 = vmatprep.subr.mxu0 %v113
  %901 = vmatpush1.msra.mxu0 %v112
  %902 = vmatprep.subr.mxu0 %v115
  %903 = vmatpush1.msra.mxu0 %v114
  %904 = vmatprep.subr.mxu0 %v117
  %905 = vmatpush1.msra.mxu0 %v116
  %906 = vmatprep.subr.mxu0 %v119
  %907 = vmatpush1.msra.mxu0 %v118
  %908 = vmatprep.subr.mxu0 %v121
  %909 = vmatpush1.msra.mxu0 %v120
  %910 = vmatprep.subr.mxu0 %v123
  %911 = vmatpush1.msra.mxu0 %v122
  %912 = vmatprep.subr.mxu0 %v125
  %913 = vmatpush1.msra.mxu0 %v124
  %914 = vmatprep.subr.mxu0 %v127
  %915 = vmatpush1.msra.mxu0 %v126
  %916 = vmatprep.subr.mxu0 %v129
  %917 = vmatpush1.msra.mxu0 %v128
  %918 = vmatprep.subr.mxu0 %v131
  %919 = vmatpush1.msra.mxu0 %v130
  %920 = vmatprep.subr.mxu0 %v133
  %921 = vmatpush1.msra.mxu0 %v132
  %922 = vmatprep.subr.mxu0 %v135
  %923 = vmatpush1.msra.mxu0 %v134
  %924 = vmatprep.subr.mxu0 %v137
  %925 = vmatpush1.msra.mxu0 %v136
  %926 = vmatprep.subr.mxu0 %v139
  %927 = vmatpush1.msra.mxu0 %v138
  %928 = vmatprep.subr.mxu0 %v141
  %929 = vmatpush1.msra.mxu0 %v140
  %930 = vmatprep.subr.mxu0 %v143
  %931 = vmatpush1.msra.mxu0 %v142
  %932 = vmatprep.subr.mxu0 %v145
  %933 = vmatpush1.msra.mxu0 %v144
  %934 = vmatprep.subr.mxu0 %v147
  %935 = vmatpush1.msra.mxu0 %v146
  %936 = vmatprep.subr.mxu0 %v149
  %937 = vmatpush1.msra.mxu0 %v148
  %938 = vmatprep.subr.mxu0 %v151
  %939 = vmatpush1.msra.mxu0 %v150
  %940 = vmatprep.subr.mxu0 %v153
  %941 = vmatpush1.msra.mxu0 %v152
  %942 = vmatprep.subr.mxu0 %v155
  %943 = vmatpush1.msra.mxu0 %v154
  %944 = vmatprep.subr.mxu0 %v157
  %945 = vmatpush1.msra.mxu0 %v156
  %946 = vmatprep.subr.mxu0 %v159
  %947 = vmatpush1.msra.mxu0 %v158
  %948 = vmatprep.subr.mxu0 %v161
  %949 = vmatpush1.msra.mxu0 %v160
  %950 = vmatprep.mubr.f32.mxu0 %v716
  %951 = vmatmul.mubr.f32.gmra.mrb[0].mxu0 %v714
  %v952 = vpop.f32.mrb[0].mxu0
  %v953 = vadd.f32 %v882, %v952
  %v954 = vpop.f32.mrb[0].mxu0
  %v955 = vadd.f32 %v884, %v954
  %956 = vdwg.mxu0
  %957 = vmatprep.subr.mxu0 %v163
  %958 = vmatpush1.msra.mxu0 %v162
  %959 = vmatprep.subr.mxu0 %v165
  %960 = vmatpush1.msra.mxu0 %v164
  %961 = vmatprep.subr.mxu0 %v167
  %962 = vmatpush1.msra.mxu0 %v166
  %963 = vmatprep.subr.mxu0 %v169
  %964 = vmatpush1.msra.mxu0 %v168
  %965 = vmatprep.subr.mxu0 %v171
  %966 = vmatpush1.msra.mxu0 %v170
  %967 = vmatprep.subr.mxu0 %v173
  %968 = vmatpush1.msra.mxu0 %v172
  %969 = vmatprep.subr.mxu0 %v175
  %970 = vmatpush1.msra.mxu0 %v174
  %971 = vmatprep.subr.mxu0 %v177
  %972 = vmatpush1.msra.mxu0 %v176
  %973 = vmatprep.subr.mxu0 %v179
  %974 = vmatpush1.msra.mxu0 %v178
  %975 = vmatprep.subr.mxu0 %v181
  %976 = vmatpush1.msra.mxu0 %v180
  %977 = vmatprep.subr.mxu0 %v183
  %978 = vmatpush1.msra.mxu0 %v182
  %979 = vmatprep.subr.mxu0 %v185
  %980 = vmatpush1.msra.mxu0 %v184
  %981 = vmatprep.subr.mxu0 %v187
  %982 = vmatpush1.msra.mxu0 %v186
  %983 = vmatprep.subr.mxu0 %v189
  %984 = vmatpush1.msra.mxu0 %v188
  %985 = vmatprep.subr.mxu0 %v191
  %986 = vmatpush1.msra.mxu0 %v190
  %987 = vmatprep.subr.mxu0 %v193
  %988 = vmatpush1.msra.mxu0 %v192
  %989 = vmatprep.subr.mxu0 %v195
  %990 = vmatpush1.msra.mxu0 %v194
  %991 = vmatprep.subr.mxu0 %v197
  %992 = vmatpush1.msra.mxu0 %v196
  %993 = vmatprep.subr.mxu0 %v199
  %994 = vmatpush1.msra.mxu0 %v198
  %995 = vmatprep.subr.mxu0 %v201
  %996 = vmatpush1.msra.mxu0 %v200
  %997 = vmatprep.subr.mxu0 %v203
  %998 = vmatpush1.msra.mxu0 %v202
  %999 = vmatprep.subr.mxu0 %v205
  %1000 = vmatpush1.msra.mxu0 %v204
  %1001 = vmatprep.subr.mxu0 %v207
  %1002 = vmatpush1.msra.mxu0 %v206
  %1003 = vmatprep.subr.mxu0 %v209
  %1004 = vmatpush1.msra.mxu0 %v208
  %1005 = vmatprep.subr.mxu0 %v211
  %1006 = vmatpush1.msra.mxu0 %v210
  %1007 = vmatprep.subr.mxu0 %v213
  %1008 = vmatpush1.msra.mxu0 %v212
  %1009 = vmatprep.subr.mxu0 %v215
  %1010 = vmatpush1.msra.mxu0 %v214
  %1011 = vmatprep.subr.mxu0 %v217
  %1012 = vmatpush1.msra.mxu0 %v216
  %1013 = vmatprep.subr.mxu0 %v219
  %1014 = vmatpush1.msra.mxu0 %v218
  %1015 = vmatprep.subr.mxu0 %v221
  %1016 = vmatpush1.msra.mxu0 %v220
  %1017 = vmatprep.subr.mxu0 %v223
  %1018 = vmatpush1.msra.mxu0 %v222
  %1019 = vmatprep.subr.mxu0 %v225
  %1020 = vmatpush1.msra.mxu0 %v224
  %1021 = vmatprep.mubr.f32.mxu0 %v732
  %1022 = vmatmul.mubr.f32.gmra.mrb[0].mxu0 %v724
  %v1023 = vpop.f32.mrb[0].mxu0
  %v1024 = vadd.f32 %v953, %v1023
  %v1025 = vpop.f32.mrb[0].mxu0
  %v1026 = vadd.f32 %v955, %v1025
  %1027 = vdwg.mxu0
  %1028 = vmatprep.subr.mxu0 %v227
  %1029 = vmatpush1.msra.mxu0 %v226
  %1030 = vmatprep.subr.mxu0 %v229
  %1031 = vmatpush1.msra.mxu0 %v228
  %1032 = vmatprep.subr.mxu0 %v231
  %1033 = vmatpush1.msra.mxu0 %v230
  %1034 = vmatprep.subr.mxu0 %v233
  %1035 = vmatpush1.msra.mxu0 %v232
  %1036 = vmatprep.subr.mxu0 %v235
  %1037 = vmatpush1.msra.mxu0 %v234
  %1038 = vmatprep.subr.mxu0 %v237
  %1039 = vmatpush1.msra.mxu0 %v236
  %1040 = vmatprep.subr.mxu0 %v239
  %1041 = vmatpush1.msra.mxu0 %v238
  %1042 = vmatprep.subr.mxu0 %v241
  %1043 = vmatpush1.msra.mxu0 %v240
  %1044 = vmatprep.subr.mxu0 %v243
  %1045 = vmatpush1.msra.mxu0 %v242
  %1046 = vmatprep.subr.mxu0 %v245
  %1047 = vmatpush1.msra.mxu0 %v244
  %1048 = vmatprep.subr.mxu0 %v247
  %1049 = vmatpush1.msra.mxu0 %v246
  %1050 = vmatprep.subr.mxu0 %v249
  %1051 = vmatpush1.msra.mxu0 %v248
  %1052 = vmatprep.subr.mxu0 %v251
  %1053 = vmatpush1.msra.mxu0 %v250
  %1054 = vmatprep.subr.mxu0 %v253
  %1055 = vmatpush1.msra.mxu0 %v252
  %1056 = vmatprep.subr.mxu0 %v255
  %1057 = vmatpush1.msra.mxu0 %v254
  %1058 = vmatprep.subr.mxu0 %v257
  %1059 = vmatpush1.msra.mxu0 %v256
  %1060 = vmatprep.subr.mxu0 %v259
  %1061 = vmatpush1.msra.mxu0 %v258
  %1062 = vmatprep.subr.mxu0 %v261
  %1063 = vmatpush1.msra.mxu0 %v260
  %1064 = vmatprep.subr.mxu0 %v263
  %1065 = vmatpush1.msra.mxu0 %v262
  %1066 = vmatprep.subr.mxu0 %v265
  %1067 = vmatpush1.msra.mxu0 %v264
  %1068 = vmatprep.subr.mxu0 %v267
  %1069 = vmatpush1.msra.mxu0 %v266
  %1070 = vmatprep.subr.mxu0 %v269
  %1071 = vmatpush1.msra.mxu0 %v268
  %1072 = vmatprep.subr.mxu0 %v271
  %1073 = vmatpush1.msra.mxu0 %v270
  %1074 = vmatprep.subr.mxu0 %v273
  %1075 = vmatpush1.msra.mxu0 %v272
  %1076 = vmatprep.subr.mxu0 %v275
  %1077 = vmatpush1.msra.mxu0 %v274
  %1078 = vmatprep.subr.mxu0 %v277
  %1079 = vmatpush1.msra.mxu0 %v276
  %1080 = vmatprep.subr.mxu0 %v279
  %1081 = vmatpush1.msra.mxu0 %v278
  %1082 = vmatprep.subr.mxu0 %v281
  %1083 = vmatpush1.msra.mxu0 %v280
  %1084 = vmatprep.subr.mxu0 %v283
  %1085 = vmatpush1.msra.mxu0 %v282
  %1086 = vmatprep.subr.mxu0 %v285
  %1087 = vmatpush1.msra.mxu0 %v284
  %1088 = vmatprep.subr.mxu0 %v287
  %1089 = vmatpush1.msra.mxu0 %v286
  %1090 = vmatprep.subr.mxu0 %v289
  %1091 = vmatpush1.msra.mxu0 %v288
  %1092 = vmatprep.mubr.f32.mxu0 %v733
  %1093 = vmatmul.mubr.f32.gmra.mrb[0].mxu0 %v731
  %v1094 = vpop.f32.mrb[0].mxu0
  %v1095 = vadd.f32 %v1024, %v1094
  %v1096 = vpop.f32.mrb[0].mxu0
  %v1097 = vadd.f32 %v1026, %v1096
  %1098 = vdwg.mxu0
  %1099 = vmatprep.subr.mxu0 %v291
  %1100 = vmatpush1.msra.mxu0 %v290
  %1101 = vmatprep.subr.mxu0 %v293
  %1102 = vmatpush1.msra.mxu0 %v292
  %1103 = vmatprep.subr.mxu0 %v295
  %1104 = vmatpush1.msra.mxu0 %v294
  %1105 = vmatprep.subr.mxu0 %v297
  %1106 = vmatpush1.msra.mxu0 %v296
  %1107 = vmatprep.subr.mxu0 %v299
  %1108 = vmatpush1.msra.mxu0 %v298
  %1109 = vmatprep.subr.mxu0 %v301
  %1110 = vmatpush1.msra.mxu0 %v300
  %1111 = vmatprep.subr.mxu0 %v303
  %1112 = vmatpush1.msra.mxu0 %v302
  %1113 = vmatprep.subr.mxu0 %v305
  %1114 = vmatpush1.msra.mxu0 %v304
  %1115 = vmatprep.subr.mxu0 %v307
  %1116 = vmatpush1.msra.mxu0 %v306
  %1117 = vmatprep.subr.mxu0 %v309
  %1118 = vmatpush1.msra.mxu0 %v308
  %1119 = vmatprep.subr.mxu0 %v311
  %1120 = vmatpush1.msra.mxu0 %v310
  %1121 = vmatprep.subr.mxu0 %v313
  %1122 = vmatpush1.msra.mxu0 %v312
  %1123 = vmatprep.subr.mxu0 %v315
  %1124 = vmatpush1.msra.mxu0 %v314
  %1125 = vmatprep.subr.mxu0 %v317
  %1126 = vmatpush1.msra.mxu0 %v316
  %1127 = vmatprep.subr.mxu0 %v319
  %1128 = vmatpush1.msra.mxu0 %v318
  %1129 = vmatprep.subr.mxu0 %v321
  %1130 = vmatpush1.msra.mxu0 %v320
  %1131 = vmatprep.subr.mxu0 %v323
  %1132 = vmatpush1.msra.mxu0 %v322
  %1133 = vmatprep.subr.mxu0 %v325
  %1134 = vmatpush1.msra.mxu0 %v324
  %1135 = vmatprep.subr.mxu0 %v327
  %1136 = vmatpush1.msra.mxu0 %v326
  %1137 = vmatprep.subr.mxu0 %v329
  %1138 = vmatpush1.msra.mxu0 %v328
  %1139 = vmatprep.subr.mxu0 %v331
  %1140 = vmatpush1.msra.mxu0 %v330
  %1141 = vmatprep.subr.mxu0 %v333
  %1142 = vmatpush1.msra.mxu0 %v332
  %1143 = vmatprep.subr.mxu0 %v335
  %1144 = vmatpush1.msra.mxu0 %v334
  %1145 = vmatprep.subr.mxu0 %v337
  %1146 = vmatpush1.msra.mxu0 %v336
  %1147 = vmatprep.subr.mxu0 %v339
  %1148 = vmatpush1.msra.mxu0 %v338
  %1149 = vmatprep.subr.mxu0 %v341
  %1150 = vmatpush1.msra.mxu0 %v340
  %1151 = vmatprep.subr.mxu0 %v343
  %1152 = vmatpush1.msra.mxu0 %v342
  %1153 = vmatprep.subr.mxu0 %v345
  %1154 = vmatpush1.msra.mxu0 %v344
  %1155 = vmatprep.subr.mxu0 %v347
  %1156 = vmatpush1.msra.mxu0 %v346
  %1157 = vmatprep.subr.mxu0 %v349
  %1158 = vmatpush1.msra.mxu0 %v348
  %1159 = vmatprep.subr.mxu0 %v351
  %1160 = vmatpush1.msra.mxu0 %v350
  %1161 = vmatprep.subr.mxu0 %v353
  %1162 = vmatpush1.msra.mxu0 %v352
  %1163 = vmatprep.mubr.f32.mxu0 %v749
  %1164 = vmatmul.mubr.f32.gmra.mrb[0].mxu0 %v741
  %v1165 = vpop.f32.mrb[0].mxu0
  %v1166 = vadd.f32 %v1095, %v1165
  %v1167 = vpop.f32.mrb[0].mxu0
  %v1168 = vadd.f32 %v1097, %v1167
  %1169 = vdwg.mxu0
  %1170 = vmatprep.subr.mxu0 %v355
  %1171 = vmatpush1.msra.mxu0 %v354
  %1172 = vmatprep.subr.mxu0 %v357
  %1173 = vmatpush1.msra.mxu0 %v356
  %1174 = vmatprep.subr.mxu0 %v359
  %1175 = vmatpush1.msra.mxu0 %v358
  %1176 = vmatprep.subr.mxu0 %v361
  %1177 = vmatpush1.msra.mxu0 %v360
  %1178 = vmatprep.subr.mxu0 %v363
  %1179 = vmatpush1.msra.mxu0 %v362
  %1180 = vmatprep.subr.mxu0 %v365
  %1181 = vmatpush1.msra.mxu0 %v364
  %1182 = vmatprep.subr.mxu0 %v367
  %1183 = vmatpush1.msra.mxu0 %v366
  %1184 = vmatprep.subr.mxu0 %v369
  %1185 = vmatpush1.msra.mxu0 %v368
  %1186 = vmatprep.subr.mxu0 %v371
  %1187 = vmatpush1.msra.mxu0 %v370
  %1188 = vmatprep.subr.mxu0 %v373
  %1189 = vmatpush1.msra.mxu0 %v372
  %1190 = vmatprep.subr.mxu0 %v375
  %1191 = vmatpush1.msra.mxu0 %v374
  %1192 = vmatprep.subr.mxu0 %v377
  %1193 = vmatpush1.msra.mxu0 %v376
  %1194 = vmatprep.subr.mxu0 %v379
  %1195 = vmatpush1.msra.mxu0 %v378
  %1196 = vmatprep.subr.mxu0 %v381
  %1197 = vmatpush1.msra.mxu0 %v380
  %1198 = vmatprep.subr.mxu0 %v383
  %1199 = vmatpush1.msra.mxu0 %v382
  %1200 = vmatprep.subr.mxu0 %v385
  %1201 = vmatpush1.msra.mxu0 %v384
  %1202 = vmatprep.subr.mxu0 %v387
  %1203 = vmatpush1.msra.mxu0 %v386
  %1204 = vmatprep.subr.mxu0 %v389
  %1205 = vmatpush1.msra.mxu0 %v388
  %1206 = vmatprep.subr.mxu0 %v391
  %1207 = vmatpush1.msra.mxu0 %v390
  %1208 = vmatprep.subr.mxu0 %v393
  %1209 = vmatpush1.msra.mxu0 %v392
  %1210 = vmatprep.subr.mxu0 %v395
  %1211 = vmatpush1.msra.mxu0 %v394
  %1212 = vmatprep.subr.mxu0 %v397
  %1213 = vmatpush1.msra.mxu0 %v396
  %1214 = vmatprep.subr.mxu0 %v399
  %1215 = vmatpush1.msra.mxu0 %v398
  %1216 = vmatprep.subr.mxu0 %v401
  %1217 = vmatpush1.msra.mxu0 %v400
  %1218 = vmatprep.subr.mxu0 %v403
  %1219 = vmatpush1.msra.mxu0 %v402
  %1220 = vmatprep.subr.mxu0 %v405
  %1221 = vmatpush1.msra.mxu0 %v404
  %1222 = vmatprep.subr.mxu0 %v407
  %1223 = vmatpush1.msra.mxu0 %v406
  %1224 = vmatprep.subr.mxu0 %v409
  %1225 = vmatpush1.msra.mxu0 %v408
  %1226 = vmatprep.subr.mxu0 %v411
  %1227 = vmatpush1.msra.mxu0 %v410
  %1228 = vmatprep.subr.mxu0 %v413
  %1229 = vmatpush1.msra.mxu0 %v412
  %1230 = vmatprep.subr.mxu0 %v415
  %1231 = vmatpush1.msra.mxu0 %v414
  %1232 = vmatprep.subr.mxu0 %v417
  %1233 = vmatpush1.msra.mxu0 %v416
  %1234 = vmatprep.mubr.f32.mxu0 %v750
  %1235 = vmatmul.mubr.f32.gmra.mrb[0].mxu0 %v748
  %v1236 = vpop.f32.mrb[0].mxu0
  %v1237 = vadd.f32 %v1166, %v1236
  %v1238 = vpop.f32.mrb[0].mxu0
  %v1239 = vadd.f32 %v1168, %v1238
  %1240 = vdwg.mxu0
  %1241 = vmatprep.subr.mxu0 %v419
  %1242 = vmatpush1.msra.mxu0 %v418
  %1243 = vmatprep.subr.mxu0 %v421
  %1244 = vmatpush1.msra.mxu0 %v420
  %1245 = vmatprep.subr.mxu0 %v423
  %1246 = vmatpush1.msra.mxu0 %v422
  %1247 = vmatprep.subr.mxu0 %v425
  %1248 = vmatpush1.msra.mxu0 %v424
  %1249 = vmatprep.subr.mxu0 %v427
  %1250 = vmatpush1.msra.mxu0 %v426
  %1251 = vmatprep.subr.mxu0 %v429
  %1252 = vmatpush1.msra.mxu0 %v428
  %1253 = vmatprep.subr.mxu0 %v431
  %1254 = vmatpush1.msra.mxu0 %v430
  %1255 = vmatprep.subr.mxu0 %v433
  %1256 = vmatpush1.msra.mxu0 %v432
  %1257 = vmatprep.subr.mxu0 %v435
  %1258 = vmatpush1.msra.mxu0 %v434
  %1259 = vmatprep.subr.mxu0 %v437
  %1260 = vmatpush1.msra.mxu0 %v436
  %1261 = vmatprep.subr.mxu0 %v439
  %1262 = vmatpush1.msra.mxu0 %v438
  %1263 = vmatprep.subr.mxu0 %v441
  %1264 = vmatpush1.msra.mxu0 %v440
  %1265 = vmatprep.subr.mxu0 %v443
  %1266 = vmatpush1.msra.mxu0 %v442
  %1267 = vmatprep.subr.mxu0 %v445
  %1268 = vmatpush1.msra.mxu0 %v444
  %1269 = vmatprep.subr.mxu0 %v447
  %1270 = vmatpush1.msra.mxu0 %v446
  %1271 = vmatprep.subr.mxu0 %v449
  %1272 = vmatpush1.msra.mxu0 %v448
  %1273 = vmatprep.subr.mxu0 %v451
  %1274 = vmatpush1.msra.mxu0 %v450
  %1275 = vmatprep.subr.mxu0 %v453
  %1276 = vmatpush1.msra.mxu0 %v452
  %1277 = vmatprep.subr.mxu0 %v455
  %1278 = vmatpush1.msra.mxu0 %v454
  %1279 = vmatprep.subr.mxu0 %v457
  %1280 = vmatpush1.msra.mxu0 %v456
  %1281 = vmatprep.subr.mxu0 %v459
  %1282 = vmatpush1.msra.mxu0 %v458
  %1283 = vmatprep.subr.mxu0 %v461
  %1284 = vmatpush1.msra.mxu0 %v460
  %1285 = vmatprep.subr.mxu0 %v463
  %1286 = vmatpush1.msra.mxu0 %v462
  %1287 = vmatprep.subr.mxu0 %v465
  %1288 = vmatpush1.msra.mxu0 %v464
  %1289 = vmatprep.subr.mxu0 %v467
  %1290 = vmatpush1.msra.mxu0 %v466
  %1291 = vmatprep.subr.mxu0 %v469
  %1292 = vmatpush1.msra.mxu0 %v468
  %1293 = vmatprep.subr.mxu0 %v471
  %1294 = vmatpush1.msra.mxu0 %v470
  %1295 = vmatprep.subr.mxu0 %v473
  %1296 = vmatpush1.msra.mxu0 %v472
  %1297 = vmatprep.subr.mxu0 %v475
  %1298 = vmatpush1.msra.mxu0 %v474
  %1299 = vmatprep.subr.mxu0 %v477
  %1300 = vmatpush1.msra.mxu0 %v476
  %1301 = vmatprep.subr.mxu0 %v479
  %1302 = vmatpush1.msra.mxu0 %v478
  %1303 = vmatprep.subr.mxu0 %v481
  %1304 = vmatpush1.msra.mxu0 %v480
  %1305 = vmatprep.mubr.f32.mxu0 %v766
  %1306 = vmatmul.mubr.f32.gmra.mrb[0].mxu0 %v758
  %v1307 = vpop.f32.mrb[0].mxu0
  %v1308 = vadd.f32 %v1237, %v1307
  %v1309 = vpop.f32.mrb[0].mxu0
  %v1310 = vadd.f32 %v1239, %v1309
  %1311 = vdwg.mxu0
  %1312 = vmatprep.subr.mxu0 %v483
  %1313 = vmatpush1.msra.mxu0 %v482
  %1314 = vmatprep.subr.mxu0 %v485
  %1315 = vmatpush1.msra.mxu0 %v484
  %1316 = vmatprep.subr.mxu0 %v487
  %1317 = vmatpush1.msra.mxu0 %v486
  %1318 = vmatprep.subr.mxu0 %v489
  %1319 = vmatpush1.msra.mxu0 %v488
  %1320 = vmatprep.subr.mxu0 %v491
  %1321 = vmatpush1.msra.mxu0 %v490
  %1322 = vmatprep.subr.mxu0 %v493
  %1323 = vmatpush1.msra.mxu0 %v492
  %1324 = vmatprep.subr.mxu0 %v495
  %1325 = vmatpush1.msra.mxu0 %v494
  %1326 = vmatprep.subr.mxu0 %v497
  %1327 = vmatpush1.msra.mxu0 %v496
  %1328 = vmatprep.subr.mxu0 %v499
  %1329 = vmatpush1.msra.mxu0 %v498
  %1330 = vmatprep.subr.mxu0 %v501
  %1331 = vmatpush1.msra.mxu0 %v500
  %1332 = vmatprep.subr.mxu0 %v503
  %1333 = vmatpush1.msra.mxu0 %v502
  %1334 = vmatprep.subr.mxu0 %v505
  %1335 = vmatpush1.msra.mxu0 %v504
  %1336 = vmatprep.subr.mxu0 %v507
  %1337 = vmatpush1.msra.mxu0 %v506
  %1338 = vmatprep.subr.mxu0 %v509
  %1339 = vmatpush1.msra.mxu0 %v508
  %1340 = vmatprep.subr.mxu0 %v511
  %1341 = vmatpush1.msra.mxu0 %v510
  %1342 = vmatprep.subr.mxu0 %v513
  %1343 = vmatpush1.msra.mxu0 %v512
  %1344 = vmatprep.subr.mxu0 %v515
  %1345 = vmatpush1.msra.mxu0 %v514
  %1346 = vmatprep.subr.mxu0 %v517
  %1347 = vmatpush1.msra.mxu0 %v516
  %1348 = vmatprep.subr.mxu0 %v519
  %1349 = vmatpush1.msra.mxu0 %v518
  %1350 = vmatprep.subr.mxu0 %v521
  %1351 = vmatpush1.msra.mxu0 %v520
  %1352 = vmatprep.subr.mxu0 %v523
  %1353 = vmatpush1.msra.mxu0 %v522
  %1354 = vmatprep.subr.mxu0 %v525
  %1355 = vmatpush1.msra.mxu0 %v524
  %1356 = vmatprep.subr.mxu0 %v527
  %1357 = vmatpush1.msra.mxu0 %v526
  %1358 = vmatprep.subr.mxu0 %v529
  %1359 = vmatpush1.msra.mxu0 %v528
  %1360 = vmatprep.subr.mxu0 %v531
  %1361 = vmatpush1.msra.mxu0 %v530
  %1362 = vmatprep.subr.mxu0 %v533
  %1363 = vmatpush1.msra.mxu0 %v532
  %1364 = vmatprep.subr.mxu0 %v535
  %1365 = vmatpush1.msra.mxu0 %v534
  %1366 = vmatprep.subr.mxu0 %v537
  %1367 = vmatpush1.msra.mxu0 %v536
  %1368 = vmatprep.subr.mxu0 %v539
  %1369 = vmatpush1.msra.mxu0 %v538
  %1370 = vmatprep.subr.mxu0 %v541
  %1371 = vmatpush1.msra.mxu0 %v540
  %1372 = vmatprep.subr.mxu0 %v543
  %1373 = vmatpush1.msra.mxu0 %v542
  %1374 = vmatprep.subr.mxu0 %v545
  %1375 = vmatpush1.msra.mxu0 %v544
  %1376 = vmatprep.mubr.f32.mxu0 %v767
  %1377 = vmatmul.mubr.f32.gmra.mrb[0].mxu0 %v765
  %v1378 = vpop.f32.mrb[0].mxu0
  %v1379 = vadd.f32 %v1308, %v1378
  %v1380 = vpop.f32.mrb[0].mxu0
  %v1381 = vadd.f32 %v1310, %v1380
  %1382 = vdwg.mxu0
  %1383 = vmatprep.subr.mxu0 %v547
  %1384 = vmatpush1.msra.mxu0 %v546
  %1385 = vmatprep.subr.mxu0 %v549
  %1386 = vmatpush1.msra.mxu0 %v548
  %1387 = vmatprep.subr.mxu0 %v551
  %1388 = vmatpush1.msra.mxu0 %v550
  %1389 = vmatprep.subr.mxu0 %v553
  %1390 = vmatpush1.msra.mxu0 %v552
  %1391 = vmatprep.subr.mxu0 %v555
  %1392 = vmatpush1.msra.mxu0 %v554
  %1393 = vmatprep.subr.mxu0 %v557
  %1394 = vmatpush1.msra.mxu0 %v556
  %1395 = vmatprep.subr.mxu0 %v559
  %1396 = vmatpush1.msra.mxu0 %v558
  %1397 = vmatprep.subr.mxu0 %v561
  %1398 = vmatpush1.msra.mxu0 %v560
  %1399 = vmatprep.subr.mxu0 %v563
  %1400 = vmatpush1.msra.mxu0 %v562
  %1401 = vmatprep.subr.mxu0 %v565
  %1402 = vmatpush1.msra.mxu0 %v564
  %1403 = vmatprep.subr.mxu0 %v567
  %1404 = vmatpush1.msra.mxu0 %v566
  %1405 = vmatprep.subr.mxu0 %v569
  %1406 = vmatpush1.msra.mxu0 %v568
  %1407 = vmatprep.subr.mxu0 %v571
  %1408 = vmatpush1.msra.mxu0 %v570
  %1409 = vmatprep.subr.mxu0 %v573
  %1410 = vmatpush1.msra.mxu0 %v572
  %1411 = vmatprep.subr.mxu0 %v575
  %1412 = vmatpush1.msra.mxu0 %v574
  %1413 = vmatprep.subr.mxu0 %v577
  %1414 = vmatpush1.msra.mxu0 %v576
  %1415 = vmatprep.subr.mxu0 %v579
  %1416 = vmatpush1.msra.mxu0 %v578
  %1417 = vmatprep.subr.mxu0 %v581
  %1418 = vmatpush1.msra.mxu0 %v580
  %1419 = vmatprep.subr.mxu0 %v583
  %1420 = vmatpush1.msra.mxu0 %v582
  %1421 = vmatprep.subr.mxu0 %v585
  %1422 = vmatpush1.msra.mxu0 %v584
  %1423 = vmatprep.subr.mxu0 %v587
  %1424 = vmatpush1.msra.mxu0 %v586
  %1425 = vmatprep.subr.mxu0 %v589
  %1426 = vmatpush1.msra.mxu0 %v588
  %1427 = vmatprep.subr.mxu0 %v591
  %1428 = vmatpush1.msra.mxu0 %v590
  %1429 = vmatprep.subr.mxu0 %v593
  %1430 = vmatpush1.msra.mxu0 %v592
  %1431 = vmatprep.subr.mxu0 %v595
  %1432 = vmatpush1.msra.mxu0 %v594
  %1433 = vmatprep.subr.mxu0 %v597
  %1434 = vmatpush1.msra.mxu0 %v596
  %1435 = vmatprep.subr.mxu0 %v599
  %1436 = vmatpush1.msra.mxu0 %v598
  %1437 = vmatprep.subr.mxu0 %v601
  %1438 = vmatpush1.msra.mxu0 %v600
  %1439 = vmatprep.subr.mxu0 %v603
  %1440 = vmatpush1.msra.mxu0 %v602
  %1441 = vmatprep.subr.mxu0 %v605
  %1442 = vmatpush1.msra.mxu0 %v604
  %1443 = vmatprep.subr.mxu0 %v607
  %1444 = vmatpush1.msra.mxu0 %v606
  %1445 = vmatprep.subr.mxu0 %v609
  %1446 = vmatpush1.msra.mxu0 %v608
  %1447 = vmatprep.mubr.f32.mxu0 %v783
  %1448 = vmatmul.mubr.f32.gmra.mrb[0].mxu0 %v775
  %v1449 = vpop.f32.mrb[0].mxu0
  %v1450 = vadd.f32 %v1379, %v1449
  %v1451 = vpop.f32.mrb[0].mxu0
  %v1452 = vadd.f32 %v1381, %v1451
  %1453 = vdwg.mxu0
  %1454 = vmatprep.subr.mxu0 %v611
  %1455 = vmatpush1.msra.mxu0 %v610
  %1456 = vmatprep.subr.mxu0 %v613
  %1457 = vmatpush1.msra.mxu0 %v612
  %1458 = vmatprep.subr.mxu0 %v615
  %1459 = vmatpush1.msra.mxu0 %v614
  %1460 = vmatprep.subr.mxu0 %v617
  %1461 = vmatpush1.msra.mxu0 %v616
  %1462 = vmatprep.subr.mxu0 %v619
  %1463 = vmatpush1.msra.mxu0 %v618
  %1464 = vmatprep.subr.mxu0 %v621
  %1465 = vmatpush1.msra.mxu0 %v620
  %1466 = vmatprep.subr.mxu0 %v623
  %1467 = vmatpush1.msra.mxu0 %v622
  %1468 = vmatprep.subr.mxu0 %v625
  %1469 = vmatpush1.msra.mxu0 %v624
  %1470 = vmatprep.subr.mxu0 %v627
  %1471 = vmatpush1.msra.mxu0 %v626
  %1472 = vmatprep.subr.mxu0 %v629
  %1473 = vmatpush1.msra.mxu0 %v628
  %1474 = vmatprep.subr.mxu0 %v631
  %1475 = vmatpush1.msra.mxu0 %v630
  %1476 = vmatprep.subr.mxu0 %v633
  %1477 = vmatpush1.msra.mxu0 %v632
  %1478 = vmatprep.subr.mxu0 %v635
  %1479 = vmatpush1.msra.mxu0 %v634
  %1480 = vmatprep.subr.mxu0 %v637
  %1481 = vmatpush1.msra.mxu0 %v636
  %1482 = vmatprep.subr.mxu0 %v639
  %1483 = vmatpush1.msra.mxu0 %v638
  %1484 = vmatprep.subr.mxu0 %v641
  %1485 = vmatpush1.msra.mxu0 %v640
  %1486 = vmatprep.subr.mxu0 %v643
  %1487 = vmatpush1.msra.mxu0 %v642
  %1488 = vmatprep.subr.mxu0 %v645
  %1489 = vmatpush1.msra.mxu0 %v644
  %1490 = vmatprep.subr.mxu0 %v647
  %1491 = vmatpush1.msra.mxu0 %v646
  %1492 = vmatprep.subr.mxu0 %v649
  %1493 = vmatpush1.msra.mxu0 %v648
  %1494 = vmatprep.subr.mxu0 %v651
  %1495 = vmatpush1.msra.mxu0 %v650
  %1496 = vmatprep.subr.mxu0 %v653
  %1497 = vmatpush1.msra.mxu0 %v652
  %1498 = vmatprep.subr.mxu0 %v655
  %1499 = vmatpush1.msra.mxu0 %v654
  %1500 = vmatprep.subr.mxu0 %v657
  %1501 = vmatpush1.msra.mxu0 %v656
  %1502 = vmatprep.subr.mxu0 %v659
  %1503 = vmatpush1.msra.mxu0 %v658
  %1504 = vmatprep.subr.mxu0 %v661
  %1505 = vmatpush1.msra.mxu0 %v660
  %1506 = vmatprep.subr.mxu0 %v663
  %1507 = vmatpush1.msra.mxu0 %v662
  %1508 = vmatprep.subr.mxu0 %v665
  %1509 = vmatpush1.msra.mxu0 %v664
  %1510 = vmatprep.subr.mxu0 %v667
  %1511 = vmatpush1.msra.mxu0 %v666
  %1512 = vmatprep.subr.mxu0 %v669
  %1513 = vmatpush1.msra.mxu0 %v668
  %1514 = vmatprep.subr.mxu0 %v671
  %1515 = vmatpush1.msra.mxu0 %v670
  %1516 = vmatprep.subr.mxu0 %v673
  %1517 = vmatpush1.msra.mxu0 %v672
  %1518 = vmatprep.mubr.f32.mxu0 %v784
  %1519 = vmatmul.mubr.f32.gmra.mrb[0].mxu0 %v782
  %v1520 = vpop.f32.mrb[0].mxu0
  %v1521 = vadd.f32 %v1450, %v1520
  %v1522 = vpop.f32.mrb[0].mxu0
  %v1523 = vadd.f32 %v1452, %v1522
  %1524 = vdwg.mxu0
  %1525 = vmatprep.subr.mxu0 %v675
  %1526 = vmatpush1.msra.mxu0 %v674
  %1527 = vmatprep.subr.mxu0 %v677
  %1528 = vmatpush1.msra.mxu0 %v676
  %1529 = vmatprep.subr.mxu0 %v679
  %1530 = vmatpush1.msra.mxu0 %v678
  %1531 = vmatprep.subr.mxu0 %v681
  %1532 = vmatpush1.msra.mxu0 %v680
  %1533 = vmatprep.subr.mxu0 0.0
  %1534 = vmatpush1.msra.mxu0 0.0
  %1535 = vmatprep.subr.mxu0 0.0
  %1536 = vmatpush1.msra.mxu0 0.0
  %1537 = vmatprep.subr.mxu0 0.0
  %1538 = vmatpush1.msra.mxu0 0.0
  %1539 = vmatprep.subr.mxu0 0.0
  %1540 = vmatpush1.msra.mxu0 0.0
  %1541 = vmatprep.subr.mxu0 0.0
  %1542 = vmatpush1.msra.mxu0 0.0
  %1543 = vmatprep.subr.mxu0 0.0
  %1544 = vmatpush1.msra.mxu0 0.0
  %1545 = vmatprep.subr.mxu0 0.0
  %1546 = vmatpush1.msra.mxu0 0.0
  %1547 = vmatprep.subr.mxu0 0.0
  %1548 = vmatpush1.msra.mxu0 0.0
  %1549 = vmatprep.subr.mxu0 0.0
  %1550 = vmatpush1.msra.mxu0 0.0
  %1551 = vmatprep.subr.mxu0 0.0
  %1552 = vmatpush1.msra.mxu0 0.0
  %1553 = vmatprep.subr.mxu0 0.0
  %1554 = vmatpush1.msra.mxu0 0.0
  %1555 = vmatprep.subr.mxu0 0.0
  %1556 = vmatpush1.msra.mxu0 0.0
  %1557 = vmatprep.subr.mxu0 0.0
  %1558 = vmatpush1.msra.mxu0 0.0
  %1559 = vmatprep.subr.mxu0 0.0
  %1560 = vmatpush1.msra.mxu0 0.0
  %1561 = vmatprep.subr.mxu0 0.0
  %1562 = vmatpush1.msra.mxu0 0.0
  %1563 = vmatprep.subr.mxu0 0.0
  %1564 = vmatpush1.msra.mxu0 0.0
  %1565 = vmatprep.subr.mxu0 0.0
  %1566 = vmatpush1.msra.mxu0 0.0
  %1567 = vmatprep.subr.mxu0 0.0
  %1568 = vmatpush1.msra.mxu0 0.0
  %1569 = vmatprep.subr.mxu0 0.0
  %1570 = vmatpush1.msra.mxu0 0.0
  %1571 = vmatprep.subr.mxu0 0.0
  %1572 = vmatpush1.msra.mxu0 0.0
  %1573 = vmatprep.subr.mxu0 0.0
  %1574 = vmatpush1.msra.mxu0 0.0
  %1575 = vmatprep.subr.mxu0 0.0
  %1576 = vmatpush1.msra.mxu0 0.0
  %1577 = vmatprep.subr.mxu0 0.0
  %1578 = vmatpush1.msra.mxu0 0.0
  %1579 = vmatprep.subr.mxu0 0.0
  %1580 = vmatpush1.msra.mxu0 0.0
  %1581 = vmatprep.subr.mxu0 0.0
  %1582 = vmatpush1.msra.mxu0 0.0
  %1583 = vmatprep.subr.mxu0 0.0
  %1584 = vmatpush1.msra.mxu0 0.0
  %1585 = vmatprep.subr.mxu0 0.0
  %1586 = vmatpush1.msra.mxu0 0.0
  %1587 = vmatprep.subr.mxu0 0.0
  %1588 = vmatpush1.msra.mxu0 0.0
  %1589 = vmatprep.mubr.f32.mxu0 0.0
  %1590 = vmatmul.mubr.f32.gmra.mrb[0].mxu0 %v813
  %v1591 = vpop.f32.mrb[0].mxu0
  %v1592 = vadd.f32 %v1521, %v1591
  %v1593 = vpop.f32.mrb[0].mxu0
  %v1594 = vadd.f32 %v1523, %v1593
  %1595 = vdwg.mxu0
  %v1596 = vmax.f32 %v1592, 0.0
  %v1597 = vmax.f32 %v1594, 0.0
  %v1598 = vld [vmem:[%s3] sm:$0xff]
  %v1599 = vld [vmem:[%s3 + $0x8] sm:$0xff]
  %v1600 = vld [vmem:[%s3 + $0x10] sm:$0xff]
  %v1601 = vld [vmem:[%s3 + $0x18] sm:$0xff]
  %v1602 = vld [vmem:[%s3 + $0x20] sm:$0xff]
  %v1603 = vld [vmem:[%s3 + $0x28] sm:$0xff]
  %v1604 = vld [vmem:[%s3 + $0x30] sm:$0xff]
  %v1605 = vld [vmem:[%s3 + $0x38] sm:$0xff]
  %v1606 = vld [vmem:[%s3 + $0x40] sm:$0xff]
  %v1607 = vld [vmem:[%s3 + $0x48] sm:$0xff]
  %v1608 = vld [vmem:[%s3 + $0x50] sm:$0xff]
  %v1609 = vld [vmem:[%s3 + $0x58] sm:$0xff]
  %v1610 = vld [vmem:[%s3 + $0x60] sm:$0xff]
  %v1611 = vld [vmem:[%s3 + $0x68] sm:$0xff]
  %v1612 = vld [vmem:[%s3 + $0x70] sm:$0xff]
  %v1613 = vld [vmem:[%s3 + $0x78] sm:$0xff]
  %v1614 = vld [vmem:[%s3 + $0x80] sm:$0xff]
  %v1615 = vld [vmem:[%s3 + $0x88] sm:$0xff]
  %v1616 = vld [vmem:[%s3 + $0x90] sm:$0xff]
  %v1617 = vld [vmem:[%s3 + $0x98] sm:$0xff]
  %v1618 = vld [vmem:[%s3 + $0xa0] sm:$0xff]
  %v1619 = vld [vmem:[%s3 + $0xa8] sm:$0xff]
  %v1620 = vld [vmem:[%s3 + $0xb0] sm:$0xff]
  %v1621 = vld [vmem:[%s3 + $0xb8] sm:$0xff]
  %v1622 = vld [vmem:[%s3 + $0xc0] sm:$0xff]
  %v1623 = vld [vmem:[%s3 + $0xc8] sm:$0xff]
  %v1624 = vld [vmem:[%s3 + $0xd0] sm:$0xff]
  %v1625 = vld [vmem:[%s3 + $0xd8] sm:$0xff]
  %v1626 = vld [vmem:[%s3 + $0xe0] sm:$0xff]
  %v1627 = vld [vmem:[%s3 + $0xe8] sm:$0xff]
  %v1628 = vld [vmem:[%s3 + $0xf0] sm:$0xff]
  %v1629 = vld [vmem:[%s3 + $0xf8] sm:$0xff]
  %v1630 = vld [vmem:[%s4] sm:$0x1]
  %v1632 = vlaneseq
  %v1633 = vshrl.u32 %v1632, 7
  %v1634 = vsub.s32 0, %v1633
  %v1635 = vrot.slane %v1630, %v1634
  %1637 = vmatprep.subr.mxu0 0.0
  %1638 = vmatpush1.msra.mxu0 %v1598
  %1639 = vmatprep.subr.mxu0 0.0
  %1640 = vmatpush1.msra.mxu0 %v1599
  %1641 = vmatprep.subr.mxu0 0.0
  %1642 = vmatpush1.msra.mxu0 %v1600
  %1643 = vmatprep.subr.mxu0 0.0
  %1644 = vmatpush1.msra.mxu0 %v1601
  %1645 = vmatprep.subr.mxu0 0.0
  %1646 = vmatpush1.msra.mxu0 %v1602
  %1647 = vmatprep.subr.mxu0 0.0
  %1648 = vmatpush1.msra.mxu0 %v1603
  %1649 = vmatprep.subr.mxu0 0.0
  %1650 = vmatpush1.msra.mxu0 %v1604
  %1651 = vmatprep.subr.mxu0 0.0
  %1652 = vmatpush1.msra.mxu0 %v1605
  %1653 = vmatprep.subr.mxu0 0.0
  %1654 = vmatpush1.msra.mxu0 %v1606
  %1655 = vmatprep.subr.mxu0 0.0
  %1656 = vmatpush1.msra.mxu0 %v1607
  %1657 = vmatprep.subr.mxu0 0.0
  %1658 = vmatpush1.msra.mxu0 %v1608
  %1659 = vmatprep.subr.mxu0 0.0
  %1660 = vmatpush1.msra.mxu0 %v1609
  %1661 = vmatprep.subr.mxu0 0.0
  %1662 = vmatpush1.msra.mxu0 %v1610
  %1663 = vmatprep.subr.mxu0 0.0
  %1664 = vmatpush1.msra.mxu0 %v1611
  %1665 = vmatprep.subr.mxu0 0.0
  %1666 = vmatpush1.msra.mxu0 %v1612
  %1667 = vmatprep.subr.mxu0 0.0
  %1668 = vmatpush1.msra.mxu0 %v1613
  %1669 = vmatprep.subr.mxu0 0.0
  %1670 = vmatpush1.msra.mxu0 %v1614
  %1671 = vmatprep.subr.mxu0 0.0
  %1672 = vmatpush1.msra.mxu0 %v1615
  %1673 = vmatprep.subr.mxu0 0.0
  %1674 = vmatpush1.msra.mxu0 %v1616
  %1675 = vmatprep.subr.mxu0 0.0
  %1676 = vmatpush1.msra.mxu0 %v1617
  %1677 = vmatprep.subr.mxu0 0.0
  %1678 = vmatpush1.msra.mxu0 %v1618
  %1679 = vmatprep.subr.mxu0 0.0
  %1680 = vmatpush1.msra.mxu0 %v1619
  %1681 = vmatprep.subr.mxu0 0.0
  %1682 = vmatpush1.msra.mxu0 %v1620
  %1683 = vmatprep.subr.mxu0 0.0
  %1684 = vmatpush1.msra.mxu0 %v1621
  %1685 = vmatprep.subr.mxu0 0.0
  %1686 = vmatpush1.msra.mxu0 %v1622
  %1687 = vmatprep.subr.mxu0 0.0
  %1688 = vmatpush1.msra.mxu0 %v1623
  %1689 = vmatprep.subr.mxu0 0.0
  %1690 = vmatpush1.msra.mxu0 %v1624
  %1691 = vmatprep.subr.mxu0 0.0
  %1692 = vmatpush1.msra.mxu0 %v1625
  %1693 = vmatprep.subr.mxu0 0.0
  %1694 = vmatpush1.msra.mxu0 %v1626
  %1695 = vmatprep.subr.mxu0 0.0
  %1696 = vmatpush1.msra.mxu0 %v1627
  %1697 = vmatprep.subr.mxu0 0.0
  %1698 = vmatpush1.msra.mxu0 %v1628
  %1699 = vmatprep.subr.mxu0 0.0
  %1700 = vmatpush1.msra.mxu0 %v1629
  %1701 = vmatprep.mubr.f32.mxu0 %v1597
  %1702 = vmatmul.mubr.f32.gmra.mrb[0].mxu0 %v1596
  %v1703 = vpop.f32.mrb[0].mxu0
  %v1704 = vadd.f32 %v1635, %v1703
  %v1705 = vpop.f32.mrb[0].mxu0
  %1706 = vdwg.mxu0
  %v1707 = vmax.f32 %v1704, 0.0
  %v1708 = vld [vmem:[%s5] sm:$0xff]
  %v1709 = vld [vmem:[%s5 + $0x8] sm:$0xff]
  %v1710 = vld [vmem:[%s5 + $0x10] sm:$0xff]
  %v1711 = vld [vmem:[%s5 + $0x18] sm:$0xff]
  %v1712 = vld [vmem:[%s5 + $0x20] sm:$0xff]
  %v1713 = vld [vmem:[%s5 + $0x28] sm:$0xff]
  %v1714 = vld [vmem:[%s5 + $0x30] sm:$0xff]
  %v1715 = vld [vmem:[%s5 + $0x38] sm:$0xff]
  %v1716 = vld [vmem:[%s5 + $0x40] sm:$0xff]
  %v1717 = vld [vmem:[%s5 + $0x48] sm:$0xff]
  %v1718 = vld [vmem:[%s5 + $0x50] sm:$0xff]
  %v1719 = vld [vmem:[%s5 + $0x58] sm:$0xff]
  %v1720 = vld [vmem:[%s5 + $0x60] sm:$0xff]
  %v1721 = vld [vmem:[%s5 + $0x68] sm:$0xff]
  %v1722 = vld [vmem:[%s5 + $0x70] sm:$0xff]
  %v1723 = vld [vmem:[%s5 + $0x78] sm:$0xff]
  %v1724 = vld [vmem:[#allocation2] sm:$0x1]
  %v1726 = vlaneseq
  %v1727 = vshrl.u32 %v1726, 7
  %v1728 = vsub.s32 0, %v1727
  %v1729 = vrot.slane %v1724, %v1728
  %1731 = vmatprep.subr.mxu0 0.0
  %1732 = vmatpush1.msra.mxu0 %v1708
  %1733 = vmatprep.subr.mxu0 0.0
  %1734 = vmatpush1.msra.mxu0 %v1709
  %1735 = vmatprep.subr.mxu0 0.0
  %1736 = vmatpush1.msra.mxu0 %v1710
  %1737 = vmatprep.subr.mxu0 0.0
  %1738 = vmatpush1.msra.mxu0 %v1711
  %1739 = vmatprep.subr.mxu0 0.0
  %1740 = vmatpush1.msra.mxu0 %v1712
  %1741 = vmatprep.subr.mxu0 0.0
  %1742 = vmatpush1.msra.mxu0 %v1713
  %1743 = vmatprep.subr.mxu0 0.0
  %1744 = vmatpush1.msra.mxu0 %v1714
  %1745 = vmatprep.subr.mxu0 0.0
  %1746 = vmatpush1.msra.mxu0 %v1715
  %1747 = vmatprep.subr.mxu0 0.0
  %1748 = vmatpush1.msra.mxu0 %v1716
  %1749 = vmatprep.subr.mxu0 0.0
  %1750 = vmatpush1.msra.mxu0 %v1717
  %1751 = vmatprep.subr.mxu0 0.0
  %1752 = vmatpush1.msra.mxu0 %v1718
  %1753 = vmatprep.subr.mxu0 0.0
  %1754 = vmatpush1.msra.mxu0 %v1719
  %1755 = vmatprep.subr.mxu0 0.0
  %1756 = vmatpush1.msra.mxu0 %v1720
  %1757 = vmatprep.subr.mxu0 0.0
  %1758 = vmatpush1.msra.mxu0 %v1721
  %1759 = vmatprep.subr.mxu0 0.0
  %1760 = vmatpush1.msra.mxu0 %v1722
  %1761 = vmatprep.subr.mxu0 0.0
  %1762 = vmatpush1.msra.mxu0 %v1723
  %1763 = vmatprep.subr.mxu0 0.0
  %1764 = vmatpush1.msra.mxu0 0.0
  %1765 = vmatprep.subr.mxu0 0.0
  %1766 = vmatpush1.msra.mxu0 0.0
  %1767 = vmatprep.subr.mxu0 0.0
  %1768 = vmatpush1.msra.mxu0 0.0
  %1769 = vmatprep.subr.mxu0 0.0
  %1770 = vmatpush1.msra.mxu0 0.0
  %1771 = vmatprep.subr.mxu0 0.0
  %1772 = vmatpush1.msra.mxu0 0.0
  %1773 = vmatprep.subr.mxu0 0.0
  %1774 = vmatpush1.msra.mxu0 0.0
  %1775 = vmatprep.subr.mxu0 0.0
  %1776 = vmatpush1.msra.mxu0 0.0
  %1777 = vmatprep.subr.mxu0 0.0
  %1778 = vmatpush1.msra.mxu0 0.0
  %1779 = vmatprep.subr.mxu0 0.0
  %1780 = vmatpush1.msra.mxu0 0.0
  %1781 = vmatprep.subr.mxu0 0.0
  %1782 = vmatpush1.msra.mxu0 0.0
  %1783 = vmatprep.subr.mxu0 0.0
  %1784 = vmatpush1.msra.mxu0 0.0
  %1785 = vmatprep.subr.mxu0 0.0
  %1786 = vmatpush1.msra.mxu0 0.0
  %1787 = vmatprep.subr.mxu0 0.0
  %1788 = vmatpush1.msra.mxu0 0.0
  %1789 = vmatprep.subr.mxu0 0.0
  %1790 = vmatpush1.msra.mxu0 0.0
  %1791 = vmatprep.subr.mxu0 0.0
  %1792 = vmatpush1.msra.mxu0 0.0
  %1793 = vmatprep.subr.mxu0 0.0
  %1794 = vmatpush1.msra.mxu0 0.0
  %1795 = vmatprep.mubr.f32.mxu0 0.0
  %1796 = vmatmul.mubr.f32.gmra.mrb[0].mxu0 %v1707
  %v1797 = vpop.f32.mrb[0].mxu0
  %v1798 = vadd.f32 %v1729, %v1797
  %v1799 = vpop.f32.mrb[0].mxu0
  %1800 = vdwg.mxu0
  %vm1801 = vcmask 1024
  %1802 = vst.msk [vmem:[%s7] sm:$0x3] %vm1801, %v1798
  // Predicated region
  $region30: #{image_cnn_forward.5} parent=0 // pred_check
    _
  $region31: #{image_cnn_forward.5} parent=0 // pred_check_branch
    %1804 = sbr.rel (0) target = $region33
  $region32: #{image_cnn_forward.5} parent=0 // pred_region
    _
  $region33: #{image_cnn_forward.5} parent=0 // pred_fallthru
    _
  // Predicated region
  $region34: #{image_cnn_forward.5} parent=0 // pred_check
    _
  $region35: #{image_cnn_forward.5} parent=0 // pred_check_branch
    %1806 = sbr.rel (0) target = $region37
  $region36: #{image_cnn_forward.5} parent=0 // pred_region
    _
  $region37: #{image_cnn_forward.5} parent=0 // pred_fallthru
    _

</llo_original>
